<compile_context>
chip_gen: v7x
topology: tpu7x:2x2x1
jax: 0.10.0
libtpu: 0.0.40
codegen_flags: <defaults>
</compile_context>

<pallas_src>
import jax
import jax.numpy as jnp
from jax import lax
from jax.experimental import pallas as pl
from jax.experimental.pallas import tpu as pltpu


def _round_up(x, m):
    return (x + m - 1) // m * m


# ---------------------------------------------------------------------------
# Kernel 1: BN1 -> ReLU -> 1x1 conv (bf16 MXU matmul, BN2 scale folded into the
#           weight) -> + BN2 bias -> ReLU.   Tiled along M = N*H*W.
# ---------------------------------------------------------------------------
def _bottleneck_kernel(x_ref, s1_ref, b1_ref, w1_ref, b2_ref, o_ref):
    """x:(TM,Cin) bf16   s1,b1:(1,Cin) f32   w1:(Cin,Cmid) bf16
       b2:(1,Cmid) f32   o:(TM,Cmid) bf16"""
    a = jnp.maximum(x_ref[...].astype(jnp.float32) * s1_ref[...] + b1_ref[...],
                    0.0)                                            # BN1+ReLU (f32 VPU)
    y = jnp.dot(a.astype(jnp.bfloat16), w1_ref[...],                # bf16 MXU matmul
                preferred_element_type=jnp.float32)
    o_ref[...] = jnp.maximum(y + b2_ref[...], 0.0).astype(o_ref.dtype)


# ---------------------------------------------------------------------------
# Kernel 2: 3x3 SAME conv, one batch element per grid step.
#   * halo built in a VMEM scratch (no host-side pad / extra HBM round trip)
#   * 9 accumulated bf16 matmuls (no im2col patch slab / concats)
#   * matmul flipped: (Cout, Cmid) x (H*Wp, Cmid)^T -> (Cout, H*Wp), so spatial
#     is the MXU column / lane dim -> lane-dense store, NCHW output directly.
# ---------------------------------------------------------------------------
def _conv3x3_kernel(a2_ref, w2_ref, o_ref, pad_ref):
    """a2 :(H, W, Cmid)      bf16   (one batch element, NHWC)
       w2 :(9, Cout, Cmid)   bf16   (tap-major: k = kh*3 + kw)
       o  :(Cout, H*Wp)      f32    (NCHW, spatial flattened, lane dense)
       pad:(H+2, Wp+2, Cmid) bf16   VMEM scratch: zero-padded image"""
    H, W, Cmid = a2_ref.shape
    Wp = pad_ref.shape[1] - 2
    Cout = w2_ref.shape[1]

    # Build the zero-padded image once per batch element (VMEM traffic only).
    pad_ref[...] = jnp.zeros_like(pad_ref)
    pad_ref[1:H + 1, 1:W + 1, :] = a2_ref[...]

    acc = jnp.zeros((Cout, H * Wp), jnp.float32)
    for kh in range(3):
        for kw in range(3):
            w_k = w2_ref[kh * 3 + kw]                       # (Cout, Cmid)
            tap = pad_ref[kh:kh + H, kw:kw + Wp, :]         # (H, Wp, Cmid)
            tap = tap.reshape(H * Wp, Cmid)
            # Contract on Cmid with spatial as the result's minor (lane) dim.
            acc = acc + lax.dot_general(
                w_k, tap, (((1,), (1,)), ((), ())),
                preferred_element_type=jnp.float32)
    o_ref[...] = acc


def _fold_bn(gamma, beta, mean, var, eps):
    scale = gamma / jnp.sqrt(var + eps)
    return scale, beta - mean * scale


def dense_layer_forward(x_nchw, params, eps=1e-5, tm=1024):
    N, Cin, H, W = x_nchw.shape
    Cmid = params["w1"].shape[0]          # bn_size * growth_rate
    Cout = params["w2"].shape[0]          # growth_rate
    M = N * H * W

    # NCHW -> NHWC flat, cast to bf16 (halves kernel 1's dominant HBM read).
    x_flat = (jnp.transpose(x_nchw, (0, 2, 3, 1))
              .reshape(M, Cin).astype(jnp.bfloat16))

    s1, b1 = _fold_bn(params["gamma1"], params["beta1"],
                      params["mean1"], params["var1"], eps)
    s2, b2 = _fold_bn(params["gamma2"], params["beta2"],
                      params["mean2"], params["var2"], eps)
    # 1x1 conv weight (Cmid, Cin, 1, 1) -> (Cin, Cmid); fold BN2 scale into it.
    w1 = jnp.transpose(params["w1"].reshape(Cmid, Cin), (1, 0))
    w1 = (w1 * s2[None, :]).astype(jnp.bfloat16)
    s1 = s1.reshape(1, Cin).astype(jnp.float32)
    b1 = b1.reshape(1, Cin).astype(jnp.float32)
    b2 = b2.reshape(1, Cmid).astype(jnp.float32)

    # ---- Kernel 1: tiled along M (no host-side padding / slicing) ------------
    TM = _round_up(max(8, min(tm, M)), 8)
    a2_flat = pl.pallas_call(
        _bottleneck_kernel,
        out_shape=jax.ShapeDtypeStruct((M, Cmid), jnp.bfloat16),
        grid=(pl.cdiv(M, TM),),
        in_specs=[
            pl.BlockSpec((TM, Cin), lambda i: (i, 0)),
            pl.BlockSpec((1, Cin), lambda i: (0, 0)),
            pl.BlockSpec((1, Cin), lambda i: (0, 0)),
            pl.BlockSpec((Cin, Cmid), lambda i: (0, 0)),
            pl.BlockSpec((1, Cmid), lambda i: (0, 0)),
        ],
        out_specs=pl.BlockSpec((TM, Cmid), lambda i: (i, 0)),
        compiler_params=pltpu.CompilerParams(
            dimension_semantics=("parallel",),
            vmem_limit_bytes=32 * 1024 * 1024),
    )(x_flat, s1, b1, w1, b2)

    # Free (bitcast) reshape -- no pad, no slice, no extra HBM round trip.
    a2 = a2_flat.reshape(N, H, W, Cmid)

    # 3x3 conv weight (Cout, Cmid, kh, kw) -> (kh, kw, Cout, Cmid) -> (9, Cout, Cmid)
    w2 = jnp.transpose(params["w2"], (2, 3, 0, 1)).reshape(9, Cout, Cmid)
    w2 = w2.astype(jnp.bfloat16)

    Wp = _round_up(W, 8)                  # padded output width (sliced off below)
    out_flat = pl.pallas_call(
        _conv3x3_kernel,
        out_shape=jax.ShapeDtypeStruct((N, Cout, H * Wp), jnp.float32),
        grid=(N,),
        in_specs=[
            pl.BlockSpec((None, H, W, Cmid), lambda n: (n, 0, 0, 0)),
            pl.BlockSpec((9, Cout, Cmid), lambda n: (0, 0, 0)),
        ],
        out_specs=pl.BlockSpec((None, Cout, H * Wp), lambda n: (n, 0, 0)),
        scratch_shapes=[pltpu.VMEM((H + 2, Wp + 2, Cmid), jnp.bfloat16)],
        compiler_params=pltpu.CompilerParams(
            dimension_semantics=("parallel",),
            vmem_limit_bytes=32 * 1024 * 1024),
    )(a2, w2)

    # drop_rate = 0.0 / eval mode => dropout is identity.  Output is already NCHW.
    out = out_flat.reshape(N, Cout, H, Wp)
    if Wp != W:
        out = out[:, :, :, :W]
    return out


def _reference(x_nchw, params, eps=1e-5):
    """Pure-JAX (f32) reference of the same forward pass (for verification)."""
    Cmid = params["w1"].shape[0]
    x = jnp.transpose(x_nchw, (0, 2, 3, 1)).astype(jnp.float32)
    a = (x - params["mean1"]) / jnp.sqrt(params["var1"] + eps) \
        * params["gamma1"] + params["beta1"]
    a = jnp.maximum(a, 0.0)
    w1 = jnp.transpose(params["w1"].reshape(Cmid, -1), (1, 0))
    y = jnp.einsum("nhwc,cd->nhwd", a, w1)
    a2 = (y - params["mean2"]) / jnp.sqrt(params["var2"] + eps) \
        * params["gamma2"] + params["beta2"]
    a2 = jnp.maximum(a2, 0.0)
    w2 = jnp.transpose(params["w2"], (2, 3, 1, 0))   # HWIO
    out = jax.lax.conv_general_dilated(
        a2, w2, window_strides=(1, 1), padding="SAME",
        dimension_numbers=("NHWC", "HWIO", "NHWC"))
    return jnp.transpose(out, (0, 3, 1, 2))


if __name__ == "__main__":
    # Module config: num_input_features=4, growth_rate=8, bn_size=4, drop_rate=0.0
    N, Cin, H, W = 2, 4, 16, 16
    growth_rate, bn_size = 8, 4
    Cmid, Cout = bn_size * growth_rate, growth_rate

    key = jax.random.PRNGKey(0)
    keys = jax.random.split(key, 11)
    params = {
        "gamma1": jax.random.uniform(keys[0], (Cin,), jnp.float32, 0.5, 1.5),
        "beta1":  jax.random.normal(keys[1], (Cin,), jnp.float32) * 0.1,
        "mean1":  jax.random.normal(keys[2], (Cin,), jnp.float32) * 0.1,
        "var1":   jax.random.uniform(keys[3], (Cin,), jnp.float32, 0.5, 1.5),
        "w1":     jax.random.normal(keys[4], (Cmid, Cin, 1, 1), jnp.float32) * 0.2,
        "gamma2": jax.random.uniform(keys[5], (Cmid,), jnp.float32, 0.5, 1.5),
        "beta2":  jax.random.normal(keys[6], (Cmid,), jnp.float32) * 0.1,
        "mean2":  jax.random.normal(keys[7], (Cmid,), jnp.float32) * 0.1,
        "var2":   jax.random.uniform(keys[8], (Cmid,), jnp.float32, 0.5, 1.5),
        "w2":     jax.random.normal(keys[9], (Cout, Cmid, 3, 3), jnp.float32) * 0.1,
    }
    x = jax.random.normal(keys[10], (N, Cin, H, W), jnp.float32)

    # tm=128 at this toy size exercises a real multi-step grid in kernel 1
    # (production default is tm=1024).
    fwd = jax.jit(lambda xx: dense_layer_forward(xx, params, tm=128))
    out = jax.block_until_ready(fwd(x))

    ref = _reference(x, params)
    assert out.shape == (N, growth_rate, H, W), out.shape
    # bf16 input + bf16 MXU matmuls => looser tolerance than a pure-f32 pipeline.
    assert jnp.allclose(out, ref, atol=8e-2, rtol=8e-2), \
        float(jnp.max(jnp.abs(out - ref)))

    print("KERNEL_OK")
</pallas_src>

<mosaic_0001>
module attributes {stable_mosaic.version = 11 : i64} {
  func.func @_bottleneck_kernel(%arg0: i32, %arg1: memref<128x4xbf16, #tpu.memory_space<vmem>>, %arg2: memref<1x4xf32, #tpu.memory_space<vmem>>, %arg3: memref<1x4xf32, #tpu.memory_space<vmem>>, %arg4: memref<4x32xbf16, #tpu.memory_space<vmem>>, %arg5: memref<1x32xf32, #tpu.memory_space<vmem>>, %arg6: memref<128x32xbf16, #tpu.memory_space<vmem>>) attributes {dimension_semantics = [#tpu.dimension_semantics<parallel>], iteration_bounds = array<i64: 4>, scalar_prefetch = 0 : i64, scratch_operands = 0 : i64, tpu.core_type = #tpu.core_type<tc>, window_params = [{transform_indices = @transform_0, window_bounds = array<i64: 128, 4>}, {pipeline_mode = #tpu.pipeline_mode<synchronous>, transform_indices = @transform_1, window_bounds = array<i64: 1, 4>}, {pipeline_mode = #tpu.pipeline_mode<synchronous>, transform_indices = @transform_2, window_bounds = array<i64: 1, 4>}, {pipeline_mode = #tpu.pipeline_mode<synchronous>, transform_indices = @transform_3, window_bounds = array<i64: 4, 32>}, {pipeline_mode = #tpu.pipeline_mode<synchronous>, transform_indices = @transform_4, window_bounds = array<i64: 1, 32>}, {transform_indices = @transform_5, window_bounds = array<i64: 128, 32>}]} {
    %c0 = arith.constant 0 : index
    %c0_0 = arith.constant 0 : index
    %0 = vector.load %arg1[%c0, %c0_0] : memref<128x4xbf16, #tpu.memory_space<vmem>>, vector<128x4xbf16>
    %1 = arith.extf %0 : vector<128x4xbf16> to vector<128x4xf32>
    %c0_1 = arith.constant 0 : index
    %c0_2 = arith.constant 0 : index
    %2 = vector.load %arg2[%c0_1, %c0_2] : memref<1x4xf32, #tpu.memory_space<vmem>>, vector<1x4xf32>
    %3 = vector.broadcast %2 : vector<1x4xf32> to vector<128x4xf32>
    %4 = arith.mulf %1, %3 : vector<128x4xf32>
    %c0_3 = arith.constant 0 : index
    %c0_4 = arith.constant 0 : index
    %5 = vector.load %arg3[%c0_3, %c0_4] : memref<1x4xf32, #tpu.memory_space<vmem>>, vector<1x4xf32>
    %6 = vector.broadcast %5 : vector<1x4xf32> to vector<128x4xf32>
    %7 = arith.addf %4, %6 : vector<128x4xf32>
    %cst = arith.constant 0.000000e+00 : f32
    %8 = vector.broadcast %cst : f32 to vector<128x4xf32>
    %9 = arith.maximumf %7, %8 : vector<128x4xf32>
    %10 = arith.truncf %9 : vector<128x4xf32> to vector<128x4xbf16>
    %c0_5 = arith.constant 0 : index
    %c0_6 = arith.constant 0 : index
    %11 = vector.load %arg4[%c0_5, %c0_6] : memref<4x32xbf16, #tpu.memory_space<vmem>>, vector<4x32xbf16>
    %cst_7 = arith.constant dense<0.000000e+00> : vector<128x32xf32>
    %12 = tpu.matmul %10, %11, %cst_7 {dimension_numbers = #tpu.dot_dimension_numbers<[1], [0], [0], [1], [0, 0, 1, 1], [], []>} : vector<128x4xbf16>, vector<4x32xbf16>, vector<128x32xf32> -> vector<128x32xf32>
    %c0_8 = arith.constant 0 : index
    %c0_9 = arith.constant 0 : index
    %13 = vector.load %arg5[%c0_8, %c0_9] : memref<1x32xf32, #tpu.memory_space<vmem>>, vector<1x32xf32>
    %14 = vector.broadcast %13 : vector<1x32xf32> to vector<128x32xf32>
    %15 = arith.addf %12, %14 : vector<128x32xf32>
    %cst_10 = arith.constant 0.000000e+00 : f32
    %16 = vector.broadcast %cst_10 : f32 to vector<128x32xf32>
    %17 = arith.maximumf %15, %16 : vector<128x32xf32>
    %18 = arith.truncf %17 : vector<128x32xf32> to vector<128x32xbf16>
    %c0_11 = arith.constant 0 : index
    %c0_12 = arith.constant 0 : index
    %19 = vector.load %arg6[%c0_11, %c0_12] : memref<128x32xbf16, #tpu.memory_space<vmem>>, vector<128x32xbf16>
    tpu.vector_store %arg6[%c0_11, %c0_12], %18 {strides = array<i32>} : memref<128x32xbf16, #tpu.memory_space<vmem>>, vector<128x32xbf16>,
    return
  }
  func.func @transform_0(%arg0: i32) -> (i32, i32) {
    %c0_i32 = arith.constant 0 : i32
    %c0_i32_0 = arith.constant 0 : i32
    return %arg0, %c0_i32 : i32, i32
  }
  func.func @transform_1(%arg0: i32) -> (i32, i32) {
    %c0_i32 = arith.constant 0 : i32
    %c0_i32_0 = arith.constant 0 : i32
    %c0_i32_1 = arith.constant 0 : i32
    return %c0_i32, %c0_i32_0 : i32, i32
  }
  func.func @transform_2(%arg0: i32) -> (i32, i32) {
    %c0_i32 = arith.constant 0 : i32
    %c0_i32_0 = arith.constant 0 : i32
    %c0_i32_1 = arith.constant 0 : i32
    return %c0_i32, %c0_i32_0 : i32, i32
  }
  func.func @transform_3(%arg0: i32) -> (i32, i32) {
    %c0_i32 = arith.constant 0 : i32
    %c0_i32_0 = arith.constant 0 : i32
    %c0_i32_1 = arith.constant 0 : i32
    return %c0_i32, %c0_i32_0 : i32, i32
  }
  func.func @transform_4(%arg0: i32) -> (i32, i32) {
    %c0_i32 = arith.constant 0 : i32
    %c0_i32_0 = arith.constant 0 : i32
    %c0_i32_1 = arith.constant 0 : i32
    return %c0_i32, %c0_i32_0 : i32, i32
  }
  func.func @transform_5(%arg0: i32) -> (i32, i32) {
    %c0_i32 = arith.constant 0 : i32
    %c0_i32_0 = arith.constant 0 : i32
    return %arg0, %c0_i32 : i32, i32
  }
}

module attributes {stable_mosaic.version = 11 : i64} {
  func.func @_conv3x3_kernel(%arg0: i32, %arg1: memref<1x16x16x32xbf16, #tpu.memory_space<vmem>>, %arg2: memref<9x8x32xbf16, #tpu.memory_space<vmem>>, %arg3: memref<1x8x256xf32, #tpu.memory_space<vmem>>, %arg4: memref<18x18x32xbf16, #tpu.memory_space<vmem>>) attributes {dimension_semantics = [#tpu.dimension_semantics<parallel>], iteration_bounds = array<i64: 2>, scalar_prefetch = 0 : i64, scratch_operands = 1 : i64, tpu.core_type = #tpu.core_type<tc>, window_params = [{transform_indices = @transform_0, window_bounds = array<i64: 1, 16, 16, 32>}, {pipeline_mode = #tpu.pipeline_mode<synchronous>, transform_indices = @transform_1, window_bounds = array<i64: 9, 8, 32>}, {transform_indices = @transform_2, window_bounds = array<i64: 1, 8, 256>}]} {
    %cst = arith.constant 0.000000e+00 : bf16
    %0 = vector.broadcast %cst : bf16 to vector<18x18x32xbf16>
    %c0 = arith.constant 0 : index
    %c0_0 = arith.constant 0 : index
    %c0_1 = arith.constant 0 : index
    %1 = vector.load %arg4[%c0, %c0_0, %c0_1] : memref<18x18x32xbf16, #tpu.memory_space<vmem>>, vector<18x18x32xbf16>
    tpu.vector_store %arg4[%c0, %c0_0, %c0_1], %0 {strides = array<i32>} : memref<18x18x32xbf16, #tpu.memory_space<vmem>>, vector<18x18x32xbf16>,
    %c0_2 = arith.constant 0 : index
    %c0_3 = arith.constant 0 : index
    %c0_4 = arith.constant 0 : index
    %c0_5 = arith.constant 0 : index
    %2 = vector.load %arg1[%c0_2, %c0_3, %c0_4, %c0_5] : memref<1x16x16x32xbf16, #tpu.memory_space<vmem>>, vector<1x16x16x32xbf16>
    %3 = vector.shape_cast %2 : vector<1x16x16x32xbf16> to vector<16x16x32xbf16>
    %c1 = arith.constant 1 : index
    %c1_6 = arith.constant 1 : index
    %c0_7 = arith.constant 0 : index
    %4 = vector.load %arg4[%c1, %c1_6, %c0_7] : memref<18x18x32xbf16, #tpu.memory_space<vmem>>, vector<16x16x32xbf16>
    tpu.vector_store %arg4[%c1, %c1_6, %c0_7], %3 {strides = array<i32>} : memref<18x18x32xbf16, #tpu.memory_space<vmem>>, vector<16x16x32xbf16>,
    %cst_8 = arith.constant 0.000000e+00 : f32
    %5 = vector.broadcast %cst_8 : f32 to vector<8x256xf32>
    %c0_9 = arith.constant 0 : index
    %c0_10 = arith.constant 0 : index
    %c0_11 = arith.constant 0 : index
    %6 = vector.load %arg2[%c0_9, %c0_10, %c0_11] : memref<9x8x32xbf16, #tpu.memory_space<vmem>>, vector<1x8x32xbf16>
    %7 = vector.shape_cast %6 : vector<1x8x32xbf16> to vector<8x32xbf16>
    %c0_12 = arith.constant 0 : index
    %c0_13 = arith.constant 0 : index
    %c0_14 = arith.constant 0 : index
    %8 = vector.load %arg4[%c0_12, %c0_13, %c0_14] : memref<18x18x32xbf16, #tpu.memory_space<vmem>>, vector<16x16x32xbf16>
    %9 = vector.shape_cast %8 : vector<16x16x32xbf16> to vector<256x32xbf16>
    %cst_15 = arith.constant dense<0.000000e+00> : vector<8x256xf32>
    %10 = tpu.matmul %7, %9, %cst_15 {dimension_numbers = #tpu.dot_dimension_numbers<[1], [1], [0], [0], [0, 0, 1, 0], [], []>} : vector<8x32xbf16>, vector<256x32xbf16>, vector<8x256xf32> -> vector<8x256xf32>
    %11 = arith.addf %5, %10 : vector<8x256xf32>
    %c1_16 = arith.constant 1 : index
    %c0_17 = arith.constant 0 : index
    %c0_18 = arith.constant 0 : index
    %12 = vector.load %arg2[%c1_16, %c0_17, %c0_18] : memref<9x8x32xbf16, #tpu.memory_space<vmem>>, vector<1x8x32xbf16>
    %13 = vector.shape_cast %12 : vector<1x8x32xbf16> to vector<8x32xbf16>
    %c0_19 = arith.constant 0 : index
    %c1_20 = arith.constant 1 : index
    %c0_21 = arith.constant 0 : index
    %14 = vector.load %arg4[%c0_19, %c1_20, %c0_21] : memref<18x18x32xbf16, #tpu.memory_space<vmem>>, vector<16x16x32xbf16>
    %15 = vector.shape_cast %14 : vector<16x16x32xbf16> to vector<256x32xbf16>
    %cst_22 = arith.constant dense<0.000000e+00> : vector<8x256xf32>
    %16 = tpu.matmul %13, %15, %cst_22 {dimension_numbers = #tpu.dot_dimension_numbers<[1], [1], [0], [0], [0, 0, 1, 0], [], []>} : vector<8x32xbf16>, vector<256x32xbf16>, vector<8x256xf32> -> vector<8x256xf32>
    %17 = arith.addf %11, %16 : vector<8x256xf32>
    %c2 = arith.constant 2 : index
    %c0_23 = arith.constant 0 : index
    %c0_24 = arith.constant 0 : index
    %18 = vector.load %arg2[%c2, %c0_23, %c0_24] : memref<9x8x32xbf16, #tpu.memory_space<vmem>>, vector<1x8x32xbf16>
    %19 = vector.shape_cast %18 : vector<1x8x32xbf16> to vector<8x32xbf16>
    %c0_25 = arith.constant 0 : index
    %c2_26 = arith.constant 2 : index
    %c0_27 = arith.constant 0 : index
    %20 = vector.load %arg4[%c0_25, %c2_26, %c0_27] : memref<18x18x32xbf16, #tpu.memory_space<vmem>>, vector<16x16x32xbf16>
    %21 = vector.shape_cast %20 : vector<16x16x32xbf16> to vector<256x32xbf16>
    %cst_28 = arith.constant dense<0.000000e+00> : vector<8x256xf32>
    %22 = tpu.matmul %19, %21, %cst_28 {dimension_numbers = #tpu.dot_dimension_numbers<[1], [1], [0], [0], [0, 0, 1, 0], [], []>} : vector<8x32xbf16>, vector<256x32xbf16>, vector<8x256xf32> -> vector<8x256xf32>
    %23 = arith.addf %17, %22 : vector<8x256xf32>
    %c3 = arith.constant 3 : index
    %c0_29 = arith.constant 0 : index
    %c0_30 = arith.constant 0 : index
    %24 = vector.load %arg2[%c3, %c0_29, %c0_30] : memref<9x8x32xbf16, #tpu.memory_space<vmem>>, vector<1x8x32xbf16>
    %25 = vector.shape_cast %24 : vector<1x8x32xbf16> to vector<8x32xbf16>
    %c1_31 = arith.constant 1 : index
    %c0_32 = arith.constant 0 : index
    %c0_33 = arith.constant 0 : index
    %26 = vector.load %arg4[%c1_31, %c0_32, %c0_33] : memref<18x18x32xbf16, #tpu.memory_space<vmem>>, vector<16x16x32xbf16>
    %27 = vector.shape_cast %26 : vector<16x16x32xbf16> to vector<256x32xbf16>
    %cst_34 = arith.constant dense<0.000000e+00> : vector<8x256xf32>
    %28 = tpu.matmul %25, %27, %cst_34 {dimension_numbers = #tpu.dot_dimension_numbers<[1], [1], [0], [0], [0, 0, 1, 0], [], []>} : vector<8x32xbf16>, vector<256x32xbf16>, vector<8x256xf32> -> vector<8x256xf32>
    %29 = arith.addf %23, %28 : vector<8x256xf32>
    %c4 = arith.constant 4 : index
    %c0_35 = arith.constant 0 : index
    %c0_36 = arith.constant 0 : index
    %30 = vector.load %arg2[%c4, %c0_35, %c0_36] : memref<9x8x32xbf16, #tpu.memory_space<vmem>>, vector<1x8x32xbf16>
    %31 = vector.shape_cast %30 : vector<1x8x32xbf16> to vector<8x32xbf16>
    %c1_37 = arith.constant 1 : index
    %c1_38 = arith.constant 1 : index
    %c0_39 = arith.constant 0 : index
    %32 = vector.load %arg4[%c1_37, %c1_38, %c0_39] : memref<18x18x32xbf16, #tpu.memory_space<vmem>>, vector<16x16x32xbf16>
    %33 = vector.shape_cast %32 : vector<16x16x32xbf16> to vector<256x32xbf16>
    %cst_40 = arith.constant dense<0.000000e+00> : vector<8x256xf32>
    %34 = tpu.matmul %31, %33, %cst_40 {dimension_numbers = #tpu.dot_dimension_numbers<[1], [1], [0], [0], [0, 0, 1, 0], [], []>} : vector<8x32xbf16>, vector<256x32xbf16>, vector<8x256xf32> -> vector<8x256xf32>
    %35 = arith.addf %29, %34 : vector<8x256xf32>
    %c5 = arith.constant 5 : index
    %c0_41 = arith.constant 0 : index
    %c0_42 = arith.constant 0 : index
    %36 = vector.load %arg2[%c5, %c0_41, %c0_42] : memref<9x8x32xbf16, #tpu.memory_space<vmem>>, vector<1x8x32xbf16>
    %37 = vector.shape_cast %36 : vector<1x8x32xbf16> to vector<8x32xbf16>
    %c1_43 = arith.constant 1 : index
    %c2_44 = arith.constant 2 : index
    %c0_45 = arith.constant 0 : index
    %38 = vector.load %arg4[%c1_43, %c2_44, %c0_45] : memref<18x18x32xbf16, #tpu.memory_space<vmem>>, vector<16x16x32xbf16>
    %39 = vector.shape_cast %38 : vector<16x16x32xbf16> to vector<256x32xbf16>
    %cst_46 = arith.constant dense<0.000000e+00> : vector<8x256xf32>
    %40 = tpu.matmul %37, %39, %cst_46 {dimension_numbers = #tpu.dot_dimension_numbers<[1], [1], [0], [0], [0, 0, 1, 0], [], []>} : vector<8x32xbf16>, vector<256x32xbf16>, vector<8x256xf32> -> vector<8x256xf32>
    %41 = arith.addf %35, %40 : vector<8x256xf32>
    %c6 = arith.constant 6 : index
    %c0_47 = arith.constant 0 : index
    %c0_48 = arith.constant 0 : index
    %42 = vector.load %arg2[%c6, %c0_47, %c0_48] : memref<9x8x32xbf16, #tpu.memory_space<vmem>>, vector<1x8x32xbf16>
    %43 = vector.shape_cast %42 : vector<1x8x32xbf16> to vector<8x32xbf16>
    %c2_49 = arith.constant 2 : index
    %c0_50 = arith.constant 0 : index
    %c0_51 = arith.constant 0 : index
    %44 = vector.load %arg4[%c2_49, %c0_50, %c0_51] : memref<18x18x32xbf16, #tpu.memory_space<vmem>>, vector<16x16x32xbf16>
    %45 = vector.shape_cast %44 : vector<16x16x32xbf16> to vector<256x32xbf16>
    %cst_52 = arith.constant dense<0.000000e+00> : vector<8x256xf32>
    %46 = tpu.matmul %43, %45, %cst_52 {dimension_numbers = #tpu.dot_dimension_numbers<[1], [1], [0], [0], [0, 0, 1, 0], [], []>} : vector<8x32xbf16>, vector<256x32xbf16>, vector<8x256xf32> -> vector<8x256xf32>
    %47 = arith.addf %41, %46 : vector<8x256xf32>
    %c7 = arith.constant 7 : index
    %c0_53 = arith.constant 0 : index
    %c0_54 = arith.constant 0 : index
    %48 = vector.load %arg2[%c7, %c0_53, %c0_54] : memref<9x8x32xbf16, #tpu.memory_space<vmem>>, vector<1x8x32xbf16>
    %49 = vector.shape_cast %48 : vector<1x8x32xbf16> to vector<8x32xbf16>
    %c2_55 = arith.constant 2 : index
    %c1_56 = arith.constant 1 : index
    %c0_57 = arith.constant 0 : index
    %50 = vector.load %arg4[%c2_55, %c1_56, %c0_57] : memref<18x18x32xbf16, #tpu.memory_space<vmem>>, vector<16x16x32xbf16>
    %51 = vector.shape_cast %50 : vector<16x16x32xbf16> to vector<256x32xbf16>
    %cst_58 = arith.constant dense<0.000000e+00> : vector<8x256xf32>
    %52 = tpu.matmul %49, %51, %cst_58 {dimension_numbers = #tpu.dot_dimension_numbers<[1], [1], [0], [0], [0, 0, 1, 0], [], []>} : vector<8x32xbf16>, vector<256x32xbf16>, vector<8x256xf32> -> vector<8x256xf32>
    %53 = arith.addf %47, %52 : vector<8x256xf32>
    %c8 = arith.constant 8 : index
    %c0_59 = arith.constant 0 : index
    %c0_60 = arith.constant 0 : index
    %54 = vector.load %arg2[%c8, %c0_59, %c0_60] : memref<9x8x32xbf16, #tpu.memory_space<vmem>>, vector<1x8x32xbf16>
    %55 = vector.shape_cast %54 : vector<1x8x32xbf16> to vector<8x32xbf16>
    %c2_61 = arith.constant 2 : index
    %c2_62 = arith.constant 2 : index
    %c0_63 = arith.constant 0 : index
    %56 = vector.load %arg4[%c2_61, %c2_62, %c0_63] : memref<18x18x32xbf16, #tpu.memory_space<vmem>>, vector<16x16x32xbf16>
    %57 = vector.shape_cast %56 : vector<16x16x32xbf16> to vector<256x32xbf16>
    %cst_64 = arith.constant dense<0.000000e+00> : vector<8x256xf32>
    %58 = tpu.matmul %55, %57, %cst_64 {dimension_numbers = #tpu.dot_dimension_numbers<[1], [1], [0], [0], [0, 0, 1, 0], [], []>} : vector<8x32xbf16>, vector<256x32xbf16>, vector<8x256xf32> -> vector<8x256xf32>
    %59 = arith.addf %53, %58 : vector<8x256xf32>
    %c0_65 = arith.constant 0 : index
    %c0_66 = arith.constant 0 : index
    %c0_67 = arith.constant 0 : index
    %60 = vector.load %arg3[%c0_65, %c0_66, %c0_67] : memref<1x8x256xf32, #tpu.memory_space<vmem>>, vector<1x8x256xf32>
    %61 = vector.shape_cast %60 : vector<1x8x256xf32> to vector<8x256xf32>
    %62 = vector.shape_cast %59 : vector<8x256xf32> to vector<1x8x256xf32>
    tpu.vector_store %arg3[%c0_65, %c0_66, %c0_67], %62 {strides = array<i32>} : memref<1x8x256xf32, #tpu.memory_space<vmem>>, vector<1x8x256xf32>,
    return
  }
  func.func @transform_0(%arg0: i32) -> (i32, i32, i32, i32) {
    %c0_i32 = arith.constant 0 : i32
    %c0_i32_0 = arith.constant 0 : i32
    %c0_i32_1 = arith.constant 0 : i32
    %c0_i32_2 = arith.constant 0 : i32
    return %arg0, %c0_i32, %c0_i32_0, %c0_i32_1 : i32, i32, i32, i32
  }
  func.func @transform_1(%arg0: i32) -> (i32, i32, i32) {
    %c0_i32 = arith.constant 0 : i32
    %c0_i32_0 = arith.constant 0 : i32
    %c0_i32_1 = arith.constant 0 : i32
    %c0_i32_2 = arith.constant 0 : i32
    return %c0_i32, %c0_i32_0, %c0_i32_1 : i32, i32, i32
  }
  func.func @transform_2(%arg0: i32) -> (i32, i32, i32) {
    %c0_i32 = arith.constant 0 : i32
    %c0_i32_0 = arith.constant 0 : i32
    %c0_i32_1 = arith.constant 0 : i32
    return %arg0, %c0_i32, %c0_i32_0 : i32, i32, i32
  }
}

</mosaic_0001>

<llo_original>
// kernel: _lambda_.2
$region0: #{_lambda_.2}
  #allocation0 [shape = 'u32[]', space=smem, size = 0x4, offset = 0x4, fixed_abs, tag = 'smem constant byte address 0x4 - core index']
  #allocation1 [shape = 'u32[144,128]{1,0:T(1,128)}', space=vmem, size = 0x12000, scoped, tag = 'internal scratch']
  %s0 = inlined_call_operand.vmem [shape: bf16[512,4], index: 0, kind: input, shape index: {}]
  %s1 = inlined_call_operand.vmem [shape: f32[1,4], index: 1, kind: input, shape index: {}]
  %s2 = inlined_call_operand.vmem [shape: f32[1,4], index: 2, kind: input, shape index: {}]
  %s3 = inlined_call_operand.vmem [shape: bf16[4,32], index: 3, kind: input, shape index: {}]
  %s4 = inlined_call_operand.vmem [shape: f32[1,32], index: 4, kind: input, shape index: {}]
  %s5 = inlined_call_operand.vmem [shape: bf16[512,32], index: 5, kind: output, shape index: {}]
  %s6 = sld [smem:[#allocation0]]
  $region53: #{_lambda_.2} parent=0
    _
  %s8 = ssub.s32 1, %s6
  %s9 = scalar_select 0, %s8, %s6
  loop: start=0, step=1, limit=6
  $region2: #{_lambda_.2} parent=0 // loop_pre_header
    _
  $region3: #{_lambda_.2} parent=0 // loop_header
    %s11 = sphi 0, %s15
    %p12 = scmp.ge.s32.totalorder %s11, 6
    %s21 = sphi 0, %s23
    %s24 = sphi 0, %s21
    %s25 = sphi 0, %s24
    %s41 = sphi 0, %s25
    %s45 = sphi 0, %s45
    %s47 = sphi 0, %s45
    %s48 = sphi 0, %s47
    %s62 = sphi 0, %s48
    %s66 = sphi 0, %s66
    %s68 = sphi 0, %s66
    %s69 = sphi 0, %s68
    %s83 = sphi 0, %s69
    %s87 = sphi 0, %s87
    %s89 = sphi 0, %s87
    %s90 = sphi 0, %s89
    %s104 = sphi 0, %s90
    %s108 = sphi 0, %s108
    %s110 = sphi 0, %s108
    %s111 = sphi 0, %s110
    %s125 = sphi 0, %s111
    %s131 = sphi 0, %s133
    %s134 = sphi 0, %s131
    %s135 = sphi 0, %s134
    %s151 = sphi 0, %s135
  $region4: #{_lambda_.2} parent=0 // loop_header_branch
    %14 = sbr.rel (%p12) target = $region8
  $region5: #{_lambda_.2} parent=0 // loop_body
    %s16 = ssub.s32 %s11, 1
    %s17 = ssub.s32 %s11, 2
    %s18 = sadd.s32 %s11, 1
    %s19 = ssub.s32 %s11, %s18
    %p20 = scmp.eq.s32.totalorder %s19, 0
    %s22 = sadd.s32 %s21, 1
    %s23 = scalar_select %p20, %s21, %s22
    %p26 = pneg %p20
    %p27 = scmp.eq.s32.totalorder %s11, 3
    %p28 = por %p26, %p27
    %p29 = scmp.ne.s32.totalorder %s21, %s24
    %p30 = scmp.eq.s32.totalorder %s11, 0
    %p31 = por %p29, %p30
    %p32 = scmp.ne.s32.totalorder %s21, %s24
    %p33 = scmp.eq.s32.totalorder %s16, 3
    %p34 = por %p32, %p33
    %p35 = scmp.ne.s32.totalorder %s24, %s25
    %p36 = scmp.eq.s32.totalorder %s16, 0
    %p37 = por %p35, %p36
    %p38 = scmp.ne.s32.totalorder %s24, %s25
    %p39 = scmp.eq.s32.totalorder %s17, 3
    %p40 = por %p38, %p39
    %p42 = scmp.ne.s32.totalorder %s25, %s41
    %p43 = scmp.eq.s32.totalorder %s17, 0
    %p44 = por %p42, %p43
    %s46 = sadd.s32 %s45, 1
    %p49 = scmp.eq.s32.totalorder %s11, 3
    %p50 = scmp.ne.s32.totalorder %s45, %s47
    %p51 = scmp.eq.s32.totalorder %s11, 0
    %p52 = por %p50, %p51
    %p53 = scmp.ne.s32.totalorder %s45, %s47
    %p54 = scmp.eq.s32.totalorder %s16, 3
    %p55 = por %p53, %p54
    %p56 = scmp.ne.s32.totalorder %s47, %s48
    %p57 = scmp.eq.s32.totalorder %s16, 0
    %p58 = por %p56, %p57
    %p59 = scmp.ne.s32.totalorder %s47, %s48
    %p60 = scmp.eq.s32.totalorder %s17, 3
    %p61 = por %p59, %p60
    %p63 = scmp.ne.s32.totalorder %s48, %s62
    %p64 = scmp.eq.s32.totalorder %s17, 0
    %p65 = por %p63, %p64
    %s67 = sadd.s32 %s66, 1
    %p70 = scmp.eq.s32.totalorder %s11, 3
    %p71 = scmp.ne.s32.totalorder %s66, %s68
    %p72 = scmp.eq.s32.totalorder %s11, 0
    %p73 = por %p71, %p72
    %p74 = scmp.ne.s32.totalorder %s66, %s68
    %p75 = scmp.eq.s32.totalorder %s16, 3
    %p76 = por %p74, %p75
    %p77 = scmp.ne.s32.totalorder %s68, %s69
    %p78 = scmp.eq.s32.totalorder %s16, 0
    %p79 = por %p77, %p78
    %p80 = scmp.ne.s32.totalorder %s68, %s69
    %p81 = scmp.eq.s32.totalorder %s17, 3
    %p82 = por %p80, %p81
    %p84 = scmp.ne.s32.totalorder %s69, %s83
    %p85 = scmp.eq.s32.totalorder %s17, 0
    %p86 = por %p84, %p85
    %s88 = sadd.s32 %s87, 1
    %p91 = scmp.eq.s32.totalorder %s11, 3
    %p92 = scmp.ne.s32.totalorder %s87, %s89
    %p93 = scmp.eq.s32.totalorder %s11, 0
    %p94 = por %p92, %p93
    %p95 = scmp.ne.s32.totalorder %s87, %s89
    %p96 = scmp.eq.s32.totalorder %s16, 3
    %p97 = por %p95, %p96
    %p98 = scmp.ne.s32.totalorder %s89, %s90
    %p99 = scmp.eq.s32.totalorder %s16, 0
    %p100 = por %p98, %p99
    %p101 = scmp.ne.s32.totalorder %s89, %s90
    %p102 = scmp.eq.s32.totalorder %s17, 3
    %p103 = por %p101, %p102
    %p105 = scmp.ne.s32.totalorder %s90, %s104
    %p106 = scmp.eq.s32.totalorder %s17, 0
    %p107 = por %p105, %p106
    %s109 = sadd.s32 %s108, 1
    %p112 = scmp.eq.s32.totalorder %s11, 3
    %p113 = scmp.ne.s32.totalorder %s108, %s110
    %p114 = scmp.eq.s32.totalorder %s11, 0
    %p115 = por %p113, %p114
    %p116 = scmp.ne.s32.totalorder %s108, %s110
    %p117 = scmp.eq.s32.totalorder %s16, 3
    %p118 = por %p116, %p117
    %p119 = scmp.ne.s32.totalorder %s110, %s111
    %p120 = scmp.eq.s32.totalorder %s16, 0
    %p121 = por %p119, %p120
    %p122 = scmp.ne.s32.totalorder %s110, %s111
    %p123 = scmp.eq.s32.totalorder %s17, 3
    %p124 = por %p122, %p123
    %p126 = scmp.ne.s32.totalorder %s111, %s125
    %p127 = scmp.eq.s32.totalorder %s17, 0
    %p128 = por %p126, %p127
    %s129 = ssub.s32 %s11, %s18
    %p130 = scmp.eq.s32.totalorder %s129, 0
    %s132 = sadd.s32 %s131, 1
    %s133 = scalar_select %p130, %s131, %s132
    %p136 = pneg %p130
    %p137 = scmp.eq.s32.totalorder %s11, 3
    %p138 = por %p136, %p137
    %p139 = scmp.ne.s32.totalorder %s131, %s134
    %p140 = scmp.eq.s32.totalorder %s11, 0
    %p141 = por %p139, %p140
    %p142 = scmp.ne.s32.totalorder %s131, %s134
    %p143 = scmp.eq.s32.totalorder %s16, 3
    %p144 = por %p142, %p143
    %p145 = scmp.ne.s32.totalorder %s134, %s135
    %p146 = scmp.eq.s32.totalorder %s16, 0
    %p147 = por %p145, %p146
    %p148 = scmp.ne.s32.totalorder %s134, %s135
    %p149 = scmp.eq.s32.totalorder %s17, 3
    %p150 = por %p148, %p149
    %p152 = scmp.ne.s32.totalorder %s135, %s151
    %p153 = scmp.eq.s32.totalorder %s17, 0
    %p154 = por %p152, %p153
    %p155 = scmp.le.s32.totalorder 1, %s11
    %p156 = scmp.lt.s32.totalorder %s11, 5
    %p157 = pnand %p155, %p156
    %p158 = pneg %p157
    // Predicated region
    $region9: #{_lambda_.2} parent=5 // pred_check
      _
    $region10: #{_lambda_.2} parent=5 // pred_check_branch
      %160 = sbr.rel (%p157) target = $region12
    $region11: #{_lambda_.2} parent=5 // pred_region
      %s161 = ssub.s32 %s11, 1
      // Predicated region
      $region13: #{_lambda_.2} parent=11 // pred_check
        %p162 = pneg %p58
      $region14: #{_lambda_.2} parent=11 // pred_check_branch
        %164 = sbr.rel (%p162) target = $region16
      $region15: #{_lambda_.2} parent=11 // pred_region
        _
      $region16: #{_lambda_.2} parent=11 // pred_fallthru
        _
      // Predicated region
      $region17: #{_lambda_.2} parent=11 // pred_check
        %p165 = pneg %p79
      $region18: #{_lambda_.2} parent=11 // pred_check_branch
        %167 = sbr.rel (%p165) target = $region20
      $region19: #{_lambda_.2} parent=11 // pred_region
        _
      $region20: #{_lambda_.2} parent=11 // pred_fallthru
        _
      // Predicated region
      $region21: #{_lambda_.2} parent=11 // pred_check
        %p168 = pneg %p100
      $region22: #{_lambda_.2} parent=11 // pred_check_branch
        %170 = sbr.rel (%p168) target = $region24
      $region23: #{_lambda_.2} parent=11 // pred_region
        _
      $region24: #{_lambda_.2} parent=11 // pred_fallthru
        _
      // Predicated region
      $region25: #{_lambda_.2} parent=11 // pred_check
        %p171 = pneg %p121
      $region26: #{_lambda_.2} parent=11 // pred_check_branch
        %173 = sbr.rel (%p171) target = $region28
      $region27: #{_lambda_.2} parent=11 // pred_region
        _
      $region28: #{_lambda_.2} parent=11 // pred_fallthru
        _
    $region12: #{_lambda_.2} parent=5 // pred_fallthru
      _
    %p174 = scmp.lt.s32.totalorder %s11, 4
    // Predicated region
    $region29: #{_lambda_.2} parent=5 // pred_check
      %p175 = pneg %p174
    $region30: #{_lambda_.2} parent=5 // pred_check_branch
      %177 = sbr.rel (%p175) target = $region32
    $region31: #{_lambda_.2} parent=5 // pred_region
      // Predicated region
      $region33: #{_lambda_.2} parent=31 // pred_check
        %p178 = pneg %p31
      $region34: #{_lambda_.2} parent=31 // pred_check_branch
        %180 = sbr.rel (%p178) target = $region36
      $region35: #{_lambda_.2} parent=31 // pred_region
        %s181 = smul.u32 16, %s11
        %p182 = scmp.lt.s32.totalorder %s181, 63
        %s183 = scalar_select %p182, %s181, 63
        %s184 = smul.addr %s183, 4
        %s185 = scalar_lea.vmem %s0, %s184
        %s186 = smul.u32 16, %s11
      $region36: #{_lambda_.2} parent=31 // pred_fallthru
        _
    $region32: #{_lambda_.2} parent=5 // pred_fallthru
      _
    %p187 = scmp.le.s32.totalorder 1, %s11
    %p188 = scmp.lt.s32.totalorder %s11, 5
    %p189 = pnand %p187, %p188
    %p190 = pneg %p189
    // Predicated region
    $region37: #{_lambda_.2} parent=5 // pred_check
      _
    $region38: #{_lambda_.2} parent=5 // pred_check_branch
      %192 = sbr.rel (%p189) target = $region40
    $region39: #{_lambda_.2} parent=5 // pred_region
      %s193 = ssub.s32 %s11, 1
      %s194 = smul.u32 16, %s16
      %p195 = scmp.lt.s32.totalorder %s194, 63
      %s196 = scalar_select %p195, %s194, 63
      %s197 = smul.addr %s196, 4
      %s198 = scalar_lea.vmem %s0, %s197
      %p199 = pneg %p37
      %p200 = pneg %p34
      %p201 = pneg %p58
      %p202 = pneg %p55
      %p203 = pneg %p79
      %p204 = pneg %p76
      %p205 = pneg %p100
      %p206 = pneg %p97
      %p207 = pneg %p121
      %p208 = pneg %p118
      %p209 = pneg %p147
      %p210 = pneg %p144
      %s211 = smul.u32 16, %s16
      %p212 = scmp.lt.s32.totalorder %s211, 63
      %s213 = scalar_select %p212, %s211, 63
      %s214 = smul.addr %s213, 4
      %s215 = scalar_lea.vmem %s5, %s214
      %s216 = smul.u32 16, %s16
      %p217 = scmp.lt.s32.totalorder %s216, 63
      %s218 = scalar_select %p217, %s216, 63
      %s219 = smul.addr %s218, 4
      %s220 = scalar_lea.vmem %s0, %s219
      %s221 = smul.u32 16, %s16
      %s222 = smul.u32 16, %s16
      %p223 = scmp.lt.s32.totalorder %s222, 63
      %s224 = scalar_select %p223, %s222, 63
      %s225 = smul.addr %s224, 4
      %s226 = scalar_lea.vmem %s5, %s225
      %s227 = smul.u32 16, %s16
      %v229 = vld [vmem:[%s220] sm:$0xf]
      %v230 = vld [vmem:[%s220 + $0x4] sm:$0xf]
      %v231 = vld [vmem:[%s220 + $0x8] sm:$0xf]
      %v232 = vld [vmem:[%s220 + $0xc] sm:$0xf]
      %v233 = vld [vmem:[%s220 + $0x10] sm:$0xf]
      %v234 = vld [vmem:[%s220 + $0x14] sm:$0xf]
      %v235 = vld [vmem:[%s220 + $0x18] sm:$0xf]
      %v236 = vld [vmem:[%s220 + $0x1c] sm:$0xf]
      %v237 = vld [vmem:[%s220 + $0x20] sm:$0xf]
      %v238 = vld [vmem:[%s220 + $0x24] sm:$0xf]
      %v239 = vld [vmem:[%s220 + $0x28] sm:$0xf]
      %v240 = vld [vmem:[%s220 + $0x2c] sm:$0xf]
      %v241 = vld [vmem:[%s220 + $0x30] sm:$0xf]
      %v242 = vld [vmem:[%s220 + $0x34] sm:$0xf]
      %v243 = vld [vmem:[%s220 + $0x38] sm:$0xf]
      %v244 = vld [vmem:[%s220 + $0x3c] sm:$0xf]
      %v245 = vunpack.c.l.bf16 %v229
      %v246 = vunpack.c.l.bf16 %v230
      %v247 = vunpack.c.l.bf16 %v231
      %v248 = vunpack.c.l.bf16 %v232
      %v249 = vunpack.c.l.bf16 %v233
      %v250 = vunpack.c.l.bf16 %v234
      %v251 = vunpack.c.l.bf16 %v235
      %v252 = vunpack.c.l.bf16 %v236
      %v253 = vunpack.c.l.bf16 %v237
      %v254 = vunpack.c.l.bf16 %v238
      %v255 = vunpack.c.l.bf16 %v239
      %v256 = vunpack.c.l.bf16 %v240
      %v257 = vunpack.c.l.bf16 %v241
      %v258 = vunpack.c.l.bf16 %v242
      %v259 = vunpack.c.l.bf16 %v243
      %v260 = vunpack.c.l.bf16 %v244
      %v261 = vld [vmem:[%s1] sm:$0x1]
      %v263 = vlaneseq
      %v264 = vshrl.u32 %v263, 7
      %v265 = vsub.s32 0, %v264
      %v266 = vrot.slane %v261, %v265
      %v268 = vmul.f32 %v245, %v266
      %v269 = vmul.f32 %v246, %v266
      %v270 = vmul.f32 %v247, %v266
      %v271 = vmul.f32 %v248, %v266
      %v272 = vmul.f32 %v249, %v266
      %v273 = vmul.f32 %v250, %v266
      %v274 = vmul.f32 %v251, %v266
      %v275 = vmul.f32 %v252, %v266
      %v276 = vmul.f32 %v253, %v266
      %v277 = vmul.f32 %v254, %v266
      %v278 = vmul.f32 %v255, %v266
      %v279 = vmul.f32 %v256, %v266
      %v280 = vmul.f32 %v257, %v266
      %v281 = vmul.f32 %v258, %v266
      %v282 = vmul.f32 %v259, %v266
      %v283 = vmul.f32 %v260, %v266
      %v284 = vld [vmem:[%s2] sm:$0x1]
      %v286 = vlaneseq
      %v287 = vshrl.u32 %v286, 7
      %v288 = vsub.s32 0, %v287
      %v289 = vrot.slane %v284, %v288
      %v291 = vadd.f32 %v268, %v289
      %v292 = vadd.f32 %v269, %v289
      %v293 = vadd.f32 %v270, %v289
      %v294 = vadd.f32 %v271, %v289
      %v295 = vadd.f32 %v272, %v289
      %v296 = vadd.f32 %v273, %v289
      %v297 = vadd.f32 %v274, %v289
      %v298 = vadd.f32 %v275, %v289
      %v299 = vadd.f32 %v276, %v289
      %v300 = vadd.f32 %v277, %v289
      %v301 = vadd.f32 %v278, %v289
      %v302 = vadd.f32 %v279, %v289
      %v303 = vadd.f32 %v280, %v289
      %v304 = vadd.f32 %v281, %v289
      %v305 = vadd.f32 %v282, %v289
      %v306 = vadd.f32 %v283, %v289
      %v307 = vmax.f32 %v291, 0.0
      %v308 = vmax.f32 %v292, 0.0
      %v309 = vmax.f32 %v293, 0.0
      %v310 = vmax.f32 %v294, 0.0
      %v311 = vmax.f32 %v295, 0.0
      %v312 = vmax.f32 %v296, 0.0
      %v313 = vmax.f32 %v297, 0.0
      %v314 = vmax.f32 %v298, 0.0
      %v315 = vmax.f32 %v299, 0.0
      %v316 = vmax.f32 %v300, 0.0
      %v317 = vmax.f32 %v301, 0.0
      %v318 = vmax.f32 %v302, 0.0
      %v319 = vmax.f32 %v303, 0.0
      %v320 = vmax.f32 %v304, 0.0
      %v321 = vmax.f32 %v305, 0.0
      %v322 = vmax.f32 %v306, 0.0
      %v323 = vpack.c.bf16 %v308, %v307
      %v324 = vpack.c.bf16 %v310, %v309
      %v325 = vpack.c.bf16 %v312, %v311
      %v326 = vpack.c.bf16 %v314, %v313
      %v327 = vpack.c.bf16 %v316, %v315
      %v328 = vpack.c.bf16 %v318, %v317
      %v329 = vpack.c.bf16 %v320, %v319
      %v330 = vpack.c.bf16 %v322, %v321
      %v331 = vld [vmem:[%s3] sm:$0x3]
      %v332 = vld [vmem:[%s4] sm:$0x1]
      %v334 = vlaneseq
      %v335 = vshrl.u32 %v334, 7
      %v336 = vsub.s32 0, %v335
      %v337 = vrot.slane %v332, %v336
      %vm339 = vcmask 31744
      %v341 = vsel %vm339, %v323, 0
      %v344 = vsel %vm339, %v324, 0
      %v347 = vsel %vm339, %v325, 0
      %v350 = vsel %vm339, %v326, 0
      %v353 = vsel %vm339, %v327, 0
      %v356 = vsel %vm339, %v328, 0
      %v359 = vsel %vm339, %v329, 0
      %v362 = vsel %vm339, %v330, 0
      %vm364 = vcmask 1041408
      %v366 = vsel %vm364, %v331, 0
      %368 = vmatprep.subr.bf16.mxu0 0
      %369 = vmatpush1.bf16.msra.mxu0 %v366
      %370 = vmatprep.subr.bf16.mxu0 0
      %371 = vmatpush1.bf16.msra.mxu0 0
      %372 = vmatprep.subr.bf16.mxu0 0
      %373 = vmatpush1.bf16.msra.mxu0 0
      %374 = vmatprep.subr.bf16.mxu0 0
      %375 = vmatpush1.bf16.msra.mxu0 0
      %376 = vmatprep.subr.bf16.mxu0 0
      %377 = vmatpush1.bf16.msra.mxu0 0
      %378 = vmatprep.subr.bf16.mxu0 0
      %379 = vmatpush1.bf16.msra.mxu0 0
      %380 = vmatprep.subr.bf16.mxu0 0
      %381 = vmatpush1.bf16.msra.mxu0 0
      %382 = vmatprep.subr.bf16.mxu0 0
      %383 = vmatpush1.bf16.msra.mxu0 0
      %384 = vmatprep.subr.bf16.mxu0 0
      %385 = vmatpush1.bf16.msra.mxu0 0
      %386 = vmatprep.subr.bf16.mxu0 0
      %387 = vmatpush1.bf16.msra.mxu0 0
      %388 = vmatprep.subr.bf16.mxu0 0
      %389 = vmatpush1.bf16.msra.mxu0 0
      %390 = vmatprep.subr.bf16.mxu0 0
      %391 = vmatpush1.bf16.msra.mxu0 0
      %392 = vmatprep.subr.bf16.mxu0 0
      %393 = vmatpush1.bf16.msra.mxu0 0
      %394 = vmatprep.subr.bf16.mxu0 0
      %395 = vmatpush1.bf16.msra.mxu0 0
      %396 = vmatprep.subr.bf16.mxu0 0
      %397 = vmatpush1.bf16.msra.mxu0 0
      %398 = vmatprep.subr.bf16.mxu0 0
      %399 = vmatpush1.bf16.msra.mxu0 0
      %400 = vmatprep.mubr.bf16.mxu0 0
      %401 = vmatmul.mubr.bf16.gmra.mrb[0].mxu0 %v341
      %v402 = vpop.f32.mrb[0].mxu0
      %v403 = vadd.f32 %v337, %v402
      %v404 = vpop.f32.mrb[0].mxu0
      %v405 = vpop.f32.mrb[0].mxu0
      %v406 = vadd.f32 %v337, %v405
      %v407 = vpop.f32.mrb[0].mxu0
      %408 = vmatprep.mubr.bf16.mxu0 0
      %409 = vmatmul.mubr.bf16.gmra.mrb[0].mxu0 %v344
      %v410 = vpop.f32.mrb[0].mxu0
      %v411 = vadd.f32 %v337, %v410
      %v412 = vpop.f32.mrb[0].mxu0
      %v413 = vpop.f32.mrb[0].mxu0
      %v414 = vadd.f32 %v337, %v413
      %v415 = vpop.f32.mrb[0].mxu0
      %416 = vmatprep.mubr.bf16.mxu0 0
      %417 = vmatmul.mubr.bf16.gmra.mrb[0].mxu0 %v347
      %v418 = vpop.f32.mrb[0].mxu0
      %v419 = vadd.f32 %v337, %v418
      %v420 = vpop.f32.mrb[0].mxu0
      %v421 = vpop.f32.mrb[0].mxu0
      %v422 = vadd.f32 %v337, %v421
      %v423 = vpop.f32.mrb[0].mxu0
      %424 = vmatprep.mubr.bf16.mxu0 0
      %425 = vmatmul.mubr.bf16.gmra.mrb[0].mxu0 %v350
      %v426 = vpop.f32.mrb[0].mxu0
      %v427 = vadd.f32 %v337, %v426
      %v428 = vpop.f32.mrb[0].mxu0
      %v429 = vpop.f32.mrb[0].mxu0
      %v430 = vadd.f32 %v337, %v429
      %v431 = vpop.f32.mrb[0].mxu0
      %432 = vmatprep.mubr.bf16.mxu0 0
      %433 = vmatmul.mubr.bf16.gmra.mrb[0].mxu0 %v353
      %v434 = vpop.f32.mrb[0].mxu0
      %v435 = vadd.f32 %v337, %v434
      %v436 = vpop.f32.mrb[0].mxu0
      %v437 = vpop.f32.mrb[0].mxu0
      %v438 = vadd.f32 %v337, %v437
      %v439 = vpop.f32.mrb[0].mxu0
      %440 = vmatprep.mubr.bf16.mxu0 0
      %441 = vmatmul.mubr.bf16.gmra.mrb[0].mxu0 %v356
      %v442 = vpop.f32.mrb[0].mxu0
      %v443 = vadd.f32 %v337, %v442
      %v444 = vpop.f32.mrb[0].mxu0
      %v445 = vpop.f32.mrb[0].mxu0
      %v446 = vadd.f32 %v337, %v445
      %v447 = vpop.f32.mrb[0].mxu0
      %448 = vmatprep.mubr.bf16.mxu0 0
      %449 = vmatmul.mubr.bf16.gmra.mrb[0].mxu0 %v359
      %v450 = vpop.f32.mrb[0].mxu0
      %v451 = vadd.f32 %v337, %v450
      %v452 = vpop.f32.mrb[0].mxu0
      %v453 = vpop.f32.mrb[0].mxu0
      %v454 = vadd.f32 %v337, %v453
      %v455 = vpop.f32.mrb[0].mxu0
      %456 = vmatprep.mubr.bf16.mxu0 0
      %457 = vmatmul.mubr.bf16.gmra.mrb[0].mxu0 %v362
      %v458 = vpop.f32.mrb[0].mxu0
      %v459 = vadd.f32 %v337, %v458
      %v460 = vpop.f32.mrb[0].mxu0
      %v461 = vpop.f32.mrb[0].mxu0
      %v462 = vadd.f32 %v337, %v461
      %v463 = vpop.f32.mrb[0].mxu0
      %464 = vdwg.mxu0
      %v465 = vmax.f32 %v403, 0.0
      %v466 = vmax.f32 %v406, 0.0
      %v467 = vmax.f32 %v411, 0.0
      %v468 = vmax.f32 %v414, 0.0
      %v469 = vmax.f32 %v419, 0.0
      %v470 = vmax.f32 %v422, 0.0
      %v471 = vmax.f32 %v427, 0.0
      %v472 = vmax.f32 %v430, 0.0
      %v473 = vmax.f32 %v435, 0.0
      %v474 = vmax.f32 %v438, 0.0
      %v475 = vmax.f32 %v443, 0.0
      %v476 = vmax.f32 %v446, 0.0
      %v477 = vmax.f32 %v451, 0.0
      %v478 = vmax.f32 %v454, 0.0
      %v479 = vmax.f32 %v459, 0.0
      %v480 = vmax.f32 %v462, 0.0
      %v481 = vpack.c.bf16 %v466, %v465
      %v482 = vpack.c.bf16 %v468, %v467
      %v483 = vpack.c.bf16 %v470, %v469
      %v484 = vpack.c.bf16 %v472, %v471
      %v485 = vpack.c.bf16 %v474, %v473
      %v486 = vpack.c.bf16 %v476, %v475
      %v487 = vpack.c.bf16 %v478, %v477
      %v488 = vpack.c.bf16 %v480, %v479
      %v497 = vunpack.c.l.b16 %v481
      %v498 = vunpack.c.h.b16 %v481
      %v499 = vunpack.c.l.b16 %v482
      %v500 = vunpack.c.h.b16 %v482
      %v501 = vunpack.c.l.b16 %v483
      %v502 = vunpack.c.h.b16 %v483
      %v503 = vunpack.c.l.b16 %v484
      %v504 = vunpack.c.h.b16 %v484
      %v505 = vunpack.c.l.b16 %v485
      %v506 = vunpack.c.h.b16 %v485
      %v507 = vunpack.c.l.b16 %v486
      %v508 = vunpack.c.h.b16 %v486
      %v509 = vunpack.c.l.b16 %v487
      %v510 = vunpack.c.h.b16 %v487
      %v511 = vunpack.c.l.b16 %v488
      %v512 = vunpack.c.h.b16 %v488
      %v513 = vpack.c.b16 %v497, %v497
      %v514 = vpack.c.b16 %v498, %v498
      %v515 = vpack.c.b16 %v499, %v499
      %v516 = vpack.c.b16 %v500, %v500
      %v517 = vpack.c.b16 %v501, %v501
      %v518 = vpack.c.b16 %v502, %v502
      %v519 = vpack.c.b16 %v503, %v503
      %v520 = vpack.c.b16 %v504, %v504
      %v521 = vpack.c.b16 %v505, %v505
      %v522 = vpack.c.b16 %v506, %v506
      %v523 = vpack.c.b16 %v507, %v507
      %v524 = vpack.c.b16 %v508, %v508
      %v525 = vpack.c.b16 %v509, %v509
      %v526 = vpack.c.b16 %v510, %v510
      %v527 = vpack.c.b16 %v511, %v511
      %v528 = vpack.c.b16 %v512, %v512
      %vm545 = vcmask 257024
      %546 = vst.msk [vmem:[%s226] sm:$0xf] %vm545, %v513
      %547 = vst.msk [vmem:[%s226 + $0x4] sm:$0xf] %vm545, %v514
      %548 = vst.msk [vmem:[%s226 + $0x8] sm:$0xf] %vm545, %v515
      %549 = vst.msk [vmem:[%s226 + $0xc] sm:$0xf] %vm545, %v516
      %550 = vst.msk [vmem:[%s226 + $0x10] sm:$0xf] %vm545, %v517
      %551 = vst.msk [vmem:[%s226 + $0x14] sm:$0xf] %vm545, %v518
      %552 = vst.msk [vmem:[%s226 + $0x18] sm:$0xf] %vm545, %v519
      %553 = vst.msk [vmem:[%s226 + $0x1c] sm:$0xf] %vm545, %v520
      %554 = vst.msk [vmem:[%s226 + $0x20] sm:$0xf] %vm545, %v521
      %555 = vst.msk [vmem:[%s226 + $0x24] sm:$0xf] %vm545, %v522
      %556 = vst.msk [vmem:[%s226 + $0x28] sm:$0xf] %vm545, %v523
      %557 = vst.msk [vmem:[%s226 + $0x2c] sm:$0xf] %vm545, %v524
      %558 = vst.msk [vmem:[%s226 + $0x30] sm:$0xf] %vm545, %v525
      %559 = vst.msk [vmem:[%s226 + $0x34] sm:$0xf] %vm545, %v526
      %560 = vst.msk [vmem:[%s226 + $0x38] sm:$0xf] %vm545, %v527
      %561 = vst.msk [vmem:[%s226 + $0x3c] sm:$0xf] %vm545, %v528
      %s562 = smul.u32 16, %s16
      %p563 = scmp.lt.s32.totalorder %s562, 63
      %s564 = scalar_select %p563, %s562, 63
      %s565 = smul.addr %s564, 4
      %s566 = scalar_lea.vmem %s5, %s565
      // Predicated region
      $region41: #{_lambda_.2} parent=39 // pred_check
        %p567 = pneg %p144
      $region42: #{_lambda_.2} parent=39 // pred_check_branch
        %569 = sbr.rel (%p567) target = $region44
      $region43: #{_lambda_.2} parent=39 // pred_region
        %s570 = smul.u32 16, %s16
      $region44: #{_lambda_.2} parent=39 // pred_fallthru
        _
    $region40: #{_lambda_.2} parent=5 // pred_fallthru
      _
    %p571 = scmp.le.s32.totalorder 2, %s11
    // Predicated region
    $region45: #{_lambda_.2} parent=5 // pred_check
      %p572 = pneg %p571
    $region46: #{_lambda_.2} parent=5 // pred_check_branch
      %574 = sbr.rel (%p572) target = $region48
    $region47: #{_lambda_.2} parent=5 // pred_region
      %s575 = ssub.s32 %s11, 2
      // Predicated region
      $region49: #{_lambda_.2} parent=47 // pred_check
        %p576 = pneg %p150
      $region50: #{_lambda_.2} parent=47 // pred_check_branch
        %578 = sbr.rel (%p576) target = $region52
      $region51: #{_lambda_.2} parent=47 // pred_region
        %s579 = smul.u32 16, %s17
        %p580 = scmp.lt.s32.totalorder %s579, 63
        %s581 = scalar_select %p580, %s579, 63
        %s582 = smul.addr %s581, 4
        %s583 = scalar_lea.vmem %s5, %s582
      $region52: #{_lambda_.2} parent=47 // pred_fallthru
        _
    $region48: #{_lambda_.2} parent=5 // pred_fallthru
      _
  $region6: #{_lambda_.2} parent=0 // loop_footer
    %s15 = sadd.s32 1, %s11
  $region7: #{_lambda_.2} parent=0 // loop_footer_branch
    %10 = sbr.rel target = $region3
  $region8: #{_lambda_.2} parent=0 // loop_exit
    _

// kernel: _lambda_.3
$region0: #{_lambda_.3}
  #allocation0 [shape = 'u32[]', space=smem, size = 0x4, offset = 0x4, fixed_abs, tag = 'smem constant byte address 0x4 - core index']
  #allocation1 [shape = 'u32[144,128]{1,0:T(1,128)}', space=vmem, size = 0x12000, scoped, tag = 'internal scratch']
  #allocation2 [shape = 'bf16[18,18,32]{2,1,0:T(8,128)(2,1)}', space=vmem, size = 0x1b000, scoped, tag = 'scratch operand']
  %s0 = inlined_call_operand.vmem [shape: bf16[2,16,16,32], index: 0, kind: input, shape index: {}]
  %s1 = inlined_call_operand.vmem [shape: bf16[9,8,32], index: 1, kind: input, shape index: {}]
  %s2 = inlined_call_operand.vmem [shape: f32[2,8,256], index: 2, kind: output, shape index: {}]
  %s3 = sld [smem:[#allocation0]]
  $region41: #{_lambda_.3} parent=0
    _
  %s5 = ssub.s32 1, %s3
  %s6 = scalar_select 0, %s5, %s3
  loop: start=0, step=1, limit=4
  $region2: #{_lambda_.3} parent=0 // loop_pre_header
    _
  $region3: #{_lambda_.3} parent=0 // loop_header
    %s8 = sphi 0, %s12
    %p9 = scmp.ge.s32.totalorder %s8, 4
    %s18 = sphi 0, %s20
    %s21 = sphi 0, %s18
    %s22 = sphi 0, %s21
    %s38 = sphi 0, %s22
    %s42 = sphi 0, %s42
    %s44 = sphi 0, %s42
    %s45 = sphi 0, %s44
    %s59 = sphi 0, %s45
    %s65 = sphi 0, %s67
    %s68 = sphi 0, %s65
    %s69 = sphi 0, %s68
    %s85 = sphi 0, %s69
  $region4: #{_lambda_.3} parent=0 // loop_header_branch
    %11 = sbr.rel (%p9) target = $region8
  $region5: #{_lambda_.3} parent=0 // loop_body
    %s13 = ssub.s32 %s8, 1
    %s14 = ssub.s32 %s8, 2
    %s15 = sadd.s32 %s8, 1
    %s16 = ssub.s32 %s8, %s15
    %p17 = scmp.eq.s32.totalorder %s16, 0
    %s19 = sadd.s32 %s18, 1
    %s20 = scalar_select %p17, %s18, %s19
    %p23 = pneg %p17
    %p24 = scmp.eq.s32.totalorder %s8, 1
    %p25 = por %p23, %p24
    %p26 = scmp.ne.s32.totalorder %s18, %s21
    %p27 = scmp.eq.s32.totalorder %s8, 0
    %p28 = por %p26, %p27
    %p29 = scmp.ne.s32.totalorder %s18, %s21
    %p30 = scmp.eq.s32.totalorder %s13, 1
    %p31 = por %p29, %p30
    %p32 = scmp.ne.s32.totalorder %s21, %s22
    %p33 = scmp.eq.s32.totalorder %s13, 0
    %p34 = por %p32, %p33
    %p35 = scmp.ne.s32.totalorder %s21, %s22
    %p36 = scmp.eq.s32.totalorder %s14, 1
    %p37 = por %p35, %p36
    %p39 = scmp.ne.s32.totalorder %s22, %s38
    %p40 = scmp.eq.s32.totalorder %s14, 0
    %p41 = por %p39, %p40
    %s43 = sadd.s32 %s42, 1
    %p46 = scmp.eq.s32.totalorder %s8, 1
    %p47 = scmp.ne.s32.totalorder %s42, %s44
    %p48 = scmp.eq.s32.totalorder %s8, 0
    %p49 = por %p47, %p48
    %p50 = scmp.ne.s32.totalorder %s42, %s44
    %p51 = scmp.eq.s32.totalorder %s13, 1
    %p52 = por %p50, %p51
    %p53 = scmp.ne.s32.totalorder %s44, %s45
    %p54 = scmp.eq.s32.totalorder %s13, 0
    %p55 = por %p53, %p54
    %p56 = scmp.ne.s32.totalorder %s44, %s45
    %p57 = scmp.eq.s32.totalorder %s14, 1
    %p58 = por %p56, %p57
    %p60 = scmp.ne.s32.totalorder %s45, %s59
    %p61 = scmp.eq.s32.totalorder %s14, 0
    %p62 = por %p60, %p61
    %s63 = ssub.s32 %s8, %s15
    %p64 = scmp.eq.s32.totalorder %s63, 0
    %s66 = sadd.s32 %s65, 1
    %s67 = scalar_select %p64, %s65, %s66
    %p70 = pneg %p64
    %p71 = scmp.eq.s32.totalorder %s8, 1
    %p72 = por %p70, %p71
    %p73 = scmp.ne.s32.totalorder %s65, %s68
    %p74 = scmp.eq.s32.totalorder %s8, 0
    %p75 = por %p73, %p74
    %p76 = scmp.ne.s32.totalorder %s65, %s68
    %p77 = scmp.eq.s32.totalorder %s13, 1
    %p78 = por %p76, %p77
    %p79 = scmp.ne.s32.totalorder %s68, %s69
    %p80 = scmp.eq.s32.totalorder %s13, 0
    %p81 = por %p79, %p80
    %p82 = scmp.ne.s32.totalorder %s68, %s69
    %p83 = scmp.eq.s32.totalorder %s14, 1
    %p84 = por %p82, %p83
    %p86 = scmp.ne.s32.totalorder %s69, %s85
    %p87 = scmp.eq.s32.totalorder %s14, 0
    %p88 = por %p86, %p87
    %p89 = scmp.le.s32.totalorder 1, %s8
    %p90 = scmp.lt.s32.totalorder %s8, 3
    %p91 = pnand %p89, %p90
    %p92 = pneg %p91
    // Predicated region
    $region9: #{_lambda_.3} parent=5 // pred_check
      _
    $region10: #{_lambda_.3} parent=5 // pred_check_branch
      %94 = sbr.rel (%p91) target = $region12
    $region11: #{_lambda_.3} parent=5 // pred_region
      %s95 = ssub.s32 %s8, 1
      // Predicated region
      $region13: #{_lambda_.3} parent=11 // pred_check
        %p96 = pneg %p55
      $region14: #{_lambda_.3} parent=11 // pred_check_branch
        %98 = sbr.rel (%p96) target = $region16
      $region15: #{_lambda_.3} parent=11 // pred_region
        _
      $region16: #{_lambda_.3} parent=11 // pred_fallthru
        _
    $region12: #{_lambda_.3} parent=5 // pred_fallthru
      _
    %p99 = scmp.lt.s32.totalorder %s8, 2
    // Predicated region
    $region17: #{_lambda_.3} parent=5 // pred_check
      %p100 = pneg %p99
    $region18: #{_lambda_.3} parent=5 // pred_check_branch
      %102 = sbr.rel (%p100) target = $region20
    $region19: #{_lambda_.3} parent=5 // pred_region
      // Predicated region
      $region21: #{_lambda_.3} parent=19 // pred_check
        %p103 = pneg %p28
      $region22: #{_lambda_.3} parent=19 // pred_check_branch
        %105 = sbr.rel (%p103) target = $region24
      $region23: #{_lambda_.3} parent=19 // pred_region
        %p106 = scmp.lt.s32.totalorder %s8, 1
        %s107 = scalar_select %p106, %s8, 1
        %s108 = smul.addr %s107, 32
        %s109 = smul.addr %s108, 4
        %s110 = scalar_lea.vmem %s0, %s109
      $region24: #{_lambda_.3} parent=19 // pred_fallthru
        _
    $region20: #{_lambda_.3} parent=5 // pred_fallthru
      _
    %p111 = scmp.le.s32.totalorder 1, %s8
    %p112 = scmp.lt.s32.totalorder %s8, 3
    %p113 = pnand %p111, %p112
    %p114 = pneg %p113
    // Predicated region
    $region25: #{_lambda_.3} parent=5 // pred_check
      _
    $region26: #{_lambda_.3} parent=5 // pred_check_branch
      %116 = sbr.rel (%p113) target = $region28
    $region27: #{_lambda_.3} parent=5 // pred_region
      %s117 = ssub.s32 %s8, 1
      %p118 = scmp.lt.s32.totalorder %s13, 1
      %s119 = scalar_select %p118, %s13, 1
      %s120 = smul.addr %s119, 32
      %s121 = smul.addr %s120, 4
      %s122 = scalar_lea.vmem %s0, %s121
      %p123 = pneg %p34
      %p124 = pneg %p31
      %p125 = pneg %p55
      %p126 = pneg %p52
      %p127 = pneg %p81
      %p128 = pneg %p78
      %p129 = scmp.lt.s32.totalorder %s13, 1
      %s130 = scalar_select %p129, %s13, 1
      %s131 = smul.addr %s130, 2
      %s132 = smul.addr %s131, 8
      %s133 = scalar_lea.vmem %s2, %s132
      %p134 = scmp.lt.s32.totalorder %s13, 1
      %s135 = scalar_select %p134, %s13, 1
      %s136 = smul.addr %s135, 32
      %s137 = smul.addr %s136, 4
      %s138 = scalar_lea.vmem %s0, %s137
      %p139 = scmp.lt.s32.totalorder %s13, 1
      %s140 = scalar_select %p139, %s13, 1
      %s141 = smul.addr %s140, 2
      %s142 = smul.addr %s141, 8
      %s143 = scalar_lea.vmem %s2, %s142
      %vm145 = vcmask 257024
      %146 = vst.msk [vmem:[#allocation2] sm:$0xf] %vm145, 0
      %147 = vst.msk [vmem:[#allocation2 + $0x4] sm:$0xf] %vm145, 0
      %vm148 = vcmask 253952
      %149 = vst.msk [vmem:[#allocation2 + $0x8] sm:$0x1] %vm148, 0
      %150 = vst.msk [vmem:[#allocation2 + $0xc] sm:$0xf] %vm145, 0
      %151 = vst.msk [vmem:[#allocation2 + $0x10] sm:$0xf] %vm145, 0
      %152 = vst.msk [vmem:[#allocation2 + $0x14] sm:$0x1] %vm148, 0
      %153 = vst.msk [vmem:[#allocation2 + $0x18] sm:$0xf] %vm145, 0
      %154 = vst.msk [vmem:[#allocation2 + $0x1c] sm:$0xf] %vm145, 0
      %155 = vst.msk [vmem:[#allocation2 + $0x20] sm:$0x1] %vm148, 0
      %156 = vst.msk [vmem:[#allocation2 + $0x24] sm:$0xf] %vm145, 0
      %157 = vst.msk [vmem:[#allocation2 + $0x28] sm:$0xf] %vm145, 0
      %158 = vst.msk [vmem:[#allocation2 + $0x2c] sm:$0x1] %vm148, 0
      %159 = vst.msk [vmem:[#allocation2 + $0x30] sm:$0xf] %vm145, 0
      %160 = vst.msk [vmem:[#allocation2 + $0x34] sm:$0xf] %vm145, 0
      %161 = vst.msk [vmem:[#allocation2 + $0x38] sm:$0x1] %vm148, 0
      %162 = vst.msk [vmem:[#allocation2 + $0x3c] sm:$0xf] %vm145, 0
      %163 = vst.msk [vmem:[#allocation2 + $0x40] sm:$0xf] %vm145, 0
      %164 = vst.msk [vmem:[#allocation2 + $0x44] sm:$0x1] %vm148, 0
      %165 = vst.msk [vmem:[#allocation2 + $0x48] sm:$0xf] %vm145, 0
      %166 = vst.msk [vmem:[#allocation2 + $0x4c] sm:$0xf] %vm145, 0
      %167 = vst.msk [vmem:[#allocation2 + $0x50] sm:$0x1] %vm148, 0
      %168 = vst.msk [vmem:[#allocation2 + $0x54] sm:$0xf] %vm145, 0
      %169 = vst.msk [vmem:[#allocation2 + $0x58] sm:$0xf] %vm145, 0
      %170 = vst.msk [vmem:[#allocation2 + $0x5c] sm:$0x1] %vm148, 0
      %171 = vst.msk [vmem:[#allocation2 + $0x60] sm:$0xf] %vm145, 0
      %172 = vst.msk [vmem:[#allocation2 + $0x64] sm:$0xf] %vm145, 0
      %173 = vst.msk [vmem:[#allocation2 + $0x68] sm:$0x1] %vm148, 0
      %174 = vst.msk [vmem:[#allocation2 + $0x6c] sm:$0xf] %vm145, 0
      %175 = vst.msk [vmem:[#allocation2 + $0x70] sm:$0xf] %vm145, 0
      %176 = vst.msk [vmem:[#allocation2 + $0x74] sm:$0x1] %vm148, 0
      %177 = vst.msk [vmem:[#allocation2 + $0x78] sm:$0xf] %vm145, 0
      %178 = vst.msk [vmem:[#allocation2 + $0x7c] sm:$0xf] %vm145, 0
      %179 = vst.msk [vmem:[#allocation2 + $0x80] sm:$0x1] %vm148, 0
      %180 = vst.msk [vmem:[#allocation2 + $0x84] sm:$0xf] %vm145, 0
      %181 = vst.msk [vmem:[#allocation2 + $0x88] sm:$0xf] %vm145, 0
      %182 = vst.msk [vmem:[#allocation2 + $0x8c] sm:$0x1] %vm148, 0
      %183 = vst.msk [vmem:[#allocation2 + $0x90] sm:$0xf] %vm145, 0
      %184 = vst.msk [vmem:[#allocation2 + $0x94] sm:$0xf] %vm145, 0
      %185 = vst.msk [vmem:[#allocation2 + $0x98] sm:$0x1] %vm148, 0
      %186 = vst.msk [vmem:[#allocation2 + $0x9c] sm:$0xf] %vm145, 0
      %187 = vst.msk [vmem:[#allocation2 + $0xa0] sm:$0xf] %vm145, 0
      %188 = vst.msk [vmem:[#allocation2 + $0xa4] sm:$0x1] %vm148, 0
      %189 = vst.msk [vmem:[#allocation2 + $0xa8] sm:$0xf] %vm145, 0
      %190 = vst.msk [vmem:[#allocation2 + $0xac] sm:$0xf] %vm145, 0
      %191 = vst.msk [vmem:[#allocation2 + $0xb0] sm:$0x1] %vm148, 0
      %192 = vst.msk [vmem:[#allocation2 + $0xb4] sm:$0xf] %vm145, 0
      %193 = vst.msk [vmem:[#allocation2 + $0xb8] sm:$0xf] %vm145, 0
      %194 = vst.msk [vmem:[#allocation2 + $0xbc] sm:$0x1] %vm148, 0
      %195 = vst.msk [vmem:[#allocation2 + $0xc0] sm:$0xf] %vm145, 0
      %196 = vst.msk [vmem:[#allocation2 + $0xc4] sm:$0xf] %vm145, 0
      %197 = vst.msk [vmem:[#allocation2 + $0xc8] sm:$0x1] %vm148, 0
      %198 = vst.msk [vmem:[#allocation2 + $0xcc] sm:$0xf] %vm145, 0
      %199 = vst.msk [vmem:[#allocation2 + $0xd0] sm:$0xf] %vm145, 0
      %200 = vst.msk [vmem:[#allocation2 + $0xd4] sm:$0x1] %vm148, 0
      %v201 = vld [vmem:[%s138] sm:$0xf]
      %v202 = vld [vmem:[%s138 + $0x4] sm:$0xf]
      %v203 = vld [vmem:[%s138 + $0x8] sm:$0xf]
      %v204 = vld [vmem:[%s138 + $0xc] sm:$0xf]
      %v205 = vld [vmem:[%s138 + $0x10] sm:$0xf]
      %v206 = vld [vmem:[%s138 + $0x14] sm:$0xf]
      %v207 = vld [vmem:[%s138 + $0x18] sm:$0xf]
      %v208 = vld [vmem:[%s138 + $0x1c] sm:$0xf]
      %v209 = vld [vmem:[%s138 + $0x20] sm:$0xf]
      %v210 = vld [vmem:[%s138 + $0x24] sm:$0xf]
      %v211 = vld [vmem:[%s138 + $0x28] sm:$0xf]
      %v212 = vld [vmem:[%s138 + $0x2c] sm:$0xf]
      %v213 = vld [vmem:[%s138 + $0x30] sm:$0xf]
      %v214 = vld [vmem:[%s138 + $0x34] sm:$0xf]
      %v215 = vld [vmem:[%s138 + $0x38] sm:$0xf]
      %v216 = vld [vmem:[%s138 + $0x3c] sm:$0xf]
      %v217 = vld [vmem:[%s138 + $0x40] sm:$0xf]
      %v218 = vld [vmem:[%s138 + $0x44] sm:$0xf]
      %v219 = vld [vmem:[%s138 + $0x48] sm:$0xf]
      %v220 = vld [vmem:[%s138 + $0x4c] sm:$0xf]
      %v221 = vld [vmem:[%s138 + $0x50] sm:$0xf]
      %v222 = vld [vmem:[%s138 + $0x54] sm:$0xf]
      %v223 = vld [vmem:[%s138 + $0x58] sm:$0xf]
      %v224 = vld [vmem:[%s138 + $0x5c] sm:$0xf]
      %v225 = vld [vmem:[%s138 + $0x60] sm:$0xf]
      %v226 = vld [vmem:[%s138 + $0x64] sm:$0xf]
      %v227 = vld [vmem:[%s138 + $0x68] sm:$0xf]
      %v228 = vld [vmem:[%s138 + $0x6c] sm:$0xf]
      %v229 = vld [vmem:[%s138 + $0x70] sm:$0xf]
      %v230 = vld [vmem:[%s138 + $0x74] sm:$0xf]
      %v231 = vld [vmem:[%s138 + $0x78] sm:$0xf]
      %v232 = vld [vmem:[%s138 + $0x7c] sm:$0xf]
      %vm233 = vsmask.f32 256
      %vm234 = vsmask.f32 4368
      %vm235 = vmor %vm233, %vm234
      %v237 = vshrl.u32 %v201, 16
      %v239 = vrot.slane %v237, 7
      %v240 = vshll.u32 %v201, 16
      %v242 = vor.u32 %v239, %v240
      %v243 = vrot.slane %v239, 4
      %v245 = vshrl.u32 %v202, 16
      %v247 = vrot.slane %v245, 7
      %v248 = vshll.u32 %v202, 16
      %v250 = vor.u32 %v247, %v248
      %v251 = vsel %vm235, %v243, %v250
      %v252 = vrot.slane %v247, 4
      %v254 = vshrl.u32 %v203, 16
      %v256 = vrot.slane %v254, 7
      %v257 = vshll.u32 %v203, 16
      %v259 = vor.u32 %v256, %v257
      %v260 = vrot.slane %v256, 4
      %v262 = vshrl.u32 %v204, 16
      %v264 = vrot.slane %v262, 7
      %v265 = vshll.u32 %v204, 16
      %v267 = vor.u32 %v264, %v265
      %v268 = vsel %vm235, %v260, %v267
      %v269 = vrot.slane %v264, 4
      %v271 = vshrl.u32 %v205, 16
      %v273 = vrot.slane %v271, 7
      %v274 = vshll.u32 %v205, 16
      %v276 = vor.u32 %v273, %v274
      %v277 = vrot.slane %v273, 4
      %v279 = vshrl.u32 %v206, 16
      %v281 = vrot.slane %v279, 7
      %v282 = vshll.u32 %v206, 16
      %v284 = vor.u32 %v281, %v282
      %v285 = vsel %vm235, %v277, %v284
      %v286 = vrot.slane %v281, 4
      %v288 = vshrl.u32 %v207, 16
      %v290 = vrot.slane %v288, 7
      %v291 = vshll.u32 %v207, 16
      %v293 = vor.u32 %v290, %v291
      %v294 = vrot.slane %v290, 4
      %v296 = vshrl.u32 %v208, 16
      %v298 = vrot.slane %v296, 7
      %v299 = vshll.u32 %v208, 16
      %v301 = vor.u32 %v298, %v299
      %v302 = vsel %vm235, %v294, %v301
      %v303 = vrot.slane %v298, 4
      %v305 = vshrl.u32 %v209, 16
      %v307 = vrot.slane %v305, 7
      %v308 = vshll.u32 %v209, 16
      %v310 = vor.u32 %v307, %v308
      %v311 = vrot.slane %v307, 4
      %v313 = vshrl.u32 %v210, 16
      %v315 = vrot.slane %v313, 7
      %v316 = vshll.u32 %v210, 16
      %v318 = vor.u32 %v315, %v316
      %v319 = vsel %vm235, %v311, %v318
      %v320 = vrot.slane %v315, 4
      %v322 = vshrl.u32 %v211, 16
      %v324 = vrot.slane %v322, 7
      %v325 = vshll.u32 %v211, 16
      %v327 = vor.u32 %v324, %v325
      %v328 = vrot.slane %v324, 4
      %v330 = vshrl.u32 %v212, 16
      %v332 = vrot.slane %v330, 7
      %v333 = vshll.u32 %v212, 16
      %v335 = vor.u32 %v332, %v333
      %v336 = vsel %vm235, %v328, %v335
      %v337 = vrot.slane %v332, 4
      %v339 = vshrl.u32 %v213, 16
      %v341 = vrot.slane %v339, 7
      %v342 = vshll.u32 %v213, 16
      %v344 = vor.u32 %v341, %v342
      %v345 = vrot.slane %v341, 4
      %v347 = vshrl.u32 %v214, 16
      %v349 = vrot.slane %v347, 7
      %v350 = vshll.u32 %v214, 16
      %v352 = vor.u32 %v349, %v350
      %v353 = vsel %vm235, %v345, %v352
      %v354 = vrot.slane %v349, 4
      %v356 = vshrl.u32 %v215, 16
      %v358 = vrot.slane %v356, 7
      %v359 = vshll.u32 %v215, 16
      %v361 = vor.u32 %v358, %v359
      %v362 = vrot.slane %v358, 4
      %v364 = vshrl.u32 %v216, 16
      %v366 = vrot.slane %v364, 7
      %v367 = vshll.u32 %v216, 16
      %v369 = vor.u32 %v366, %v367
      %v370 = vsel %vm235, %v362, %v369
      %v371 = vrot.slane %v366, 4
      %v373 = vshrl.u32 %v217, 16
      %v375 = vrot.slane %v373, 7
      %v376 = vshll.u32 %v217, 16
      %v378 = vor.u32 %v375, %v376
      %v379 = vrot.slane %v375, 4
      %v381 = vshrl.u32 %v218, 16
      %v383 = vrot.slane %v381, 7
      %v384 = vshll.u32 %v218, 16
      %v386 = vor.u32 %v383, %v384
      %v387 = vsel %vm235, %v379, %v386
      %v388 = vrot.slane %v383, 4
      %v390 = vshrl.u32 %v219, 16
      %v392 = vrot.slane %v390, 7
      %v393 = vshll.u32 %v219, 16
      %v395 = vor.u32 %v392, %v393
      %v396 = vrot.slane %v392, 4
      %v398 = vshrl.u32 %v220, 16
      %v400 = vrot.slane %v398, 7
      %v401 = vshll.u32 %v220, 16
      %v403 = vor.u32 %v400, %v401
      %v404 = vsel %vm235, %v396, %v403
      %v405 = vrot.slane %v400, 4
      %v407 = vshrl.u32 %v221, 16
      %v409 = vrot.slane %v407, 7
      %v410 = vshll.u32 %v221, 16
      %v412 = vor.u32 %v409, %v410
      %v413 = vrot.slane %v409, 4
      %v415 = vshrl.u32 %v222, 16
      %v417 = vrot.slane %v415, 7
      %v418 = vshll.u32 %v222, 16
      %v420 = vor.u32 %v417, %v418
      %v421 = vsel %vm235, %v413, %v420
      %v422 = vrot.slane %v417, 4
      %v424 = vshrl.u32 %v223, 16
      %v426 = vrot.slane %v424, 7
      %v427 = vshll.u32 %v223, 16
      %v429 = vor.u32 %v426, %v427
      %v430 = vrot.slane %v426, 4
      %v432 = vshrl.u32 %v224, 16
      %v434 = vrot.slane %v432, 7
      %v435 = vshll.u32 %v224, 16
      %v437 = vor.u32 %v434, %v435
      %v438 = vsel %vm235, %v430, %v437
      %v439 = vrot.slane %v434, 4
      %v441 = vshrl.u32 %v225, 16
      %v443 = vrot.slane %v441, 7
      %v444 = vshll.u32 %v225, 16
      %v446 = vor.u32 %v443, %v444
      %v447 = vrot.slane %v443, 4
      %v449 = vshrl.u32 %v226, 16
      %v451 = vrot.slane %v449, 7
      %v452 = vshll.u32 %v226, 16
      %v454 = vor.u32 %v451, %v452
      %v455 = vsel %vm235, %v447, %v454
      %v456 = vrot.slane %v451, 4
      %v458 = vshrl.u32 %v227, 16
      %v460 = vrot.slane %v458, 7
      %v461 = vshll.u32 %v227, 16
      %v463 = vor.u32 %v460, %v461
      %v464 = vrot.slane %v460, 4
      %v466 = vshrl.u32 %v228, 16
      %v468 = vrot.slane %v466, 7
      %v469 = vshll.u32 %v228, 16
      %v471 = vor.u32 %v468, %v469
      %v472 = vsel %vm235, %v464, %v471
      %v473 = vrot.slane %v468, 4
      %v475 = vshrl.u32 %v229, 16
      %v477 = vrot.slane %v475, 7
      %v478 = vshll.u32 %v229, 16
      %v480 = vor.u32 %v477, %v478
      %v481 = vrot.slane %v477, 4
      %v483 = vshrl.u32 %v230, 16
      %v485 = vrot.slane %v483, 7
      %v486 = vshll.u32 %v230, 16
      %v488 = vor.u32 %v485, %v486
      %v489 = vsel %vm235, %v481, %v488
      %v490 = vrot.slane %v485, 4
      %v492 = vshrl.u32 %v231, 16
      %v494 = vrot.slane %v492, 7
      %v495 = vshll.u32 %v231, 16
      %v497 = vor.u32 %v494, %v495
      %v498 = vrot.slane %v494, 4
      %v500 = vshrl.u32 %v232, 16
      %v502 = vrot.slane %v500, 7
      %v503 = vshll.u32 %v232, 16
      %v505 = vor.u32 %v502, %v503
      %v506 = vsel %vm235, %v498, %v505
      %v507 = vrot.slane %v502, 4
      %s556 = scalar_lea.vmem [#allocation2], 12
      %vm557 = vcmask 257024
      %vm558 = vsmask.f32 7938
      %vm559 = vmand %vm557, %vm558
      %v560 = vld [vmem:[%s556] sm:$0xf]
      %v561 = vsel %vm559, %v242, %v560
      %562 = vst [vmem:[%s556] sm:$0xf] %v561
      %563 = vst.msk [vmem:[%s556 + $0x4] sm:$0xf] %vm145, %v251
      %vm564 = vcmask 253952
      %vm565 = vmand %vm564, %vm233
      %v566 = vld [vmem:[%s556 + $0x8] sm:$0x1]
      %v567 = vsel %vm565, %v252, %v566
      %568 = vst [vmem:[%s556 + $0x8] sm:$0x1] %v567
      %v569 = vld [vmem:[%s556 + $0xc] sm:$0xf]
      %v570 = vsel %vm559, %v259, %v569
      %571 = vst [vmem:[%s556 + $0xc] sm:$0xf] %v570
      %572 = vst.msk [vmem:[%s556 + $0x10] sm:$0xf] %vm145, %v268
      %v573 = vld [vmem:[%s556 + $0x14] sm:$0x1]
      %v574 = vsel %vm565, %v269, %v573
      %575 = vst [vmem:[%s556 + $0x14] sm:$0x1] %v574
      %v576 = vld [vmem:[%s556 + $0x18] sm:$0xf]
      %v577 = vsel %vm559, %v276, %v576
      %578 = vst [vmem:[%s556 + $0x18] sm:$0xf] %v577
      %579 = vst.msk [vmem:[%s556 + $0x1c] sm:$0xf] %vm145, %v285
      %v580 = vld [vmem:[%s556 + $0x20] sm:$0x1]
      %v581 = vsel %vm565, %v286, %v580
      %582 = vst [vmem:[%s556 + $0x20] sm:$0x1] %v581
      %v583 = vld [vmem:[%s556 + $0x24] sm:$0xf]
      %v584 = vsel %vm559, %v293, %v583
      %585 = vst [vmem:[%s556 + $0x24] sm:$0xf] %v584
      %586 = vst.msk [vmem:[%s556 + $0x28] sm:$0xf] %vm145, %v302
      %v587 = vld [vmem:[%s556 + $0x2c] sm:$0x1]
      %v588 = vsel %vm565, %v303, %v587
      %589 = vst [vmem:[%s556 + $0x2c] sm:$0x1] %v588
      %v590 = vld [vmem:[%s556 + $0x30] sm:$0xf]
      %v591 = vsel %vm559, %v310, %v590
      %592 = vst [vmem:[%s556 + $0x30] sm:$0xf] %v591
      %593 = vst.msk [vmem:[%s556 + $0x34] sm:$0xf] %vm145, %v319
      %v594 = vld [vmem:[%s556 + $0x38] sm:$0x1]
      %v595 = vsel %vm565, %v320, %v594
      %596 = vst [vmem:[%s556 + $0x38] sm:$0x1] %v595
      %v597 = vld [vmem:[%s556 + $0x3c] sm:$0xf]
      %v598 = vsel %vm559, %v327, %v597
      %599 = vst [vmem:[%s556 + $0x3c] sm:$0xf] %v598
      %600 = vst.msk [vmem:[%s556 + $0x40] sm:$0xf] %vm145, %v336
      %v601 = vld [vmem:[%s556 + $0x44] sm:$0x1]
      %v602 = vsel %vm565, %v337, %v601
      %603 = vst [vmem:[%s556 + $0x44] sm:$0x1] %v602
      %v604 = vld [vmem:[%s556 + $0x48] sm:$0xf]
      %v605 = vsel %vm559, %v344, %v604
      %606 = vst [vmem:[%s556 + $0x48] sm:$0xf] %v605
      %607 = vst.msk [vmem:[%s556 + $0x4c] sm:$0xf] %vm145, %v353
      %v608 = vld [vmem:[%s556 + $0x50] sm:$0x1]
      %v609 = vsel %vm565, %v354, %v608
      %610 = vst [vmem:[%s556 + $0x50] sm:$0x1] %v609
      %v611 = vld [vmem:[%s556 + $0x54] sm:$0xf]
      %v612 = vsel %vm559, %v361, %v611
      %613 = vst [vmem:[%s556 + $0x54] sm:$0xf] %v612
      %614 = vst.msk [vmem:[%s556 + $0x58] sm:$0xf] %vm145, %v370
      %v615 = vld [vmem:[%s556 + $0x5c] sm:$0x1]
      %v616 = vsel %vm565, %v371, %v615
      %617 = vst [vmem:[%s556 + $0x5c] sm:$0x1] %v616
      %v618 = vld [vmem:[%s556 + $0x60] sm:$0xf]
      %v619 = vsel %vm559, %v378, %v618
      %620 = vst [vmem:[%s556 + $0x60] sm:$0xf] %v619
      %621 = vst.msk [vmem:[%s556 + $0x64] sm:$0xf] %vm145, %v387
      %v622 = vld [vmem:[%s556 + $0x68] sm:$0x1]
      %v623 = vsel %vm565, %v388, %v622
      %624 = vst [vmem:[%s556 + $0x68] sm:$0x1] %v623
      %v625 = vld [vmem:[%s556 + $0x6c] sm:$0xf]
      %v626 = vsel %vm559, %v395, %v625
      %627 = vst [vmem:[%s556 + $0x6c] sm:$0xf] %v626
      %628 = vst.msk [vmem:[%s556 + $0x70] sm:$0xf] %vm145, %v404
      %v629 = vld [vmem:[%s556 + $0x74] sm:$0x1]
      %v630 = vsel %vm565, %v405, %v629
      %631 = vst [vmem:[%s556 + $0x74] sm:$0x1] %v630
      %v632 = vld [vmem:[%s556 + $0x78] sm:$0xf]
      %v633 = vsel %vm559, %v412, %v632
      %634 = vst [vmem:[%s556 + $0x78] sm:$0xf] %v633
      %635 = vst.msk [vmem:[%s556 + $0x7c] sm:$0xf] %vm145, %v421
      %v636 = vld [vmem:[%s556 + $0x80] sm:$0x1]
      %v637 = vsel %vm565, %v422, %v636
      %638 = vst [vmem:[%s556 + $0x80] sm:$0x1] %v637
      %v639 = vld [vmem:[%s556 + $0x84] sm:$0xf]
      %v640 = vsel %vm559, %v429, %v639
      %641 = vst [vmem:[%s556 + $0x84] sm:$0xf] %v640
      %642 = vst.msk [vmem:[%s556 + $0x88] sm:$0xf] %vm145, %v438
      %v643 = vld [vmem:[%s556 + $0x8c] sm:$0x1]
      %v644 = vsel %vm565, %v439, %v643
      %645 = vst [vmem:[%s556 + $0x8c] sm:$0x1] %v644
      %v646 = vld [vmem:[%s556 + $0x90] sm:$0xf]
      %v647 = vsel %vm559, %v446, %v646
      %648 = vst [vmem:[%s556 + $0x90] sm:$0xf] %v647
      %649 = vst.msk [vmem:[%s556 + $0x94] sm:$0xf] %vm145, %v455
      %v650 = vld [vmem:[%s556 + $0x98] sm:$0x1]
      %v651 = vsel %vm565, %v456, %v650
      %652 = vst [vmem:[%s556 + $0x98] sm:$0x1] %v651
      %v653 = vld [vmem:[%s556 + $0x9c] sm:$0xf]
      %v654 = vsel %vm559, %v463, %v653
      %655 = vst [vmem:[%s556 + $0x9c] sm:$0xf] %v654
      %656 = vst.msk [vmem:[%s556 + $0xa0] sm:$0xf] %vm145, %v472
      %v657 = vld [vmem:[%s556 + $0xa4] sm:$0x1]
      %v658 = vsel %vm565, %v473, %v657
      %659 = vst [vmem:[%s556 + $0xa4] sm:$0x1] %v658
      %v660 = vld [vmem:[%s556 + $0xa8] sm:$0xf]
      %v661 = vsel %vm559, %v480, %v660
      %662 = vst [vmem:[%s556 + $0xa8] sm:$0xf] %v661
      %663 = vst.msk [vmem:[%s556 + $0xac] sm:$0xf] %vm145, %v489
      %v664 = vld [vmem:[%s556 + $0xb0] sm:$0x1]
      %v665 = vsel %vm565, %v490, %v664
      %666 = vst [vmem:[%s556 + $0xb0] sm:$0x1] %v665
      %v667 = vld [vmem:[%s556 + $0xb4] sm:$0xf]
      %v668 = vsel %vm559, %v497, %v667
      %669 = vst [vmem:[%s556 + $0xb4] sm:$0xf] %v668
      %670 = vst.msk [vmem:[%s556 + $0xb8] sm:$0xf] %vm145, %v506
      %v671 = vld [vmem:[%s556 + $0xbc] sm:$0x1]
      %v672 = vsel %vm565, %v507, %v671
      %673 = vst [vmem:[%s556 + $0xbc] sm:$0x1] %v672
      %v674 = vld [vmem:[%s1] sm:$0xf]
      %v675 = vld [vmem:[#allocation2] sm:$0xf]
      %v676 = vld [vmem:[#allocation2 + $0x4] sm:$0xf]
      %v677 = vld [vmem:[#allocation2 + $0xc] sm:$0xf]
      %v678 = vld [vmem:[#allocation2 + $0x10] sm:$0xf]
      %v679 = vld [vmem:[#allocation2 + $0x18] sm:$0xf]
      %v680 = vld [vmem:[#allocation2 + $0x1c] sm:$0xf]
      %v681 = vld [vmem:[#allocation2 + $0x24] sm:$0xf]
      %v682 = vld [vmem:[#allocation2 + $0x28] sm:$0xf]
      %v683 = vld [vmem:[#allocation2 + $0x30] sm:$0xf]
      %v684 = vld [vmem:[#allocation2 + $0x34] sm:$0xf]
      %v685 = vld [vmem:[#allocation2 + $0x3c] sm:$0xf]
      %v686 = vld [vmem:[#allocation2 + $0x40] sm:$0xf]
      %v687 = vld [vmem:[#allocation2 + $0x48] sm:$0xf]
      %v688 = vld [vmem:[#allocation2 + $0x4c] sm:$0xf]
      %v689 = vld [vmem:[#allocation2 + $0x54] sm:$0xf]
      %v690 = vld [vmem:[#allocation2 + $0x58] sm:$0xf]
      %v691 = vld [vmem:[#allocation2 + $0x60] sm:$0xf]
      %v692 = vld [vmem:[#allocation2 + $0x64] sm:$0xf]
      %v693 = vld [vmem:[#allocation2 + $0x6c] sm:$0xf]
      %v694 = vld [vmem:[#allocation2 + $0x70] sm:$0xf]
      %v695 = vld [vmem:[#allocation2 + $0x78] sm:$0xf]
      %v696 = vld [vmem:[#allocation2 + $0x7c] sm:$0xf]
      %v697 = vld [vmem:[#allocation2 + $0x84] sm:$0xf]
      %v698 = vld [vmem:[#allocation2 + $0x88] sm:$0xf]
      %v699 = vld [vmem:[#allocation2 + $0x90] sm:$0xf]
      %v700 = vld [vmem:[#allocation2 + $0x94] sm:$0xf]
      %v701 = vld [vmem:[#allocation2 + $0x9c] sm:$0xf]
      %v702 = vld [vmem:[#allocation2 + $0xa0] sm:$0xf]
      %v703 = vld [vmem:[#allocation2 + $0xa8] sm:$0xf]
      %v704 = vld [vmem:[#allocation2 + $0xac] sm:$0xf]
      %v705 = vld [vmem:[#allocation2 + $0xb4] sm:$0xf]
      %v706 = vld [vmem:[#allocation2 + $0xb8] sm:$0xf]
      %s707 = scalar_lea.vmem %s1, 4
      %v708 = vld [vmem:[%s707] sm:$0xf]
      %v709 = vld [vmem:[#allocation2 + $0x8] sm:$0x1]
      %v710 = vld [vmem:[#allocation2 + $0x14] sm:$0x1]
      %v711 = vld [vmem:[#allocation2 + $0x20] sm:$0x1]
      %v712 = vld [vmem:[#allocation2 + $0x2c] sm:$0x1]
      %v713 = vld [vmem:[#allocation2 + $0x38] sm:$0x1]
      %v714 = vld [vmem:[#allocation2 + $0x44] sm:$0x1]
      %v715 = vld [vmem:[#allocation2 + $0x50] sm:$0x1]
      %v716 = vld [vmem:[#allocation2 + $0x5c] sm:$0x1]
      %v717 = vld [vmem:[#allocation2 + $0x68] sm:$0x1]
      %v718 = vld [vmem:[#allocation2 + $0x74] sm:$0x1]
      %v719 = vld [vmem:[#allocation2 + $0x80] sm:$0x1]
      %v720 = vld [vmem:[#allocation2 + $0x8c] sm:$0x1]
      %v721 = vld [vmem:[#allocation2 + $0x98] sm:$0x1]
      %v722 = vld [vmem:[#allocation2 + $0xa4] sm:$0x1]
      %v723 = vld [vmem:[#allocation2 + $0xb0] sm:$0x1]
      %v724 = vld [vmem:[#allocation2 + $0xbc] sm:$0x1]
      %vm725 = vsmask.f32 3328
      %vm726 = vsmask.f32 7440
      %vm727 = vmor %vm725, %vm726
      %v729 = vshrl.u32 %v675, 16
      %v731 = vrot.slane %v729, 4
      %v732 = vshll.u32 %v675, 16
      %v734 = vrot.slane %v732, 5
      %v735 = vor.u32 %v731, %v734
      %v736 = vrot.slane %v735, 4
      %v738 = vshll.u32 %v676, 16
      %v740 = vrot.slane %v738, 5
      %v741 = vsel %vm727, %v736, %v740
      %v742 = vshrl.u32 %v676, 16
      %v744 = vrot.slane %v742, 4
      %v745 = vor.u32 %v744, %v740
      %v746 = vrot.slane %v745, 4
      %v748 = vshll.u32 %v709, 16
      %v750 = vrot.slane %v748, 5
      %v751 = vsel %vm727, %v746, %v750
      %v753 = vshrl.u32 %v677, 16
      %v755 = vrot.slane %v753, 4
      %v756 = vshll.u32 %v677, 16
      %v758 = vrot.slane %v756, 5
      %v759 = vor.u32 %v755, %v758
      %v760 = vrot.slane %v759, 4
      %v762 = vshll.u32 %v678, 16
      %v764 = vrot.slane %v762, 5
      %v765 = vsel %vm727, %v760, %v764
      %v766 = vshrl.u32 %v678, 16
      %v768 = vrot.slane %v766, 4
      %v769 = vor.u32 %v768, %v764
      %v770 = vrot.slane %v769, 4
      %v772 = vshll.u32 %v710, 16
      %v774 = vrot.slane %v772, 5
      %v775 = vsel %vm727, %v770, %v774
      %v777 = vshrl.u32 %v679, 16
      %v779 = vrot.slane %v777, 4
      %v780 = vshll.u32 %v679, 16
      %v782 = vrot.slane %v780, 5
      %v783 = vor.u32 %v779, %v782
      %v784 = vrot.slane %v783, 4
      %v786 = vshll.u32 %v680, 16
      %v788 = vrot.slane %v786, 5
      %v789 = vsel %vm727, %v784, %v788
      %v790 = vshrl.u32 %v680, 16
      %v792 = vrot.slane %v790, 4
      %v793 = vor.u32 %v792, %v788
      %v794 = vrot.slane %v793, 4
      %v796 = vshll.u32 %v711, 16
      %v798 = vrot.slane %v796, 5
      %v799 = vsel %vm727, %v794, %v798
      %v801 = vshrl.u32 %v681, 16
      %v803 = vrot.slane %v801, 4
      %v804 = vshll.u32 %v681, 16
      %v806 = vrot.slane %v804, 5
      %v807 = vor.u32 %v803, %v806
      %v808 = vrot.slane %v807, 4
      %v810 = vshll.u32 %v682, 16
      %v812 = vrot.slane %v810, 5
      %v813 = vsel %vm727, %v808, %v812
      %v814 = vshrl.u32 %v682, 16
      %v816 = vrot.slane %v814, 4
      %v817 = vor.u32 %v816, %v812
      %v818 = vrot.slane %v817, 4
      %v820 = vshll.u32 %v712, 16
      %v822 = vrot.slane %v820, 5
      %v823 = vsel %vm727, %v818, %v822
      %v825 = vshrl.u32 %v683, 16
      %v827 = vrot.slane %v825, 4
      %v828 = vshll.u32 %v683, 16
      %v830 = vrot.slane %v828, 5
      %v831 = vor.u32 %v827, %v830
      %v832 = vrot.slane %v831, 4
      %v834 = vshll.u32 %v684, 16
      %v836 = vrot.slane %v834, 5
      %v837 = vsel %vm727, %v832, %v836
      %v838 = vshrl.u32 %v684, 16
      %v840 = vrot.slane %v838, 4
      %v841 = vor.u32 %v840, %v836
      %v842 = vrot.slane %v841, 4
      %v844 = vshll.u32 %v713, 16
      %v846 = vrot.slane %v844, 5
      %v847 = vsel %vm727, %v842, %v846
      %v849 = vshrl.u32 %v685, 16
      %v851 = vrot.slane %v849, 4
      %v852 = vshll.u32 %v685, 16
      %v854 = vrot.slane %v852, 5
      %v855 = vor.u32 %v851, %v854
      %v856 = vrot.slane %v855, 4
      %v858 = vshll.u32 %v686, 16
      %v860 = vrot.slane %v858, 5
      %v861 = vsel %vm727, %v856, %v860
      %v862 = vshrl.u32 %v686, 16
      %v864 = vrot.slane %v862, 4
      %v865 = vor.u32 %v864, %v860
      %v866 = vrot.slane %v865, 4
      %v868 = vshll.u32 %v714, 16
      %v870 = vrot.slane %v868, 5
      %v871 = vsel %vm727, %v866, %v870
      %v873 = vshrl.u32 %v687, 16
      %v875 = vrot.slane %v873, 4
      %v876 = vshll.u32 %v687, 16
      %v878 = vrot.slane %v876, 5
      %v879 = vor.u32 %v875, %v878
      %v880 = vrot.slane %v879, 4
      %v882 = vshll.u32 %v688, 16
      %v884 = vrot.slane %v882, 5
      %v885 = vsel %vm727, %v880, %v884
      %v886 = vshrl.u32 %v688, 16
      %v888 = vrot.slane %v886, 4
      %v889 = vor.u32 %v888, %v884
      %v890 = vrot.slane %v889, 4
      %v892 = vshll.u32 %v715, 16
      %v894 = vrot.slane %v892, 5
      %v895 = vsel %vm727, %v890, %v894
      %v897 = vshrl.u32 %v689, 16
      %v899 = vrot.slane %v897, 4
      %v900 = vshll.u32 %v689, 16
      %v902 = vrot.slane %v900, 5
      %v903 = vor.u32 %v899, %v902
      %v904 = vrot.slane %v903, 4
      %v906 = vshll.u32 %v690, 16
      %v908 = vrot.slane %v906, 5
      %v909 = vsel %vm727, %v904, %v908
      %v910 = vshrl.u32 %v690, 16
      %v912 = vrot.slane %v910, 4
      %v913 = vor.u32 %v912, %v908
      %v914 = vrot.slane %v913, 4
      %v916 = vshll.u32 %v716, 16
      %v918 = vrot.slane %v916, 5
      %v919 = vsel %vm727, %v914, %v918
      %v921 = vshrl.u32 %v691, 16
      %v923 = vrot.slane %v921, 4
      %v924 = vshll.u32 %v691, 16
      %v926 = vrot.slane %v924, 5
      %v927 = vor.u32 %v923, %v926
      %v928 = vrot.slane %v927, 4
      %v930 = vshll.u32 %v692, 16
      %v932 = vrot.slane %v930, 5
      %v933 = vsel %vm727, %v928, %v932
      %v934 = vshrl.u32 %v692, 16
      %v936 = vrot.slane %v934, 4
      %v937 = vor.u32 %v936, %v932
      %v938 = vrot.slane %v937, 4
      %v940 = vshll.u32 %v717, 16
      %v942 = vrot.slane %v940, 5
      %v943 = vsel %vm727, %v938, %v942
      %v945 = vshrl.u32 %v693, 16
      %v947 = vrot.slane %v945, 4
      %v948 = vshll.u32 %v693, 16
      %v950 = vrot.slane %v948, 5
      %v951 = vor.u32 %v947, %v950
      %v952 = vrot.slane %v951, 4
      %v954 = vshll.u32 %v694, 16
      %v956 = vrot.slane %v954, 5
      %v957 = vsel %vm727, %v952, %v956
      %v958 = vshrl.u32 %v694, 16
      %v960 = vrot.slane %v958, 4
      %v961 = vor.u32 %v960, %v956
      %v962 = vrot.slane %v961, 4
      %v964 = vshll.u32 %v718, 16
      %v966 = vrot.slane %v964, 5
      %v967 = vsel %vm727, %v962, %v966
      %v969 = vshrl.u32 %v695, 16
      %v971 = vrot.slane %v969, 4
      %v972 = vshll.u32 %v695, 16
      %v974 = vrot.slane %v972, 5
      %v975 = vor.u32 %v971, %v974
      %v976 = vrot.slane %v975, 4
      %v978 = vshll.u32 %v696, 16
      %v980 = vrot.slane %v978, 5
      %v981 = vsel %vm727, %v976, %v980
      %v982 = vshrl.u32 %v696, 16
      %v984 = vrot.slane %v982, 4
      %v985 = vor.u32 %v984, %v980
      %v986 = vrot.slane %v985, 4
      %v988 = vshll.u32 %v719, 16
      %v990 = vrot.slane %v988, 5
      %v991 = vsel %vm727, %v986, %v990
      %v993 = vshrl.u32 %v697, 16
      %v995 = vrot.slane %v993, 4
      %v996 = vshll.u32 %v697, 16
      %v998 = vrot.slane %v996, 5
      %v999 = vor.u32 %v995, %v998
      %v1000 = vrot.slane %v999, 4
      %v1002 = vshll.u32 %v698, 16
      %v1004 = vrot.slane %v1002, 5
      %v1005 = vsel %vm727, %v1000, %v1004
      %v1006 = vshrl.u32 %v698, 16
      %v1008 = vrot.slane %v1006, 4
      %v1009 = vor.u32 %v1008, %v1004
      %v1010 = vrot.slane %v1009, 4
      %v1012 = vshll.u32 %v720, 16
      %v1014 = vrot.slane %v1012, 5
      %v1015 = vsel %vm727, %v1010, %v1014
      %v1017 = vshrl.u32 %v699, 16
      %v1019 = vrot.slane %v1017, 4
      %v1020 = vshll.u32 %v699, 16
      %v1022 = vrot.slane %v1020, 5
      %v1023 = vor.u32 %v1019, %v1022
      %v1024 = vrot.slane %v1023, 4
      %v1026 = vshll.u32 %v700, 16
      %v1028 = vrot.slane %v1026, 5
      %v1029 = vsel %vm727, %v1024, %v1028
      %v1030 = vshrl.u32 %v700, 16
      %v1032 = vrot.slane %v1030, 4
      %v1033 = vor.u32 %v1032, %v1028
      %v1034 = vrot.slane %v1033, 4
      %v1036 = vshll.u32 %v721, 16
      %v1038 = vrot.slane %v1036, 5
      %v1039 = vsel %vm727, %v1034, %v1038
      %v1041 = vshrl.u32 %v701, 16
      %v1043 = vrot.slane %v1041, 4
      %v1044 = vshll.u32 %v701, 16
      %v1046 = vrot.slane %v1044, 5
      %v1047 = vor.u32 %v1043, %v1046
      %v1048 = vrot.slane %v1047, 4
      %v1050 = vshll.u32 %v702, 16
      %v1052 = vrot.slane %v1050, 5
      %v1053 = vsel %vm727, %v1048, %v1052
      %v1054 = vshrl.u32 %v702, 16
      %v1056 = vrot.slane %v1054, 4
      %v1057 = vor.u32 %v1056, %v1052
      %v1058 = vrot.slane %v1057, 4
      %v1060 = vshll.u32 %v722, 16
      %v1062 = vrot.slane %v1060, 5
      %v1063 = vsel %vm727, %v1058, %v1062
      %v1065 = vshrl.u32 %v703, 16
      %v1067 = vrot.slane %v1065, 4
      %v1068 = vshll.u32 %v703, 16
      %v1070 = vrot.slane %v1068, 5
      %v1071 = vor.u32 %v1067, %v1070
      %v1072 = vrot.slane %v1071, 4
      %v1074 = vshll.u32 %v704, 16
      %v1076 = vrot.slane %v1074, 5
      %v1077 = vsel %vm727, %v1072, %v1076
      %v1078 = vshrl.u32 %v704, 16
      %v1080 = vrot.slane %v1078, 4
      %v1081 = vor.u32 %v1080, %v1076
      %v1082 = vrot.slane %v1081, 4
      %v1084 = vshll.u32 %v723, 16
      %v1086 = vrot.slane %v1084, 5
      %v1087 = vsel %vm727, %v1082, %v1086
      %v1089 = vshrl.u32 %v705, 16
      %v1091 = vrot.slane %v1089, 4
      %v1092 = vshll.u32 %v705, 16
      %v1094 = vrot.slane %v1092, 5
      %v1095 = vor.u32 %v1091, %v1094
      %v1096 = vrot.slane %v1095, 4
      %v1098 = vshll.u32 %v706, 16
      %v1100 = vrot.slane %v1098, 5
      %v1101 = vsel %vm727, %v1096, %v1100
      %v1102 = vshrl.u32 %v706, 16
      %v1104 = vrot.slane %v1102, 4
      %v1105 = vor.u32 %v1104, %v1100
      %v1106 = vrot.slane %v1105, 4
      %v1108 = vshll.u32 %v724, 16
      %v1110 = vrot.slane %v1108, 5
      %v1111 = vsel %vm727, %v1106, %v1110
      %v1112 = vunpack.c.l.b16 %v741
      %v1113 = vunpack.c.l.b16 %v751
      %v1114 = vunpack.c.l.b16 %v765
      %v1115 = vunpack.c.l.b16 %v775
      %v1116 = vunpack.c.l.b16 %v789
      %v1117 = vunpack.c.l.b16 %v799
      %v1118 = vunpack.c.l.b16 %v813
      %v1119 = vunpack.c.l.b16 %v823
      %v1120 = vunpack.c.l.b16 %v837
      %v1121 = vunpack.c.l.b16 %v847
      %v1122 = vunpack.c.l.b16 %v861
      %v1123 = vunpack.c.l.b16 %v871
      %v1124 = vunpack.c.l.b16 %v885
      %v1125 = vunpack.c.l.b16 %v895
      %v1126 = vunpack.c.l.b16 %v909
      %v1127 = vunpack.c.l.b16 %v919
      %v1128 = vunpack.c.l.b16 %v933
      %v1129 = vunpack.c.l.b16 %v943
      %v1130 = vunpack.c.l.b16 %v957
      %v1131 = vunpack.c.l.b16 %v967
      %v1132 = vunpack.c.l.b16 %v981
      %v1133 = vunpack.c.l.b16 %v991
      %v1134 = vunpack.c.l.b16 %v1005
      %v1135 = vunpack.c.l.b16 %v1015
      %v1136 = vunpack.c.l.b16 %v1029
      %v1137 = vunpack.c.l.b16 %v1039
      %v1138 = vunpack.c.l.b16 %v1053
      %v1139 = vunpack.c.l.b16 %v1063
      %v1140 = vunpack.c.l.b16 %v1077
      %v1141 = vunpack.c.l.b16 %v1087
      %v1142 = vunpack.c.l.b16 %v1101
      %v1143 = vunpack.c.l.b16 %v1111
      %v1144 = vpack.c.b16 %v1113, %v1112
      %v1145 = vpack.c.b16 %v1115, %v1114
      %v1146 = vpack.c.b16 %v1117, %v1116
      %v1147 = vpack.c.b16 %v1119, %v1118
      %v1148 = vpack.c.b16 %v1121, %v1120
      %v1149 = vpack.c.b16 %v1123, %v1122
      %v1150 = vpack.c.b16 %v1125, %v1124
      %v1151 = vpack.c.b16 %v1127, %v1126
      %v1152 = vpack.c.b16 %v1129, %v1128
      %v1153 = vpack.c.b16 %v1131, %v1130
      %v1154 = vpack.c.b16 %v1133, %v1132
      %v1155 = vpack.c.b16 %v1135, %v1134
      %v1156 = vpack.c.b16 %v1137, %v1136
      %v1157 = vpack.c.b16 %v1139, %v1138
      %v1158 = vpack.c.b16 %v1141, %v1140
      %v1159 = vpack.c.b16 %v1143, %v1142
      %vm1160 = vcmask 261120
      %v1162 = vsel %vm1160, %v708, 0
      %v1165 = vsel %vm1160, %v1144, 0
      %v1168 = vsel %vm1160, %v1145, 0
      %v1171 = vsel %vm1160, %v1146, 0
      %v1174 = vsel %vm1160, %v1147, 0
      %v1177 = vsel %vm1160, %v1148, 0
      %v1180 = vsel %vm1160, %v1149, 0
      %v1183 = vsel %vm1160, %v1150, 0
      %v1186 = vsel %vm1160, %v1151, 0
      %v1189 = vsel %vm1160, %v1152, 0
      %v1192 = vsel %vm1160, %v1153, 0
      %v1195 = vsel %vm1160, %v1154, 0
      %v1198 = vsel %vm1160, %v1155, 0
      %v1201 = vsel %vm1160, %v1156, 0
      %v1204 = vsel %vm1160, %v1157, 0
      %v1207 = vsel %vm1160, %v1158, 0
      %v1210 = vsel %vm1160, %v1159, 0
      %1212 = vmatprep.subr.bf16.mxu0 0
      %1213 = vmatpush1.bf16.xpose.msra.mxu0 %v1165
      %1214 = vmatprep.subr.bf16.mxu0 0
      %1215 = vmatpush1.bf16.xpose.msra.mxu0 %v1168
      %1216 = vmatprep.subr.bf16.mxu0 0
      %1217 = vmatpush1.bf16.xpose.msra.mxu0 %v1171
      %1218 = vmatprep.subr.bf16.mxu0 0
      %1219 = vmatpush1.bf16.xpose.msra.mxu0 %v1174
      %1220 = vmatprep.subr.bf16.mxu0 0
      %1221 = vmatpush1.bf16.xpose.msra.mxu0 %v1177
      %1222 = vmatprep.subr.bf16.mxu0 0
      %1223 = vmatpush1.bf16.xpose.msra.mxu0 %v1180
      %1224 = vmatprep.subr.bf16.mxu0 0
      %1225 = vmatpush1.bf16.xpose.msra.mxu0 %v1183
      %1226 = vmatprep.subr.bf16.mxu0 0
      %1227 = vmatpush1.bf16.xpose.msra.mxu0 %v1186
      %1228 = vmatprep.subr.bf16.mxu0 0
      %1229 = vmatpush1.bf16.xpose.msra.mxu0 %v1189
      %1230 = vmatprep.subr.bf16.mxu0 0
      %1231 = vmatpush1.bf16.xpose.msra.mxu0 %v1192
      %1232 = vmatprep.subr.bf16.mxu0 0
      %1233 = vmatpush1.bf16.xpose.msra.mxu0 %v1195
      %1234 = vmatprep.subr.bf16.mxu0 0
      %1235 = vmatpush1.bf16.xpose.msra.mxu0 %v1198
      %1236 = vmatprep.subr.bf16.mxu0 0
      %1237 = vmatpush1.bf16.xpose.msra.mxu0 %v1201
      %1238 = vmatprep.subr.bf16.mxu0 0
      %1239 = vmatpush1.bf16.xpose.msra.mxu0 %v1204
      %1240 = vmatprep.subr.bf16.mxu0 0
      %1241 = vmatpush1.bf16.xpose.msra.mxu0 %v1207
      %1242 = vmatprep.subr.bf16.mxu0 0
      %1243 = vmatpush1.bf16.xpose.msra.mxu0 %v1210
      %1244 = vmatprep.mubr.bf16.mxu0 0
      %1245 = vmatmul.mubr.bf16.gmra.mrb[0].mxu0 %v1162
      %v1246 = vpop.f32.mrb[0].mxu0
      %v1247 = vadd.f32 0.0, %v1246
      %v1248 = vpop.f32.mrb[0].mxu0
      %v1249 = vadd.f32 0.0, %v1248
      %v1250 = vpop.f32.mrb[0].mxu0
      %v1251 = vpop.f32.mrb[0].mxu0
      %1252 = vdwg.mxu0
      %v1285 = vunpack.c.l.b16 %v675
      %v1286 = vunpack.c.l.b16 %v676
      %v1287 = vunpack.c.l.b16 %v677
      %v1288 = vunpack.c.l.b16 %v678
      %v1289 = vunpack.c.l.b16 %v679
      %v1290 = vunpack.c.l.b16 %v680
      %v1291 = vunpack.c.l.b16 %v681
      %v1292 = vunpack.c.l.b16 %v682
      %v1293 = vunpack.c.l.b16 %v683
      %v1294 = vunpack.c.l.b16 %v684
      %v1295 = vunpack.c.l.b16 %v685
      %v1296 = vunpack.c.l.b16 %v686
      %v1297 = vunpack.c.l.b16 %v687
      %v1298 = vunpack.c.l.b16 %v688
      %v1299 = vunpack.c.l.b16 %v689
      %v1300 = vunpack.c.l.b16 %v690
      %v1301 = vunpack.c.l.b16 %v691
      %v1302 = vunpack.c.l.b16 %v692
      %v1303 = vunpack.c.l.b16 %v693
      %v1304 = vunpack.c.l.b16 %v694
      %v1305 = vunpack.c.l.b16 %v695
      %v1306 = vunpack.c.l.b16 %v696
      %v1307 = vunpack.c.l.b16 %v697
      %v1308 = vunpack.c.l.b16 %v698
      %v1309 = vunpack.c.l.b16 %v699
      %v1310 = vunpack.c.l.b16 %v700
      %v1311 = vunpack.c.l.b16 %v701
      %v1312 = vunpack.c.l.b16 %v702
      %v1313 = vunpack.c.l.b16 %v703
      %v1314 = vunpack.c.l.b16 %v704
      %v1315 = vunpack.c.l.b16 %v705
      %v1316 = vunpack.c.l.b16 %v706
      %v1317 = vpack.c.b16 %v1286, %v1285
      %v1318 = vpack.c.b16 %v1288, %v1287
      %v1319 = vpack.c.b16 %v1290, %v1289
      %v1320 = vpack.c.b16 %v1292, %v1291
      %v1321 = vpack.c.b16 %v1294, %v1293
      %v1322 = vpack.c.b16 %v1296, %v1295
      %v1323 = vpack.c.b16 %v1298, %v1297
      %v1324 = vpack.c.b16 %v1300, %v1299
      %v1325 = vpack.c.b16 %v1302, %v1301
      %v1326 = vpack.c.b16 %v1304, %v1303
      %v1327 = vpack.c.b16 %v1306, %v1305
      %v1328 = vpack.c.b16 %v1308, %v1307
      %v1329 = vpack.c.b16 %v1310, %v1309
      %v1330 = vpack.c.b16 %v1312, %v1311
      %v1331 = vpack.c.b16 %v1314, %v1313
      %v1332 = vpack.c.b16 %v1316, %v1315
      %v1334 = vsel %vm1160, %v674, 0
      %v1337 = vsel %vm1160, %v1317, 0
      %v1340 = vsel %vm1160, %v1318, 0
      %v1343 = vsel %vm1160, %v1319, 0
      %v1346 = vsel %vm1160, %v1320, 0
      %v1349 = vsel %vm1160, %v1321, 0
      %v1352 = vsel %vm1160, %v1322, 0
      %v1355 = vsel %vm1160, %v1323, 0
      %v1358 = vsel %vm1160, %v1324, 0
      %v1361 = vsel %vm1160, %v1325, 0
      %v1364 = vsel %vm1160, %v1326, 0
      %v1367 = vsel %vm1160, %v1327, 0
      %v1370 = vsel %vm1160, %v1328, 0
      %v1373 = vsel %vm1160, %v1329, 0
      %v1376 = vsel %vm1160, %v1330, 0
      %v1379 = vsel %vm1160, %v1331, 0
      %v1382 = vsel %vm1160, %v1332, 0
      %1384 = vmatprep.subr.bf16.mxu0 0
      %1385 = vmatpush1.bf16.xpose.msra.mxu0 %v1337
      %1386 = vmatprep.subr.bf16.mxu0 0
      %1387 = vmatpush1.bf16.xpose.msra.mxu0 %v1340
      %1388 = vmatprep.subr.bf16.mxu0 0
      %1389 = vmatpush1.bf16.xpose.msra.mxu0 %v1343
      %1390 = vmatprep.subr.bf16.mxu0 0
      %1391 = vmatpush1.bf16.xpose.msra.mxu0 %v1346
      %1392 = vmatprep.subr.bf16.mxu0 0
      %1393 = vmatpush1.bf16.xpose.msra.mxu0 %v1349
      %1394 = vmatprep.subr.bf16.mxu0 0
      %1395 = vmatpush1.bf16.xpose.msra.mxu0 %v1352
      %1396 = vmatprep.subr.bf16.mxu0 0
      %1397 = vmatpush1.bf16.xpose.msra.mxu0 %v1355
      %1398 = vmatprep.subr.bf16.mxu0 0
      %1399 = vmatpush1.bf16.xpose.msra.mxu0 %v1358
      %1400 = vmatprep.subr.bf16.mxu0 0
      %1401 = vmatpush1.bf16.xpose.msra.mxu0 %v1361
      %1402 = vmatprep.subr.bf16.mxu0 0
      %1403 = vmatpush1.bf16.xpose.msra.mxu0 %v1364
      %1404 = vmatprep.subr.bf16.mxu0 0
      %1405 = vmatpush1.bf16.xpose.msra.mxu0 %v1367
      %1406 = vmatprep.subr.bf16.mxu0 0
      %1407 = vmatpush1.bf16.xpose.msra.mxu0 %v1370
      %1408 = vmatprep.subr.bf16.mxu0 0
      %1409 = vmatpush1.bf16.xpose.msra.mxu0 %v1373
      %1410 = vmatprep.subr.bf16.mxu0 0
      %1411 = vmatpush1.bf16.xpose.msra.mxu0 %v1376
      %1412 = vmatprep.subr.bf16.mxu0 0
      %1413 = vmatpush1.bf16.xpose.msra.mxu0 %v1379
      %1414 = vmatprep.subr.bf16.mxu0 0
      %1415 = vmatpush1.bf16.xpose.msra.mxu0 %v1382
      %1416 = vmatprep.mubr.bf16.mxu0 0
      %1417 = vmatmul.mubr.bf16.gmra.mrb[0].mxu0 %v1334
      %v1418 = vpop.f32.mrb[0].mxu0
      %v1419 = vadd.f32 %v1247, %v1418
      %v1420 = vpop.f32.mrb[0].mxu0
      %v1421 = vadd.f32 %v1249, %v1420
      %v1422 = vpop.f32.mrb[0].mxu0
      %v1423 = vpop.f32.mrb[0].mxu0
      %1424 = vdwg.mxu0
      %s1425 = scalar_lea.vmem %s1, 8
      %v1426 = vld [vmem:[%s1425] sm:$0xf]
      %v1427 = vld [vmem:[#allocation2] sm:$0xe]
      %v1428 = vld [vmem:[#allocation2 + $0xc] sm:$0xe]
      %v1429 = vld [vmem:[#allocation2 + $0x18] sm:$0xe]
      %v1430 = vld [vmem:[#allocation2 + $0x24] sm:$0xe]
      %v1431 = vld [vmem:[#allocation2 + $0x30] sm:$0xe]
      %v1432 = vld [vmem:[#allocation2 + $0x3c] sm:$0xe]
      %v1433 = vld [vmem:[#allocation2 + $0x48] sm:$0xe]
      %v1434 = vld [vmem:[#allocation2 + $0x54] sm:$0xe]
      %v1435 = vld [vmem:[#allocation2 + $0x60] sm:$0xe]
      %v1436 = vld [vmem:[#allocation2 + $0x6c] sm:$0xe]
      %v1437 = vld [vmem:[#allocation2 + $0x78] sm:$0xe]
      %v1438 = vld [vmem:[#allocation2 + $0x84] sm:$0xe]
      %v1439 = vld [vmem:[#allocation2 + $0x90] sm:$0xe]
      %v1440 = vld [vmem:[#allocation2 + $0x9c] sm:$0xe]
      %v1441 = vld [vmem:[#allocation2 + $0xa8] sm:$0xe]
      %v1442 = vld [vmem:[#allocation2 + $0xb4] sm:$0xe]
      %vm1475 = vcmask 1042432
      %vm1476 = vcmask 1046532
      %vm1477 = vmor %vm1475, %vm1476
      %v1478 = vrot.slane %v1427, 5
      %v1479 = vrot.slane %v1478, 4
      %v1480 = vrot.slane %v676, 5
      %v1481 = vsel %vm1477, %v1479, %v1480
      %v1482 = vrot.slane %v1480, 4
      %v1483 = vrot.slane %v709, 5
      %v1484 = vsel %vm1477, %v1482, %v1483
      %v1485 = vrot.slane %v1428, 5
      %v1486 = vrot.slane %v1485, 4
      %v1487 = vrot.slane %v678, 5
      %v1488 = vsel %vm1477, %v1486, %v1487
      %v1489 = vrot.slane %v1487, 4
      %v1490 = vrot.slane %v710, 5
      %v1491 = vsel %vm1477, %v1489, %v1490
      %v1492 = vrot.slane %v1429, 5
      %v1493 = vrot.slane %v1492, 4
      %v1494 = vrot.slane %v680, 5
      %v1495 = vsel %vm1477, %v1493, %v1494
      %v1496 = vrot.slane %v1494, 4
      %v1497 = vrot.slane %v711, 5
      %v1498 = vsel %vm1477, %v1496, %v1497
      %v1499 = vrot.slane %v1430, 5
      %v1500 = vrot.slane %v1499, 4
      %v1501 = vrot.slane %v682, 5
      %v1502 = vsel %vm1477, %v1500, %v1501
      %v1503 = vrot.slane %v1501, 4
      %v1504 = vrot.slane %v712, 5
      %v1505 = vsel %vm1477, %v1503, %v1504
      %v1506 = vrot.slane %v1431, 5
      %v1507 = vrot.slane %v1506, 4
      %v1508 = vrot.slane %v684, 5
      %v1509 = vsel %vm1477, %v1507, %v1508
      %v1510 = vrot.slane %v1508, 4
      %v1511 = vrot.slane %v713, 5
      %v1512 = vsel %vm1477, %v1510, %v1511
      %v1513 = vrot.slane %v1432, 5
      %v1514 = vrot.slane %v1513, 4
      %v1515 = vrot.slane %v686, 5
      %v1516 = vsel %vm1477, %v1514, %v1515
      %v1517 = vrot.slane %v1515, 4
      %v1518 = vrot.slane %v714, 5
      %v1519 = vsel %vm1477, %v1517, %v1518
      %v1520 = vrot.slane %v1433, 5
      %v1521 = vrot.slane %v1520, 4
      %v1522 = vrot.slane %v688, 5
      %v1523 = vsel %vm1477, %v1521, %v1522
      %v1524 = vrot.slane %v1522, 4
      %v1525 = vrot.slane %v715, 5
      %v1526 = vsel %vm1477, %v1524, %v1525
      %v1527 = vrot.slane %v1434, 5
      %v1528 = vrot.slane %v1527, 4
      %v1529 = vrot.slane %v690, 5
      %v1530 = vsel %vm1477, %v1528, %v1529
      %v1531 = vrot.slane %v1529, 4
      %v1532 = vrot.slane %v716, 5
      %v1533 = vsel %vm1477, %v1531, %v1532
      %v1534 = vrot.slane %v1435, 5
      %v1535 = vrot.slane %v1534, 4
      %v1536 = vrot.slane %v692, 5
      %v1537 = vsel %vm1477, %v1535, %v1536
      %v1538 = vrot.slane %v1536, 4
      %v1539 = vrot.slane %v717, 5
      %v1540 = vsel %vm1477, %v1538, %v1539
      %v1541 = vrot.slane %v1436, 5
      %v1542 = vrot.slane %v1541, 4
      %v1543 = vrot.slane %v694, 5
      %v1544 = vsel %vm1477, %v1542, %v1543
      %v1545 = vrot.slane %v1543, 4
      %v1546 = vrot.slane %v718, 5
      %v1547 = vsel %vm1477, %v1545, %v1546
      %v1548 = vrot.slane %v1437, 5
      %v1549 = vrot.slane %v1548, 4
      %v1550 = vrot.slane %v696, 5
      %v1551 = vsel %vm1477, %v1549, %v1550
      %v1552 = vrot.slane %v1550, 4
      %v1553 = vrot.slane %v719, 5
      %v1554 = vsel %vm1477, %v1552, %v1553
      %v1555 = vrot.slane %v1438, 5
      %v1556 = vrot.slane %v1555, 4
      %v1557 = vrot.slane %v698, 5
      %v1558 = vsel %vm1477, %v1556, %v1557
      %v1559 = vrot.slane %v1557, 4
      %v1560 = vrot.slane %v720, 5
      %v1561 = vsel %vm1477, %v1559, %v1560
      %v1562 = vrot.slane %v1439, 5
      %v1563 = vrot.slane %v1562, 4
      %v1564 = vrot.slane %v700, 5
      %v1565 = vsel %vm1477, %v1563, %v1564
      %v1566 = vrot.slane %v1564, 4
      %v1567 = vrot.slane %v721, 5
      %v1568 = vsel %vm1477, %v1566, %v1567
      %v1569 = vrot.slane %v1440, 5
      %v1570 = vrot.slane %v1569, 4
      %v1571 = vrot.slane %v702, 5
      %v1572 = vsel %vm1477, %v1570, %v1571
      %v1573 = vrot.slane %v1571, 4
      %v1574 = vrot.slane %v722, 5
      %v1575 = vsel %vm1477, %v1573, %v1574
      %v1576 = vrot.slane %v1441, 5
      %v1577 = vrot.slane %v1576, 4
      %v1578 = vrot.slane %v704, 5
      %v1579 = vsel %vm1477, %v1577, %v1578
      %v1580 = vrot.slane %v1578, 4
      %v1581 = vrot.slane %v723, 5
      %v1582 = vsel %vm1477, %v1580, %v1581
      %v1583 = vrot.slane %v1442, 5
      %v1584 = vrot.slane %v1583, 4
      %v1585 = vrot.slane %v706, 5
      %v1586 = vsel %vm1477, %v1584, %v1585
      %v1587 = vrot.slane %v1585, 4
      %v1588 = vrot.slane %v724, 5
      %v1589 = vsel %vm1477, %v1587, %v1588
      %v1590 = vunpack.c.l.b16 %v1481
      %v1591 = vunpack.c.l.b16 %v1484
      %v1592 = vunpack.c.l.b16 %v1488
      %v1593 = vunpack.c.l.b16 %v1491
      %v1594 = vunpack.c.l.b16 %v1495
      %v1595 = vunpack.c.l.b16 %v1498
      %v1596 = vunpack.c.l.b16 %v1502
      %v1597 = vunpack.c.l.b16 %v1505
      %v1598 = vunpack.c.l.b16 %v1509
      %v1599 = vunpack.c.l.b16 %v1512
      %v1600 = vunpack.c.l.b16 %v1516
      %v1601 = vunpack.c.l.b16 %v1519
      %v1602 = vunpack.c.l.b16 %v1523
      %v1603 = vunpack.c.l.b16 %v1526
      %v1604 = vunpack.c.l.b16 %v1530
      %v1605 = vunpack.c.l.b16 %v1533
      %v1606 = vunpack.c.l.b16 %v1537
      %v1607 = vunpack.c.l.b16 %v1540
      %v1608 = vunpack.c.l.b16 %v1544
      %v1609 = vunpack.c.l.b16 %v1547
      %v1610 = vunpack.c.l.b16 %v1551
      %v1611 = vunpack.c.l.b16 %v1554
      %v1612 = vunpack.c.l.b16 %v1558
      %v1613 = vunpack.c.l.b16 %v1561
      %v1614 = vunpack.c.l.b16 %v1565
      %v1615 = vunpack.c.l.b16 %v1568
      %v1616 = vunpack.c.l.b16 %v1572
      %v1617 = vunpack.c.l.b16 %v1575
      %v1618 = vunpack.c.l.b16 %v1579
      %v1619 = vunpack.c.l.b16 %v1582
      %v1620 = vunpack.c.l.b16 %v1586
      %v1621 = vunpack.c.l.b16 %v1589
      %v1622 = vpack.c.b16 %v1591, %v1590
      %v1623 = vpack.c.b16 %v1593, %v1592
      %v1624 = vpack.c.b16 %v1595, %v1594
      %v1625 = vpack.c.b16 %v1597, %v1596
      %v1626 = vpack.c.b16 %v1599, %v1598
      %v1627 = vpack.c.b16 %v1601, %v1600
      %v1628 = vpack.c.b16 %v1603, %v1602
      %v1629 = vpack.c.b16 %v1605, %v1604
      %v1630 = vpack.c.b16 %v1607, %v1606
      %v1631 = vpack.c.b16 %v1609, %v1608
      %v1632 = vpack.c.b16 %v1611, %v1610
      %v1633 = vpack.c.b16 %v1613, %v1612
      %v1634 = vpack.c.b16 %v1615, %v1614
      %v1635 = vpack.c.b16 %v1617, %v1616
      %v1636 = vpack.c.b16 %v1619, %v1618
      %v1637 = vpack.c.b16 %v1621, %v1620
      %v1639 = vsel %vm1160, %v1426, 0
      %v1642 = vsel %vm1160, %v1622, 0
      %v1645 = vsel %vm1160, %v1623, 0
      %v1648 = vsel %vm1160, %v1624, 0
      %v1651 = vsel %vm1160, %v1625, 0
      %v1654 = vsel %vm1160, %v1626, 0
      %v1657 = vsel %vm1160, %v1627, 0
      %v1660 = vsel %vm1160, %v1628, 0
      %v1663 = vsel %vm1160, %v1629, 0
      %v1666 = vsel %vm1160, %v1630, 0
      %v1669 = vsel %vm1160, %v1631, 0
      %v1672 = vsel %vm1160, %v1632, 0
      %v1675 = vsel %vm1160, %v1633, 0
      %v1678 = vsel %vm1160, %v1634, 0
      %v1681 = vsel %vm1160, %v1635, 0
      %v1684 = vsel %vm1160, %v1636, 0
      %v1687 = vsel %vm1160, %v1637, 0
      %1689 = vmatprep.subr.bf16.mxu0 0
      %1690 = vmatpush1.bf16.xpose.msra.mxu0 %v1642
      %1691 = vmatprep.subr.bf16.mxu0 0
      %1692 = vmatpush1.bf16.xpose.msra.mxu0 %v1645
      %1693 = vmatprep.subr.bf16.mxu0 0
      %1694 = vmatpush1.bf16.xpose.msra.mxu0 %v1648
      %1695 = vmatprep.subr.bf16.mxu0 0
      %1696 = vmatpush1.bf16.xpose.msra.mxu0 %v1651
      %1697 = vmatprep.subr.bf16.mxu0 0
      %1698 = vmatpush1.bf16.xpose.msra.mxu0 %v1654
      %1699 = vmatprep.subr.bf16.mxu0 0
      %1700 = vmatpush1.bf16.xpose.msra.mxu0 %v1657
      %1701 = vmatprep.subr.bf16.mxu0 0
      %1702 = vmatpush1.bf16.xpose.msra.mxu0 %v1660
      %1703 = vmatprep.subr.bf16.mxu0 0
      %1704 = vmatpush1.bf16.xpose.msra.mxu0 %v1663
      %1705 = vmatprep.subr.bf16.mxu0 0
      %1706 = vmatpush1.bf16.xpose.msra.mxu0 %v1666
      %1707 = vmatprep.subr.bf16.mxu0 0
      %1708 = vmatpush1.bf16.xpose.msra.mxu0 %v1669
      %1709 = vmatprep.subr.bf16.mxu0 0
      %1710 = vmatpush1.bf16.xpose.msra.mxu0 %v1672
      %1711 = vmatprep.subr.bf16.mxu0 0
      %1712 = vmatpush1.bf16.xpose.msra.mxu0 %v1675
      %1713 = vmatprep.subr.bf16.mxu0 0
      %1714 = vmatpush1.bf16.xpose.msra.mxu0 %v1678
      %1715 = vmatprep.subr.bf16.mxu0 0
      %1716 = vmatpush1.bf16.xpose.msra.mxu0 %v1681
      %1717 = vmatprep.subr.bf16.mxu0 0
      %1718 = vmatpush1.bf16.xpose.msra.mxu0 %v1684
      %1719 = vmatprep.subr.bf16.mxu0 0
      %1720 = vmatpush1.bf16.xpose.msra.mxu0 %v1687
      %1721 = vmatprep.mubr.bf16.mxu0 0
      %1722 = vmatmul.mubr.bf16.gmra.mrb[0].mxu0 %v1639
      %v1723 = vpop.f32.mrb[0].mxu0
      %v1724 = vadd.f32 0.0, %v1723
      %v1725 = vpop.f32.mrb[0].mxu0
      %v1726 = vadd.f32 0.0, %v1725
      %v1727 = vpop.f32.mrb[0].mxu0
      %v1728 = vpop.f32.mrb[0].mxu0
      %1729 = vdwg.mxu0
      %v1730 = vadd.f32 %v1419, %v1724
      %v1731 = vadd.f32 %v1421, %v1726
      %s1732 = scalar_lea.vmem %s1, 12
      %v1733 = vld [vmem:[%s1732] sm:$0xf]
      %v1734 = vld [vmem:[%s556] sm:$0xf]
      %v1735 = vld [vmem:[%s556 + $0x4] sm:$0xf]
      %v1736 = vld [vmem:[%s556 + $0xc] sm:$0xf]
      %v1737 = vld [vmem:[%s556 + $0x10] sm:$0xf]
      %v1738 = vld [vmem:[%s556 + $0x18] sm:$0xf]
      %v1739 = vld [vmem:[%s556 + $0x1c] sm:$0xf]
      %v1740 = vld [vmem:[%s556 + $0x24] sm:$0xf]
      %v1741 = vld [vmem:[%s556 + $0x28] sm:$0xf]
      %v1742 = vld [vmem:[%s556 + $0x30] sm:$0xf]
      %v1743 = vld [vmem:[%s556 + $0x34] sm:$0xf]
      %v1744 = vld [vmem:[%s556 + $0x3c] sm:$0xf]
      %v1745 = vld [vmem:[%s556 + $0x40] sm:$0xf]
      %v1746 = vld [vmem:[%s556 + $0x48] sm:$0xf]
      %v1747 = vld [vmem:[%s556 + $0x4c] sm:$0xf]
      %v1748 = vld [vmem:[%s556 + $0x54] sm:$0xf]
      %v1749 = vld [vmem:[%s556 + $0x58] sm:$0xf]
      %v1750 = vld [vmem:[%s556 + $0x60] sm:$0xf]
      %v1751 = vld [vmem:[%s556 + $0x64] sm:$0xf]
      %v1752 = vld [vmem:[%s556 + $0x6c] sm:$0xf]
      %v1753 = vld [vmem:[%s556 + $0x70] sm:$0xf]
      %v1754 = vld [vmem:[%s556 + $0x78] sm:$0xf]
      %v1755 = vld [vmem:[%s556 + $0x7c] sm:$0xf]
      %v1756 = vld [vmem:[%s556 + $0x84] sm:$0xf]
      %v1757 = vld [vmem:[%s556 + $0x88] sm:$0xf]
      %v1758 = vld [vmem:[%s556 + $0x90] sm:$0xf]
      %v1759 = vld [vmem:[%s556 + $0x94] sm:$0xf]
      %v1760 = vld [vmem:[%s556 + $0x9c] sm:$0xf]
      %v1761 = vld [vmem:[%s556 + $0xa0] sm:$0xf]
      %v1762 = vld [vmem:[%s556 + $0xa8] sm:$0xf]
      %v1763 = vld [vmem:[%s556 + $0xac] sm:$0xf]
      %v1764 = vld [vmem:[%s556 + $0xb4] sm:$0xf]
      %v1765 = vld [vmem:[%s556 + $0xb8] sm:$0xf]
      %v1798 = vunpack.c.l.b16 %v1734
      %v1799 = vunpack.c.l.b16 %v1735
      %v1800 = vunpack.c.l.b16 %v1736
      %v1801 = vunpack.c.l.b16 %v1737
      %v1802 = vunpack.c.l.b16 %v1738
      %v1803 = vunpack.c.l.b16 %v1739
      %v1804 = vunpack.c.l.b16 %v1740
      %v1805 = vunpack.c.l.b16 %v1741
      %v1806 = vunpack.c.l.b16 %v1742
      %v1807 = vunpack.c.l.b16 %v1743
      %v1808 = vunpack.c.l.b16 %v1744
      %v1809 = vunpack.c.l.b16 %v1745
      %v1810 = vunpack.c.l.b16 %v1746
      %v1811 = vunpack.c.l.b16 %v1747
      %v1812 = vunpack.c.l.b16 %v1748
      %v1813 = vunpack.c.l.b16 %v1749
      %v1814 = vunpack.c.l.b16 %v1750
      %v1815 = vunpack.c.l.b16 %v1751
      %v1816 = vunpack.c.l.b16 %v1752
      %v1817 = vunpack.c.l.b16 %v1753
      %v1818 = vunpack.c.l.b16 %v1754
      %v1819 = vunpack.c.l.b16 %v1755
      %v1820 = vunpack.c.l.b16 %v1756
      %v1821 = vunpack.c.l.b16 %v1757
      %v1822 = vunpack.c.l.b16 %v1758
      %v1823 = vunpack.c.l.b16 %v1759
      %v1824 = vunpack.c.l.b16 %v1760
      %v1825 = vunpack.c.l.b16 %v1761
      %v1826 = vunpack.c.l.b16 %v1762
      %v1827 = vunpack.c.l.b16 %v1763
      %v1828 = vunpack.c.l.b16 %v1764
      %v1829 = vunpack.c.l.b16 %v1765
      %v1830 = vpack.c.b16 %v1799, %v1798
      %v1831 = vpack.c.b16 %v1801, %v1800
      %v1832 = vpack.c.b16 %v1803, %v1802
      %v1833 = vpack.c.b16 %v1805, %v1804
      %v1834 = vpack.c.b16 %v1807, %v1806
      %v1835 = vpack.c.b16 %v1809, %v1808
      %v1836 = vpack.c.b16 %v1811, %v1810
      %v1837 = vpack.c.b16 %v1813, %v1812
      %v1838 = vpack.c.b16 %v1815, %v1814
      %v1839 = vpack.c.b16 %v1817, %v1816
      %v1840 = vpack.c.b16 %v1819, %v1818
      %v1841 = vpack.c.b16 %v1821, %v1820
      %v1842 = vpack.c.b16 %v1823, %v1822
      %v1843 = vpack.c.b16 %v1825, %v1824
      %v1844 = vpack.c.b16 %v1827, %v1826
      %v1845 = vpack.c.b16 %v1829, %v1828
      %v1847 = vsel %vm1160, %v1733, 0
      %v1850 = vsel %vm1160, %v1830, 0
      %v1853 = vsel %vm1160, %v1831, 0
      %v1856 = vsel %vm1160, %v1832, 0
      %v1859 = vsel %vm1160, %v1833, 0
      %v1862 = vsel %vm1160, %v1834, 0
      %v1865 = vsel %vm1160, %v1835, 0
      %v1868 = vsel %vm1160, %v1836, 0
      %v1871 = vsel %vm1160, %v1837, 0
      %v1874 = vsel %vm1160, %v1838, 0
      %v1877 = vsel %vm1160, %v1839, 0
      %v1880 = vsel %vm1160, %v1840, 0
      %v1883 = vsel %vm1160, %v1841, 0
      %v1886 = vsel %vm1160, %v1842, 0
      %v1889 = vsel %vm1160, %v1843, 0
      %v1892 = vsel %vm1160, %v1844, 0
      %v1895 = vsel %vm1160, %v1845, 0
      %1897 = vmatprep.subr.bf16.mxu0 0
      %1898 = vmatpush1.bf16.xpose.msra.mxu0 %v1850
      %1899 = vmatprep.subr.bf16.mxu0 0
      %1900 = vmatpush1.bf16.xpose.msra.mxu0 %v1853
      %1901 = vmatprep.subr.bf16.mxu0 0
      %1902 = vmatpush1.bf16.xpose.msra.mxu0 %v1856
      %1903 = vmatprep.subr.bf16.mxu0 0
      %1904 = vmatpush1.bf16.xpose.msra.mxu0 %v1859
      %1905 = vmatprep.subr.bf16.mxu0 0
      %1906 = vmatpush1.bf16.xpose.msra.mxu0 %v1862
      %1907 = vmatprep.subr.bf16.mxu0 0
      %1908 = vmatpush1.bf16.xpose.msra.mxu0 %v1865
      %1909 = vmatprep.subr.bf16.mxu0 0
      %1910 = vmatpush1.bf16.xpose.msra.mxu0 %v1868
      %1911 = vmatprep.subr.bf16.mxu0 0
      %1912 = vmatpush1.bf16.xpose.msra.mxu0 %v1871
      %1913 = vmatprep.subr.bf16.mxu0 0
      %1914 = vmatpush1.bf16.xpose.msra.mxu0 %v1874
      %1915 = vmatprep.subr.bf16.mxu0 0
      %1916 = vmatpush1.bf16.xpose.msra.mxu0 %v1877
      %1917 = vmatprep.subr.bf16.mxu0 0
      %1918 = vmatpush1.bf16.xpose.msra.mxu0 %v1880
      %1919 = vmatprep.subr.bf16.mxu0 0
      %1920 = vmatpush1.bf16.xpose.msra.mxu0 %v1883
      %1921 = vmatprep.subr.bf16.mxu0 0
      %1922 = vmatpush1.bf16.xpose.msra.mxu0 %v1886
      %1923 = vmatprep.subr.bf16.mxu0 0
      %1924 = vmatpush1.bf16.xpose.msra.mxu0 %v1889
      %1925 = vmatprep.subr.bf16.mxu0 0
      %1926 = vmatpush1.bf16.xpose.msra.mxu0 %v1892
      %1927 = vmatprep.subr.bf16.mxu0 0
      %1928 = vmatpush1.bf16.xpose.msra.mxu0 %v1895
      %1929 = vmatprep.mubr.bf16.mxu0 0
      %1930 = vmatmul.mubr.bf16.gmra.mrb[0].mxu0 %v1847
      %v1931 = vpop.f32.mrb[0].mxu0
      %v1932 = vadd.f32 0.0, %v1931
      %v1933 = vpop.f32.mrb[0].mxu0
      %v1934 = vadd.f32 0.0, %v1933
      %v1935 = vpop.f32.mrb[0].mxu0
      %v1936 = vpop.f32.mrb[0].mxu0
      %1937 = vdwg.mxu0
      %v1938 = vadd.f32 %v1730, %v1932
      %v1939 = vadd.f32 %v1731, %v1934
      %s1940 = scalar_lea.vmem %s1, 16
      %v1941 = vld [vmem:[%s1940] sm:$0xf]
      %v1942 = vld [vmem:[%s556] sm:$0xf]
      %v1943 = vld [vmem:[%s556 + $0x4] sm:$0xf]
      %v1944 = vld [vmem:[%s556 + $0x8] sm:$0x1]
      %v1945 = vld [vmem:[%s556 + $0xc] sm:$0xf]
      %v1946 = vld [vmem:[%s556 + $0x10] sm:$0xf]
      %v1947 = vld [vmem:[%s556 + $0x14] sm:$0x1]
      %v1948 = vld [vmem:[%s556 + $0x18] sm:$0xf]
      %v1949 = vld [vmem:[%s556 + $0x1c] sm:$0xf]
      %v1950 = vld [vmem:[%s556 + $0x20] sm:$0x1]
      %v1951 = vld [vmem:[%s556 + $0x24] sm:$0xf]
      %v1952 = vld [vmem:[%s556 + $0x28] sm:$0xf]
      %v1953 = vld [vmem:[%s556 + $0x2c] sm:$0x1]
      %v1954 = vld [vmem:[%s556 + $0x30] sm:$0xf]
      %v1955 = vld [vmem:[%s556 + $0x34] sm:$0xf]
      %v1956 = vld [vmem:[%s556 + $0x38] sm:$0x1]
      %v1957 = vld [vmem:[%s556 + $0x3c] sm:$0xf]
      %v1958 = vld [vmem:[%s556 + $0x40] sm:$0xf]
      %v1959 = vld [vmem:[%s556 + $0x44] sm:$0x1]
      %v1960 = vld [vmem:[%s556 + $0x48] sm:$0xf]
      %v1961 = vld [vmem:[%s556 + $0x4c] sm:$0xf]
      %v1962 = vld [vmem:[%s556 + $0x50] sm:$0x1]
      %v1963 = vld [vmem:[%s556 + $0x54] sm:$0xf]
      %v1964 = vld [vmem:[%s556 + $0x58] sm:$0xf]
      %v1965 = vld [vmem:[%s556 + $0x5c] sm:$0x1]
      %v1966 = vld [vmem:[%s556 + $0x60] sm:$0xf]
      %v1967 = vld [vmem:[%s556 + $0x64] sm:$0xf]
      %v1968 = vld [vmem:[%s556 + $0x68] sm:$0x1]
      %v1969 = vld [vmem:[%s556 + $0x6c] sm:$0xf]
      %v1970 = vld [vmem:[%s556 + $0x70] sm:$0xf]
      %v1971 = vld [vmem:[%s556 + $0x74] sm:$0x1]
      %v1972 = vld [vmem:[%s556 + $0x78] sm:$0xf]
      %v1973 = vld [vmem:[%s556 + $0x7c] sm:$0xf]
      %v1974 = vld [vmem:[%s556 + $0x80] sm:$0x1]
      %v1975 = vld [vmem:[%s556 + $0x84] sm:$0xf]
      %v1976 = vld [vmem:[%s556 + $0x88] sm:$0xf]
      %v1977 = vld [vmem:[%s556 + $0x8c] sm:$0x1]
      %v1978 = vld [vmem:[%s556 + $0x90] sm:$0xf]
      %v1979 = vld [vmem:[%s556 + $0x94] sm:$0xf]
      %v1980 = vld [vmem:[%s556 + $0x98] sm:$0x1]
      %v1981 = vld [vmem:[%s556 + $0x9c] sm:$0xf]
      %v1982 = vld [vmem:[%s556 + $0xa0] sm:$0xf]
      %v1983 = vld [vmem:[%s556 + $0xa4] sm:$0x1]
      %v1984 = vld [vmem:[%s556 + $0xa8] sm:$0xf]
      %v1985 = vld [vmem:[%s556 + $0xac] sm:$0xf]
      %v1986 = vld [vmem:[%s556 + $0xb0] sm:$0x1]
      %v1987 = vld [vmem:[%s556 + $0xb4] sm:$0xf]
      %v1988 = vld [vmem:[%s556 + $0xb8] sm:$0xf]
      %v1989 = vld [vmem:[%s556 + $0xbc] sm:$0x1]
      %v1991 = vshrl.u32 %v1942, 16
      %v1993 = vrot.slane %v1991, 4
      %v1994 = vshll.u32 %v1942, 16
      %v1996 = vrot.slane %v1994, 5
      %v1997 = vor.u32 %v1993, %v1996
      %v1998 = vrot.slane %v1997, 4
      %v2000 = vshll.u32 %v1943, 16
      %v2002 = vrot.slane %v2000, 5
      %v2003 = vsel %vm727, %v1998, %v2002
      %v2004 = vshrl.u32 %v1943, 16
      %v2006 = vrot.slane %v2004, 4
      %v2007 = vor.u32 %v2006, %v2002
      %v2008 = vrot.slane %v2007, 4
      %v2010 = vshll.u32 %v1944, 16
      %v2012 = vrot.slane %v2010, 5
      %v2013 = vsel %vm727, %v2008, %v2012
      %v2015 = vshrl.u32 %v1945, 16
      %v2017 = vrot.slane %v2015, 4
      %v2018 = vshll.u32 %v1945, 16
      %v2020 = vrot.slane %v2018, 5
      %v2021 = vor.u32 %v2017, %v2020
      %v2022 = vrot.slane %v2021, 4
      %v2024 = vshll.u32 %v1946, 16
      %v2026 = vrot.slane %v2024, 5
      %v2027 = vsel %vm727, %v2022, %v2026
      %v2028 = vshrl.u32 %v1946, 16
      %v2030 = vrot.slane %v2028, 4
      %v2031 = vor.u32 %v2030, %v2026
      %v2032 = vrot.slane %v2031, 4
      %v2034 = vshll.u32 %v1947, 16
      %v2036 = vrot.slane %v2034, 5
      %v2037 = vsel %vm727, %v2032, %v2036
      %v2039 = vshrl.u32 %v1948, 16
      %v2041 = vrot.slane %v2039, 4
      %v2042 = vshll.u32 %v1948, 16
      %v2044 = vrot.slane %v2042, 5
      %v2045 = vor.u32 %v2041, %v2044
      %v2046 = vrot.slane %v2045, 4
      %v2048 = vshll.u32 %v1949, 16
      %v2050 = vrot.slane %v2048, 5
      %v2051 = vsel %vm727, %v2046, %v2050
      %v2052 = vshrl.u32 %v1949, 16
      %v2054 = vrot.slane %v2052, 4
      %v2055 = vor.u32 %v2054, %v2050
      %v2056 = vrot.slane %v2055, 4
      %v2058 = vshll.u32 %v1950, 16
      %v2060 = vrot.slane %v2058, 5
      %v2061 = vsel %vm727, %v2056, %v2060
      %v2063 = vshrl.u32 %v1951, 16
      %v2065 = vrot.slane %v2063, 4
      %v2066 = vshll.u32 %v1951, 16
      %v2068 = vrot.slane %v2066, 5
      %v2069 = vor.u32 %v2065, %v2068
      %v2070 = vrot.slane %v2069, 4
      %v2072 = vshll.u32 %v1952, 16
      %v2074 = vrot.slane %v2072, 5
      %v2075 = vsel %vm727, %v2070, %v2074
      %v2076 = vshrl.u32 %v1952, 16
      %v2078 = vrot.slane %v2076, 4
      %v2079 = vor.u32 %v2078, %v2074
      %v2080 = vrot.slane %v2079, 4
      %v2082 = vshll.u32 %v1953, 16
      %v2084 = vrot.slane %v2082, 5
      %v2085 = vsel %vm727, %v2080, %v2084
      %v2087 = vshrl.u32 %v1954, 16
      %v2089 = vrot.slane %v2087, 4
      %v2090 = vshll.u32 %v1954, 16
      %v2092 = vrot.slane %v2090, 5
      %v2093 = vor.u32 %v2089, %v2092
      %v2094 = vrot.slane %v2093, 4
      %v2096 = vshll.u32 %v1955, 16
      %v2098 = vrot.slane %v2096, 5
      %v2099 = vsel %vm727, %v2094, %v2098
      %v2100 = vshrl.u32 %v1955, 16
      %v2102 = vrot.slane %v2100, 4
      %v2103 = vor.u32 %v2102, %v2098
      %v2104 = vrot.slane %v2103, 4
      %v2106 = vshll.u32 %v1956, 16
      %v2108 = vrot.slane %v2106, 5
      %v2109 = vsel %vm727, %v2104, %v2108
      %v2111 = vshrl.u32 %v1957, 16
      %v2113 = vrot.slane %v2111, 4
      %v2114 = vshll.u32 %v1957, 16
      %v2116 = vrot.slane %v2114, 5
      %v2117 = vor.u32 %v2113, %v2116
      %v2118 = vrot.slane %v2117, 4
      %v2120 = vshll.u32 %v1958, 16
      %v2122 = vrot.slane %v2120, 5
      %v2123 = vsel %vm727, %v2118, %v2122
      %v2124 = vshrl.u32 %v1958, 16
      %v2126 = vrot.slane %v2124, 4
      %v2127 = vor.u32 %v2126, %v2122
      %v2128 = vrot.slane %v2127, 4
      %v2130 = vshll.u32 %v1959, 16
      %v2132 = vrot.slane %v2130, 5
      %v2133 = vsel %vm727, %v2128, %v2132
      %v2135 = vshrl.u32 %v1960, 16
      %v2137 = vrot.slane %v2135, 4
      %v2138 = vshll.u32 %v1960, 16
      %v2140 = vrot.slane %v2138, 5
      %v2141 = vor.u32 %v2137, %v2140
      %v2142 = vrot.slane %v2141, 4
      %v2144 = vshll.u32 %v1961, 16
      %v2146 = vrot.slane %v2144, 5
      %v2147 = vsel %vm727, %v2142, %v2146
      %v2148 = vshrl.u32 %v1961, 16
      %v2150 = vrot.slane %v2148, 4
      %v2151 = vor.u32 %v2150, %v2146
      %v2152 = vrot.slane %v2151, 4
      %v2154 = vshll.u32 %v1962, 16
      %v2156 = vrot.slane %v2154, 5
      %v2157 = vsel %vm727, %v2152, %v2156
      %v2159 = vshrl.u32 %v1963, 16
      %v2161 = vrot.slane %v2159, 4
      %v2162 = vshll.u32 %v1963, 16
      %v2164 = vrot.slane %v2162, 5
      %v2165 = vor.u32 %v2161, %v2164
      %v2166 = vrot.slane %v2165, 4
      %v2168 = vshll.u32 %v1964, 16
      %v2170 = vrot.slane %v2168, 5
      %v2171 = vsel %vm727, %v2166, %v2170
      %v2172 = vshrl.u32 %v1964, 16
      %v2174 = vrot.slane %v2172, 4
      %v2175 = vor.u32 %v2174, %v2170
      %v2176 = vrot.slane %v2175, 4
      %v2178 = vshll.u32 %v1965, 16
      %v2180 = vrot.slane %v2178, 5
      %v2181 = vsel %vm727, %v2176, %v2180
      %v2183 = vshrl.u32 %v1966, 16
      %v2185 = vrot.slane %v2183, 4
      %v2186 = vshll.u32 %v1966, 16
      %v2188 = vrot.slane %v2186, 5
      %v2189 = vor.u32 %v2185, %v2188
      %v2190 = vrot.slane %v2189, 4
      %v2192 = vshll.u32 %v1967, 16
      %v2194 = vrot.slane %v2192, 5
      %v2195 = vsel %vm727, %v2190, %v2194
      %v2196 = vshrl.u32 %v1967, 16
      %v2198 = vrot.slane %v2196, 4
      %v2199 = vor.u32 %v2198, %v2194
      %v2200 = vrot.slane %v2199, 4
      %v2202 = vshll.u32 %v1968, 16
      %v2204 = vrot.slane %v2202, 5
      %v2205 = vsel %vm727, %v2200, %v2204
      %v2207 = vshrl.u32 %v1969, 16
      %v2209 = vrot.slane %v2207, 4
      %v2210 = vshll.u32 %v1969, 16
      %v2212 = vrot.slane %v2210, 5
      %v2213 = vor.u32 %v2209, %v2212
      %v2214 = vrot.slane %v2213, 4
      %v2216 = vshll.u32 %v1970, 16
      %v2218 = vrot.slane %v2216, 5
      %v2219 = vsel %vm727, %v2214, %v2218
      %v2220 = vshrl.u32 %v1970, 16
      %v2222 = vrot.slane %v2220, 4
      %v2223 = vor.u32 %v2222, %v2218
      %v2224 = vrot.slane %v2223, 4
      %v2226 = vshll.u32 %v1971, 16
      %v2228 = vrot.slane %v2226, 5
      %v2229 = vsel %vm727, %v2224, %v2228
      %v2231 = vshrl.u32 %v1972, 16
      %v2233 = vrot.slane %v2231, 4
      %v2234 = vshll.u32 %v1972, 16
      %v2236 = vrot.slane %v2234, 5
      %v2237 = vor.u32 %v2233, %v2236
      %v2238 = vrot.slane %v2237, 4
      %v2240 = vshll.u32 %v1973, 16
      %v2242 = vrot.slane %v2240, 5
      %v2243 = vsel %vm727, %v2238, %v2242
      %v2244 = vshrl.u32 %v1973, 16
      %v2246 = vrot.slane %v2244, 4
      %v2247 = vor.u32 %v2246, %v2242
      %v2248 = vrot.slane %v2247, 4
      %v2250 = vshll.u32 %v1974, 16
      %v2252 = vrot.slane %v2250, 5
      %v2253 = vsel %vm727, %v2248, %v2252
      %v2255 = vshrl.u32 %v1975, 16
      %v2257 = vrot.slane %v2255, 4
      %v2258 = vshll.u32 %v1975, 16
      %v2260 = vrot.slane %v2258, 5
      %v2261 = vor.u32 %v2257, %v2260
      %v2262 = vrot.slane %v2261, 4
      %v2264 = vshll.u32 %v1976, 16
      %v2266 = vrot.slane %v2264, 5
      %v2267 = vsel %vm727, %v2262, %v2266
      %v2268 = vshrl.u32 %v1976, 16
      %v2270 = vrot.slane %v2268, 4
      %v2271 = vor.u32 %v2270, %v2266
      %v2272 = vrot.slane %v2271, 4
      %v2274 = vshll.u32 %v1977, 16
      %v2276 = vrot.slane %v2274, 5
      %v2277 = vsel %vm727, %v2272, %v2276
      %v2279 = vshrl.u32 %v1978, 16
      %v2281 = vrot.slane %v2279, 4
      %v2282 = vshll.u32 %v1978, 16
      %v2284 = vrot.slane %v2282, 5
      %v2285 = vor.u32 %v2281, %v2284
      %v2286 = vrot.slane %v2285, 4
      %v2288 = vshll.u32 %v1979, 16
      %v2290 = vrot.slane %v2288, 5
      %v2291 = vsel %vm727, %v2286, %v2290
      %v2292 = vshrl.u32 %v1979, 16
      %v2294 = vrot.slane %v2292, 4
      %v2295 = vor.u32 %v2294, %v2290
      %v2296 = vrot.slane %v2295, 4
      %v2298 = vshll.u32 %v1980, 16
      %v2300 = vrot.slane %v2298, 5
      %v2301 = vsel %vm727, %v2296, %v2300
      %v2303 = vshrl.u32 %v1981, 16
      %v2305 = vrot.slane %v2303, 4
      %v2306 = vshll.u32 %v1981, 16
      %v2308 = vrot.slane %v2306, 5
      %v2309 = vor.u32 %v2305, %v2308
      %v2310 = vrot.slane %v2309, 4
      %v2312 = vshll.u32 %v1982, 16
      %v2314 = vrot.slane %v2312, 5
      %v2315 = vsel %vm727, %v2310, %v2314
      %v2316 = vshrl.u32 %v1982, 16
      %v2318 = vrot.slane %v2316, 4
      %v2319 = vor.u32 %v2318, %v2314
      %v2320 = vrot.slane %v2319, 4
      %v2322 = vshll.u32 %v1983, 16
      %v2324 = vrot.slane %v2322, 5
      %v2325 = vsel %vm727, %v2320, %v2324
      %v2327 = vshrl.u32 %v1984, 16
      %v2329 = vrot.slane %v2327, 4
      %v2330 = vshll.u32 %v1984, 16
      %v2332 = vrot.slane %v2330, 5
      %v2333 = vor.u32 %v2329, %v2332
      %v2334 = vrot.slane %v2333, 4
      %v2336 = vshll.u32 %v1985, 16
      %v2338 = vrot.slane %v2336, 5
      %v2339 = vsel %vm727, %v2334, %v2338
      %v2340 = vshrl.u32 %v1985, 16
      %v2342 = vrot.slane %v2340, 4
      %v2343 = vor.u32 %v2342, %v2338
      %v2344 = vrot.slane %v2343, 4
      %v2346 = vshll.u32 %v1986, 16
      %v2348 = vrot.slane %v2346, 5
      %v2349 = vsel %vm727, %v2344, %v2348
      %v2351 = vshrl.u32 %v1987, 16
      %v2353 = vrot.slane %v2351, 4
      %v2354 = vshll.u32 %v1987, 16
      %v2356 = vrot.slane %v2354, 5
      %v2357 = vor.u32 %v2353, %v2356
      %v2358 = vrot.slane %v2357, 4
      %v2360 = vshll.u32 %v1988, 16
      %v2362 = vrot.slane %v2360, 5
      %v2363 = vsel %vm727, %v2358, %v2362
      %v2364 = vshrl.u32 %v1988, 16
      %v2366 = vrot.slane %v2364, 4
      %v2367 = vor.u32 %v2366, %v2362
      %v2368 = vrot.slane %v2367, 4
      %v2370 = vshll.u32 %v1989, 16
      %v2372 = vrot.slane %v2370, 5
      %v2373 = vsel %vm727, %v2368, %v2372
      %v2374 = vunpack.c.l.b16 %v2003
      %v2375 = vunpack.c.l.b16 %v2013
      %v2376 = vunpack.c.l.b16 %v2027
      %v2377 = vunpack.c.l.b16 %v2037
      %v2378 = vunpack.c.l.b16 %v2051
      %v2379 = vunpack.c.l.b16 %v2061
      %v2380 = vunpack.c.l.b16 %v2075
      %v2381 = vunpack.c.l.b16 %v2085
      %v2382 = vunpack.c.l.b16 %v2099
      %v2383 = vunpack.c.l.b16 %v2109
      %v2384 = vunpack.c.l.b16 %v2123
      %v2385 = vunpack.c.l.b16 %v2133
      %v2386 = vunpack.c.l.b16 %v2147
      %v2387 = vunpack.c.l.b16 %v2157
      %v2388 = vunpack.c.l.b16 %v2171
      %v2389 = vunpack.c.l.b16 %v2181
      %v2390 = vunpack.c.l.b16 %v2195
      %v2391 = vunpack.c.l.b16 %v2205
      %v2392 = vunpack.c.l.b16 %v2219
      %v2393 = vunpack.c.l.b16 %v2229
      %v2394 = vunpack.c.l.b16 %v2243
      %v2395 = vunpack.c.l.b16 %v2253
      %v2396 = vunpack.c.l.b16 %v2267
      %v2397 = vunpack.c.l.b16 %v2277
      %v2398 = vunpack.c.l.b16 %v2291
      %v2399 = vunpack.c.l.b16 %v2301
      %v2400 = vunpack.c.l.b16 %v2315
      %v2401 = vunpack.c.l.b16 %v2325
      %v2402 = vunpack.c.l.b16 %v2339
      %v2403 = vunpack.c.l.b16 %v2349
      %v2404 = vunpack.c.l.b16 %v2363
      %v2405 = vunpack.c.l.b16 %v2373
      %v2406 = vpack.c.b16 %v2375, %v2374
      %v2407 = vpack.c.b16 %v2377, %v2376
      %v2408 = vpack.c.b16 %v2379, %v2378
      %v2409 = vpack.c.b16 %v2381, %v2380
      %v2410 = vpack.c.b16 %v2383, %v2382
      %v2411 = vpack.c.b16 %v2385, %v2384
      %v2412 = vpack.c.b16 %v2387, %v2386
      %v2413 = vpack.c.b16 %v2389, %v2388
      %v2414 = vpack.c.b16 %v2391, %v2390
      %v2415 = vpack.c.b16 %v2393, %v2392
      %v2416 = vpack.c.b16 %v2395, %v2394
      %v2417 = vpack.c.b16 %v2397, %v2396
      %v2418 = vpack.c.b16 %v2399, %v2398
      %v2419 = vpack.c.b16 %v2401, %v2400
      %v2420 = vpack.c.b16 %v2403, %v2402
      %v2421 = vpack.c.b16 %v2405, %v2404
      %v2423 = vsel %vm1160, %v1941, 0
      %v2426 = vsel %vm1160, %v2406, 0
      %v2429 = vsel %vm1160, %v2407, 0
      %v2432 = vsel %vm1160, %v2408, 0
      %v2435 = vsel %vm1160, %v2409, 0
      %v2438 = vsel %vm1160, %v2410, 0
      %v2441 = vsel %vm1160, %v2411, 0
      %v2444 = vsel %vm1160, %v2412, 0
      %v2447 = vsel %vm1160, %v2413, 0
      %v2450 = vsel %vm1160, %v2414, 0
      %v2453 = vsel %vm1160, %v2415, 0
      %v2456 = vsel %vm1160, %v2416, 0
      %v2459 = vsel %vm1160, %v2417, 0
      %v2462 = vsel %vm1160, %v2418, 0
      %v2465 = vsel %vm1160, %v2419, 0
      %v2468 = vsel %vm1160, %v2420, 0
      %v2471 = vsel %vm1160, %v2421, 0
      %2473 = vmatprep.subr.bf16.mxu0 0
      %2474 = vmatpush1.bf16.xpose.msra.mxu0 %v2426
      %2475 = vmatprep.subr.bf16.mxu0 0
      %2476 = vmatpush1.bf16.xpose.msra.mxu0 %v2429
      %2477 = vmatprep.subr.bf16.mxu0 0
      %2478 = vmatpush1.bf16.xpose.msra.mxu0 %v2432
      %2479 = vmatprep.subr.bf16.mxu0 0
      %2480 = vmatpush1.bf16.xpose.msra.mxu0 %v2435
      %2481 = vmatprep.subr.bf16.mxu0 0
      %2482 = vmatpush1.bf16.xpose.msra.mxu0 %v2438
      %2483 = vmatprep.subr.bf16.mxu0 0
      %2484 = vmatpush1.bf16.xpose.msra.mxu0 %v2441
      %2485 = vmatprep.subr.bf16.mxu0 0
      %2486 = vmatpush1.bf16.xpose.msra.mxu0 %v2444
      %2487 = vmatprep.subr.bf16.mxu0 0
      %2488 = vmatpush1.bf16.xpose.msra.mxu0 %v2447
      %2489 = vmatprep.subr.bf16.mxu0 0
      %2490 = vmatpush1.bf16.xpose.msra.mxu0 %v2450
      %2491 = vmatprep.subr.bf16.mxu0 0
      %2492 = vmatpush1.bf16.xpose.msra.mxu0 %v2453
      %2493 = vmatprep.subr.bf16.mxu0 0
      %2494 = vmatpush1.bf16.xpose.msra.mxu0 %v2456
      %2495 = vmatprep.subr.bf16.mxu0 0
      %2496 = vmatpush1.bf16.xpose.msra.mxu0 %v2459
      %2497 = vmatprep.subr.bf16.mxu0 0
      %2498 = vmatpush1.bf16.xpose.msra.mxu0 %v2462
      %2499 = vmatprep.subr.bf16.mxu0 0
      %2500 = vmatpush1.bf16.xpose.msra.mxu0 %v2465
      %2501 = vmatprep.subr.bf16.mxu0 0
      %2502 = vmatpush1.bf16.xpose.msra.mxu0 %v2468
      %2503 = vmatprep.subr.bf16.mxu0 0
      %2504 = vmatpush1.bf16.xpose.msra.mxu0 %v2471
      %2505 = vmatprep.mubr.bf16.mxu0 0
      %2506 = vmatmul.mubr.bf16.gmra.mrb[0].mxu0 %v2423
      %v2507 = vpop.f32.mrb[0].mxu0
      %v2508 = vadd.f32 0.0, %v2507
      %v2509 = vpop.f32.mrb[0].mxu0
      %v2510 = vadd.f32 0.0, %v2509
      %v2511 = vpop.f32.mrb[0].mxu0
      %v2512 = vpop.f32.mrb[0].mxu0
      %2513 = vdwg.mxu0
      %v2514 = vadd.f32 %v1938, %v2508
      %v2515 = vadd.f32 %v1939, %v2510
      %s2516 = scalar_lea.vmem %s1, 20
      %v2517 = vld [vmem:[%s2516] sm:$0xf]
      %v2518 = vld [vmem:[%s556] sm:$0xe]
      %v2519 = vld [vmem:[%s556 + $0xc] sm:$0xe]
      %v2520 = vld [vmem:[%s556 + $0x18] sm:$0xe]
      %v2521 = vld [vmem:[%s556 + $0x24] sm:$0xe]
      %v2522 = vld [vmem:[%s556 + $0x30] sm:$0xe]
      %v2523 = vld [vmem:[%s556 + $0x3c] sm:$0xe]
      %v2524 = vld [vmem:[%s556 + $0x48] sm:$0xe]
      %v2525 = vld [vmem:[%s556 + $0x54] sm:$0xe]
      %v2526 = vld [vmem:[%s556 + $0x60] sm:$0xe]
      %v2527 = vld [vmem:[%s556 + $0x6c] sm:$0xe]
      %v2528 = vld [vmem:[%s556 + $0x78] sm:$0xe]
      %v2529 = vld [vmem:[%s556 + $0x84] sm:$0xe]
      %v2530 = vld [vmem:[%s556 + $0x90] sm:$0xe]
      %v2531 = vld [vmem:[%s556 + $0x9c] sm:$0xe]
      %v2532 = vld [vmem:[%s556 + $0xa8] sm:$0xe]
      %v2533 = vld [vmem:[%s556 + $0xb4] sm:$0xe]
      %v2582 = vrot.slane %v2518, 5
      %v2583 = vrot.slane %v2582, 4
      %v2584 = vrot.slane %v1943, 5
      %v2585 = vsel %vm1477, %v2583, %v2584
      %v2586 = vrot.slane %v2584, 4
      %v2587 = vrot.slane %v1944, 5
      %v2588 = vsel %vm1477, %v2586, %v2587
      %v2589 = vrot.slane %v2519, 5
      %v2590 = vrot.slane %v2589, 4
      %v2591 = vrot.slane %v1946, 5
      %v2592 = vsel %vm1477, %v2590, %v2591
      %v2593 = vrot.slane %v2591, 4
      %v2594 = vrot.slane %v1947, 5
      %v2595 = vsel %vm1477, %v2593, %v2594
      %v2596 = vrot.slane %v2520, 5
      %v2597 = vrot.slane %v2596, 4
      %v2598 = vrot.slane %v1949, 5
      %v2599 = vsel %vm1477, %v2597, %v2598
      %v2600 = vrot.slane %v2598, 4
      %v2601 = vrot.slane %v1950, 5
      %v2602 = vsel %vm1477, %v2600, %v2601
      %v2603 = vrot.slane %v2521, 5
      %v2604 = vrot.slane %v2603, 4
      %v2605 = vrot.slane %v1952, 5
      %v2606 = vsel %vm1477, %v2604, %v2605
      %v2607 = vrot.slane %v2605, 4
      %v2608 = vrot.slane %v1953, 5
      %v2609 = vsel %vm1477, %v2607, %v2608
      %v2610 = vrot.slane %v2522, 5
      %v2611 = vrot.slane %v2610, 4
      %v2612 = vrot.slane %v1955, 5
      %v2613 = vsel %vm1477, %v2611, %v2612
      %v2614 = vrot.slane %v2612, 4
      %v2615 = vrot.slane %v1956, 5
      %v2616 = vsel %vm1477, %v2614, %v2615
      %v2617 = vrot.slane %v2523, 5
      %v2618 = vrot.slane %v2617, 4
      %v2619 = vrot.slane %v1958, 5
      %v2620 = vsel %vm1477, %v2618, %v2619
      %v2621 = vrot.slane %v2619, 4
      %v2622 = vrot.slane %v1959, 5
      %v2623 = vsel %vm1477, %v2621, %v2622
      %v2624 = vrot.slane %v2524, 5
      %v2625 = vrot.slane %v2624, 4
      %v2626 = vrot.slane %v1961, 5
      %v2627 = vsel %vm1477, %v2625, %v2626
      %v2628 = vrot.slane %v2626, 4
      %v2629 = vrot.slane %v1962, 5
      %v2630 = vsel %vm1477, %v2628, %v2629
      %v2631 = vrot.slane %v2525, 5
      %v2632 = vrot.slane %v2631, 4
      %v2633 = vrot.slane %v1964, 5
      %v2634 = vsel %vm1477, %v2632, %v2633
      %v2635 = vrot.slane %v2633, 4
      %v2636 = vrot.slane %v1965, 5
      %v2637 = vsel %vm1477, %v2635, %v2636
      %v2638 = vrot.slane %v2526, 5
      %v2639 = vrot.slane %v2638, 4
      %v2640 = vrot.slane %v1967, 5
      %v2641 = vsel %vm1477, %v2639, %v2640
      %v2642 = vrot.slane %v2640, 4
      %v2643 = vrot.slane %v1968, 5
      %v2644 = vsel %vm1477, %v2642, %v2643
      %v2645 = vrot.slane %v2527, 5
      %v2646 = vrot.slane %v2645, 4
      %v2647 = vrot.slane %v1970, 5
      %v2648 = vsel %vm1477, %v2646, %v2647
      %v2649 = vrot.slane %v2647, 4
      %v2650 = vrot.slane %v1971, 5
      %v2651 = vsel %vm1477, %v2649, %v2650
      %v2652 = vrot.slane %v2528, 5
      %v2653 = vrot.slane %v2652, 4
      %v2654 = vrot.slane %v1973, 5
      %v2655 = vsel %vm1477, %v2653, %v2654
      %v2656 = vrot.slane %v2654, 4
      %v2657 = vrot.slane %v1974, 5
      %v2658 = vsel %vm1477, %v2656, %v2657
      %v2659 = vrot.slane %v2529, 5
      %v2660 = vrot.slane %v2659, 4
      %v2661 = vrot.slane %v1976, 5
      %v2662 = vsel %vm1477, %v2660, %v2661
      %v2663 = vrot.slane %v2661, 4
      %v2664 = vrot.slane %v1977, 5
      %v2665 = vsel %vm1477, %v2663, %v2664
      %v2666 = vrot.slane %v2530, 5
      %v2667 = vrot.slane %v2666, 4
      %v2668 = vrot.slane %v1979, 5
      %v2669 = vsel %vm1477, %v2667, %v2668
      %v2670 = vrot.slane %v2668, 4
      %v2671 = vrot.slane %v1980, 5
      %v2672 = vsel %vm1477, %v2670, %v2671
      %v2673 = vrot.slane %v2531, 5
      %v2674 = vrot.slane %v2673, 4
      %v2675 = vrot.slane %v1982, 5
      %v2676 = vsel %vm1477, %v2674, %v2675
      %v2677 = vrot.slane %v2675, 4
      %v2678 = vrot.slane %v1983, 5
      %v2679 = vsel %vm1477, %v2677, %v2678
      %v2680 = vrot.slane %v2532, 5
      %v2681 = vrot.slane %v2680, 4
      %v2682 = vrot.slane %v1985, 5
      %v2683 = vsel %vm1477, %v2681, %v2682
      %v2684 = vrot.slane %v2682, 4
      %v2685 = vrot.slane %v1986, 5
      %v2686 = vsel %vm1477, %v2684, %v2685
      %v2687 = vrot.slane %v2533, 5
      %v2688 = vrot.slane %v2687, 4
      %v2689 = vrot.slane %v1988, 5
      %v2690 = vsel %vm1477, %v2688, %v2689
      %v2691 = vrot.slane %v2689, 4
      %v2692 = vrot.slane %v1989, 5
      %v2693 = vsel %vm1477, %v2691, %v2692
      %v2694 = vunpack.c.l.b16 %v2585
      %v2695 = vunpack.c.l.b16 %v2588
      %v2696 = vunpack.c.l.b16 %v2592
      %v2697 = vunpack.c.l.b16 %v2595
      %v2698 = vunpack.c.l.b16 %v2599
      %v2699 = vunpack.c.l.b16 %v2602
      %v2700 = vunpack.c.l.b16 %v2606
      %v2701 = vunpack.c.l.b16 %v2609
      %v2702 = vunpack.c.l.b16 %v2613
      %v2703 = vunpack.c.l.b16 %v2616
      %v2704 = vunpack.c.l.b16 %v2620
      %v2705 = vunpack.c.l.b16 %v2623
      %v2706 = vunpack.c.l.b16 %v2627
      %v2707 = vunpack.c.l.b16 %v2630
      %v2708 = vunpack.c.l.b16 %v2634
      %v2709 = vunpack.c.l.b16 %v2637
      %v2710 = vunpack.c.l.b16 %v2641
      %v2711 = vunpack.c.l.b16 %v2644
      %v2712 = vunpack.c.l.b16 %v2648
      %v2713 = vunpack.c.l.b16 %v2651
      %v2714 = vunpack.c.l.b16 %v2655
      %v2715 = vunpack.c.l.b16 %v2658
      %v2716 = vunpack.c.l.b16 %v2662
      %v2717 = vunpack.c.l.b16 %v2665
      %v2718 = vunpack.c.l.b16 %v2669
      %v2719 = vunpack.c.l.b16 %v2672
      %v2720 = vunpack.c.l.b16 %v2676
      %v2721 = vunpack.c.l.b16 %v2679
      %v2722 = vunpack.c.l.b16 %v2683
      %v2723 = vunpack.c.l.b16 %v2686
      %v2724 = vunpack.c.l.b16 %v2690
      %v2725 = vunpack.c.l.b16 %v2693
      %v2726 = vpack.c.b16 %v2695, %v2694
      %v2727 = vpack.c.b16 %v2697, %v2696
      %v2728 = vpack.c.b16 %v2699, %v2698
      %v2729 = vpack.c.b16 %v2701, %v2700
      %v2730 = vpack.c.b16 %v2703, %v2702
      %v2731 = vpack.c.b16 %v2705, %v2704
      %v2732 = vpack.c.b16 %v2707, %v2706
      %v2733 = vpack.c.b16 %v2709, %v2708
      %v2734 = vpack.c.b16 %v2711, %v2710
      %v2735 = vpack.c.b16 %v2713, %v2712
      %v2736 = vpack.c.b16 %v2715, %v2714
      %v2737 = vpack.c.b16 %v2717, %v2716
      %v2738 = vpack.c.b16 %v2719, %v2718
      %v2739 = vpack.c.b16 %v2721, %v2720
      %v2740 = vpack.c.b16 %v2723, %v2722
      %v2741 = vpack.c.b16 %v2725, %v2724
      %v2743 = vsel %vm1160, %v2517, 0
      %v2746 = vsel %vm1160, %v2726, 0
      %v2749 = vsel %vm1160, %v2727, 0
      %v2752 = vsel %vm1160, %v2728, 0
      %v2755 = vsel %vm1160, %v2729, 0
      %v2758 = vsel %vm1160, %v2730, 0
      %v2761 = vsel %vm1160, %v2731, 0
      %v2764 = vsel %vm1160, %v2732, 0
      %v2767 = vsel %vm1160, %v2733, 0
      %v2770 = vsel %vm1160, %v2734, 0
      %v2773 = vsel %vm1160, %v2735, 0
      %v2776 = vsel %vm1160, %v2736, 0
      %v2779 = vsel %vm1160, %v2737, 0
      %v2782 = vsel %vm1160, %v2738, 0
      %v2785 = vsel %vm1160, %v2739, 0
      %v2788 = vsel %vm1160, %v2740, 0
      %v2791 = vsel %vm1160, %v2741, 0
      %2793 = vmatprep.subr.bf16.mxu0 0
      %2794 = vmatpush1.bf16.xpose.msra.mxu0 %v2746
      %2795 = vmatprep.subr.bf16.mxu0 0
      %2796 = vmatpush1.bf16.xpose.msra.mxu0 %v2749
      %2797 = vmatprep.subr.bf16.mxu0 0
      %2798 = vmatpush1.bf16.xpose.msra.mxu0 %v2752
      %2799 = vmatprep.subr.bf16.mxu0 0
      %2800 = vmatpush1.bf16.xpose.msra.mxu0 %v2755
      %2801 = vmatprep.subr.bf16.mxu0 0
      %2802 = vmatpush1.bf16.xpose.msra.mxu0 %v2758
      %2803 = vmatprep.subr.bf16.mxu0 0
      %2804 = vmatpush1.bf16.xpose.msra.mxu0 %v2761
      %2805 = vmatprep.subr.bf16.mxu0 0
      %2806 = vmatpush1.bf16.xpose.msra.mxu0 %v2764
      %2807 = vmatprep.subr.bf16.mxu0 0
      %2808 = vmatpush1.bf16.xpose.msra.mxu0 %v2767
      %2809 = vmatprep.subr.bf16.mxu0 0
      %2810 = vmatpush1.bf16.xpose.msra.mxu0 %v2770
      %2811 = vmatprep.subr.bf16.mxu0 0
      %2812 = vmatpush1.bf16.xpose.msra.mxu0 %v2773
      %2813 = vmatprep.subr.bf16.mxu0 0
      %2814 = vmatpush1.bf16.xpose.msra.mxu0 %v2776
      %2815 = vmatprep.subr.bf16.mxu0 0
      %2816 = vmatpush1.bf16.xpose.msra.mxu0 %v2779
      %2817 = vmatprep.subr.bf16.mxu0 0
      %2818 = vmatpush1.bf16.xpose.msra.mxu0 %v2782
      %2819 = vmatprep.subr.bf16.mxu0 0
      %2820 = vmatpush1.bf16.xpose.msra.mxu0 %v2785
      %2821 = vmatprep.subr.bf16.mxu0 0
      %2822 = vmatpush1.bf16.xpose.msra.mxu0 %v2788
      %2823 = vmatprep.subr.bf16.mxu0 0
      %2824 = vmatpush1.bf16.xpose.msra.mxu0 %v2791
      %2825 = vmatprep.mubr.bf16.mxu0 0
      %2826 = vmatmul.mubr.bf16.gmra.mrb[0].mxu0 %v2743
      %v2827 = vpop.f32.mrb[0].mxu0
      %v2828 = vadd.f32 0.0, %v2827
      %v2829 = vpop.f32.mrb[0].mxu0
      %v2830 = vadd.f32 0.0, %v2829
      %v2831 = vpop.f32.mrb[0].mxu0
      %v2832 = vpop.f32.mrb[0].mxu0
      %2833 = vdwg.mxu0
      %v2834 = vadd.f32 %v2514, %v2828
      %v2835 = vadd.f32 %v2515, %v2830
      %s2836 = scalar_lea.vmem %s1, 24
      %v2837 = vld [vmem:[%s2836] sm:$0xf]
      %s2838 = scalar_lea.vmem [#allocation2], 24
      %v2839 = vld [vmem:[%s2838] sm:$0xf]
      %v2840 = vld [vmem:[%s2838 + $0x4] sm:$0xf]
      %v2841 = vld [vmem:[%s2838 + $0xc] sm:$0xf]
      %v2842 = vld [vmem:[%s2838 + $0x10] sm:$0xf]
      %v2843 = vld [vmem:[%s2838 + $0x18] sm:$0xf]
      %v2844 = vld [vmem:[%s2838 + $0x1c] sm:$0xf]
      %v2845 = vld [vmem:[%s2838 + $0x24] sm:$0xf]
      %v2846 = vld [vmem:[%s2838 + $0x28] sm:$0xf]
      %v2847 = vld [vmem:[%s2838 + $0x30] sm:$0xf]
      %v2848 = vld [vmem:[%s2838 + $0x34] sm:$0xf]
      %v2849 = vld [vmem:[%s2838 + $0x3c] sm:$0xf]
      %v2850 = vld [vmem:[%s2838 + $0x40] sm:$0xf]
      %v2851 = vld [vmem:[%s2838 + $0x48] sm:$0xf]
      %v2852 = vld [vmem:[%s2838 + $0x4c] sm:$0xf]
      %v2853 = vld [vmem:[%s2838 + $0x54] sm:$0xf]
      %v2854 = vld [vmem:[%s2838 + $0x58] sm:$0xf]
      %v2855 = vld [vmem:[%s2838 + $0x60] sm:$0xf]
      %v2856 = vld [vmem:[%s2838 + $0x64] sm:$0xf]
      %v2857 = vld [vmem:[%s2838 + $0x6c] sm:$0xf]
      %v2858 = vld [vmem:[%s2838 + $0x70] sm:$0xf]
      %v2859 = vld [vmem:[%s2838 + $0x78] sm:$0xf]
      %v2860 = vld [vmem:[%s2838 + $0x7c] sm:$0xf]
      %v2861 = vld [vmem:[%s2838 + $0x84] sm:$0xf]
      %v2862 = vld [vmem:[%s2838 + $0x88] sm:$0xf]
      %v2863 = vld [vmem:[%s2838 + $0x90] sm:$0xf]
      %v2864 = vld [vmem:[%s2838 + $0x94] sm:$0xf]
      %v2865 = vld [vmem:[%s2838 + $0x9c] sm:$0xf]
      %v2866 = vld [vmem:[%s2838 + $0xa0] sm:$0xf]
      %v2867 = vld [vmem:[%s2838 + $0xa8] sm:$0xf]
      %v2868 = vld [vmem:[%s2838 + $0xac] sm:$0xf]
      %v2869 = vld [vmem:[%s2838 + $0xb4] sm:$0xf]
      %v2870 = vld [vmem:[%s2838 + $0xb8] sm:$0xf]
      %v2903 = vunpack.c.l.b16 %v2839
      %v2904 = vunpack.c.l.b16 %v2840
      %v2905 = vunpack.c.l.b16 %v2841
      %v2906 = vunpack.c.l.b16 %v2842
      %v2907 = vunpack.c.l.b16 %v2843
      %v2908 = vunpack.c.l.b16 %v2844
      %v2909 = vunpack.c.l.b16 %v2845
      %v2910 = vunpack.c.l.b16 %v2846
      %v2911 = vunpack.c.l.b16 %v2847
      %v2912 = vunpack.c.l.b16 %v2848
      %v2913 = vunpack.c.l.b16 %v2849
      %v2914 = vunpack.c.l.b16 %v2850
      %v2915 = vunpack.c.l.b16 %v2851
      %v2916 = vunpack.c.l.b16 %v2852
      %v2917 = vunpack.c.l.b16 %v2853
      %v2918 = vunpack.c.l.b16 %v2854
      %v2919 = vunpack.c.l.b16 %v2855
      %v2920 = vunpack.c.l.b16 %v2856
      %v2921 = vunpack.c.l.b16 %v2857
      %v2922 = vunpack.c.l.b16 %v2858
      %v2923 = vunpack.c.l.b16 %v2859
      %v2924 = vunpack.c.l.b16 %v2860
      %v2925 = vunpack.c.l.b16 %v2861
      %v2926 = vunpack.c.l.b16 %v2862
      %v2927 = vunpack.c.l.b16 %v2863
      %v2928 = vunpack.c.l.b16 %v2864
      %v2929 = vunpack.c.l.b16 %v2865
      %v2930 = vunpack.c.l.b16 %v2866
      %v2931 = vunpack.c.l.b16 %v2867
      %v2932 = vunpack.c.l.b16 %v2868
      %v2933 = vunpack.c.l.b16 %v2869
      %v2934 = vunpack.c.l.b16 %v2870
      %v2935 = vpack.c.b16 %v2904, %v2903
      %v2936 = vpack.c.b16 %v2906, %v2905
      %v2937 = vpack.c.b16 %v2908, %v2907
      %v2938 = vpack.c.b16 %v2910, %v2909
      %v2939 = vpack.c.b16 %v2912, %v2911
      %v2940 = vpack.c.b16 %v2914, %v2913
      %v2941 = vpack.c.b16 %v2916, %v2915
      %v2942 = vpack.c.b16 %v2918, %v2917
      %v2943 = vpack.c.b16 %v2920, %v2919
      %v2944 = vpack.c.b16 %v2922, %v2921
      %v2945 = vpack.c.b16 %v2924, %v2923
      %v2946 = vpack.c.b16 %v2926, %v2925
      %v2947 = vpack.c.b16 %v2928, %v2927
      %v2948 = vpack.c.b16 %v2930, %v2929
      %v2949 = vpack.c.b16 %v2932, %v2931
      %v2950 = vpack.c.b16 %v2934, %v2933
      %v2952 = vsel %vm1160, %v2837, 0
      %v2955 = vsel %vm1160, %v2935, 0
      %v2958 = vsel %vm1160, %v2936, 0
      %v2961 = vsel %vm1160, %v2937, 0
      %v2964 = vsel %vm1160, %v2938, 0
      %v2967 = vsel %vm1160, %v2939, 0
      %v2970 = vsel %vm1160, %v2940, 0
      %v2973 = vsel %vm1160, %v2941, 0
      %v2976 = vsel %vm1160, %v2942, 0
      %v2979 = vsel %vm1160, %v2943, 0
      %v2982 = vsel %vm1160, %v2944, 0
      %v2985 = vsel %vm1160, %v2945, 0
      %v2988 = vsel %vm1160, %v2946, 0
      %v2991 = vsel %vm1160, %v2947, 0
      %v2994 = vsel %vm1160, %v2948, 0
      %v2997 = vsel %vm1160, %v2949, 0
      %v3000 = vsel %vm1160, %v2950, 0
      %3002 = vmatprep.subr.bf16.mxu0 0
      %3003 = vmatpush1.bf16.xpose.msra.mxu0 %v2955
      %3004 = vmatprep.subr.bf16.mxu0 0
      %3005 = vmatpush1.bf16.xpose.msra.mxu0 %v2958
      %3006 = vmatprep.subr.bf16.mxu0 0
      %3007 = vmatpush1.bf16.xpose.msra.mxu0 %v2961
      %3008 = vmatprep.subr.bf16.mxu0 0
      %3009 = vmatpush1.bf16.xpose.msra.mxu0 %v2964
      %3010 = vmatprep.subr.bf16.mxu0 0
      %3011 = vmatpush1.bf16.xpose.msra.mxu0 %v2967
      %3012 = vmatprep.subr.bf16.mxu0 0
      %3013 = vmatpush1.bf16.xpose.msra.mxu0 %v2970
      %3014 = vmatprep.subr.bf16.mxu0 0
      %3015 = vmatpush1.bf16.xpose.msra.mxu0 %v2973
      %3016 = vmatprep.subr.bf16.mxu0 0
      %3017 = vmatpush1.bf16.xpose.msra.mxu0 %v2976
      %3018 = vmatprep.subr.bf16.mxu0 0
      %3019 = vmatpush1.bf16.xpose.msra.mxu0 %v2979
      %3020 = vmatprep.subr.bf16.mxu0 0
      %3021 = vmatpush1.bf16.xpose.msra.mxu0 %v2982
      %3022 = vmatprep.subr.bf16.mxu0 0
      %3023 = vmatpush1.bf16.xpose.msra.mxu0 %v2985
      %3024 = vmatprep.subr.bf16.mxu0 0
      %3025 = vmatpush1.bf16.xpose.msra.mxu0 %v2988
      %3026 = vmatprep.subr.bf16.mxu0 0
      %3027 = vmatpush1.bf16.xpose.msra.mxu0 %v2991
      %3028 = vmatprep.subr.bf16.mxu0 0
      %3029 = vmatpush1.bf16.xpose.msra.mxu0 %v2994
      %3030 = vmatprep.subr.bf16.mxu0 0
      %3031 = vmatpush1.bf16.xpose.msra.mxu0 %v2997
      %3032 = vmatprep.subr.bf16.mxu0 0
      %3033 = vmatpush1.bf16.xpose.msra.mxu0 %v3000
      %3034 = vmatprep.mubr.bf16.mxu0 0
      %3035 = vmatmul.mubr.bf16.gmra.mrb[0].mxu0 %v2952
      %v3036 = vpop.f32.mrb[0].mxu0
      %v3037 = vadd.f32 0.0, %v3036
      %v3038 = vpop.f32.mrb[0].mxu0
      %v3039 = vadd.f32 0.0, %v3038
      %v3040 = vpop.f32.mrb[0].mxu0
      %v3041 = vpop.f32.mrb[0].mxu0
      %3042 = vdwg.mxu0
      %v3043 = vadd.f32 %v2834, %v3037
      %v3044 = vadd.f32 %v2835, %v3039
      %s3045 = scalar_lea.vmem %s1, 28
      %v3046 = vld [vmem:[%s3045] sm:$0xf]
      %v3047 = vld [vmem:[%s2838] sm:$0xf]
      %v3048 = vld [vmem:[%s2838 + $0x4] sm:$0xf]
      %v3049 = vld [vmem:[%s2838 + $0x8] sm:$0x1]
      %v3050 = vld [vmem:[%s2838 + $0xc] sm:$0xf]
      %v3051 = vld [vmem:[%s2838 + $0x10] sm:$0xf]
      %v3052 = vld [vmem:[%s2838 + $0x14] sm:$0x1]
      %v3053 = vld [vmem:[%s2838 + $0x18] sm:$0xf]
      %v3054 = vld [vmem:[%s2838 + $0x1c] sm:$0xf]
      %v3055 = vld [vmem:[%s2838 + $0x20] sm:$0x1]
      %v3056 = vld [vmem:[%s2838 + $0x24] sm:$0xf]
      %v3057 = vld [vmem:[%s2838 + $0x28] sm:$0xf]
      %v3058 = vld [vmem:[%s2838 + $0x2c] sm:$0x1]
      %v3059 = vld [vmem:[%s2838 + $0x30] sm:$0xf]
      %v3060 = vld [vmem:[%s2838 + $0x34] sm:$0xf]
      %v3061 = vld [vmem:[%s2838 + $0x38] sm:$0x1]
      %v3062 = vld [vmem:[%s2838 + $0x3c] sm:$0xf]
      %v3063 = vld [vmem:[%s2838 + $0x40] sm:$0xf]
      %v3064 = vld [vmem:[%s2838 + $0x44] sm:$0x1]
      %v3065 = vld [vmem:[%s2838 + $0x48] sm:$0xf]
      %v3066 = vld [vmem:[%s2838 + $0x4c] sm:$0xf]
      %v3067 = vld [vmem:[%s2838 + $0x50] sm:$0x1]
      %v3068 = vld [vmem:[%s2838 + $0x54] sm:$0xf]
      %v3069 = vld [vmem:[%s2838 + $0x58] sm:$0xf]
      %v3070 = vld [vmem:[%s2838 + $0x5c] sm:$0x1]
      %v3071 = vld [vmem:[%s2838 + $0x60] sm:$0xf]
      %v3072 = vld [vmem:[%s2838 + $0x64] sm:$0xf]
      %v3073 = vld [vmem:[%s2838 + $0x68] sm:$0x1]
      %v3074 = vld [vmem:[%s2838 + $0x6c] sm:$0xf]
      %v3075 = vld [vmem:[%s2838 + $0x70] sm:$0xf]
      %v3076 = vld [vmem:[%s2838 + $0x74] sm:$0x1]
      %v3077 = vld [vmem:[%s2838 + $0x78] sm:$0xf]
      %v3078 = vld [vmem:[%s2838 + $0x7c] sm:$0xf]
      %v3079 = vld [vmem:[%s2838 + $0x80] sm:$0x1]
      %v3080 = vld [vmem:[%s2838 + $0x84] sm:$0xf]
      %v3081 = vld [vmem:[%s2838 + $0x88] sm:$0xf]
      %v3082 = vld [vmem:[%s2838 + $0x8c] sm:$0x1]
      %v3083 = vld [vmem:[%s2838 + $0x90] sm:$0xf]
      %v3084 = vld [vmem:[%s2838 + $0x94] sm:$0xf]
      %v3085 = vld [vmem:[%s2838 + $0x98] sm:$0x1]
      %v3086 = vld [vmem:[%s2838 + $0x9c] sm:$0xf]
      %v3087 = vld [vmem:[%s2838 + $0xa0] sm:$0xf]
      %v3088 = vld [vmem:[%s2838 + $0xa4] sm:$0x1]
      %v3089 = vld [vmem:[%s2838 + $0xa8] sm:$0xf]
      %v3090 = vld [vmem:[%s2838 + $0xac] sm:$0xf]
      %v3091 = vld [vmem:[%s2838 + $0xb0] sm:$0x1]
      %v3092 = vld [vmem:[%s2838 + $0xb4] sm:$0xf]
      %v3093 = vld [vmem:[%s2838 + $0xb8] sm:$0xf]
      %v3094 = vld [vmem:[%s2838 + $0xbc] sm:$0x1]
      %v3096 = vshrl.u32 %v3047, 16
      %v3098 = vrot.slane %v3096, 4
      %v3099 = vshll.u32 %v3047, 16
      %v3101 = vrot.slane %v3099, 5
      %v3102 = vor.u32 %v3098, %v3101
      %v3103 = vrot.slane %v3102, 4
      %v3105 = vshll.u32 %v3048, 16
      %v3107 = vrot.slane %v3105, 5
      %v3108 = vsel %vm727, %v3103, %v3107
      %v3109 = vshrl.u32 %v3048, 16
      %v3111 = vrot.slane %v3109, 4
      %v3112 = vor.u32 %v3111, %v3107
      %v3113 = vrot.slane %v3112, 4
      %v3115 = vshll.u32 %v3049, 16
      %v3117 = vrot.slane %v3115, 5
      %v3118 = vsel %vm727, %v3113, %v3117
      %v3120 = vshrl.u32 %v3050, 16
      %v3122 = vrot.slane %v3120, 4
      %v3123 = vshll.u32 %v3050, 16
      %v3125 = vrot.slane %v3123, 5
      %v3126 = vor.u32 %v3122, %v3125
      %v3127 = vrot.slane %v3126, 4
      %v3129 = vshll.u32 %v3051, 16
      %v3131 = vrot.slane %v3129, 5
      %v3132 = vsel %vm727, %v3127, %v3131
      %v3133 = vshrl.u32 %v3051, 16
      %v3135 = vrot.slane %v3133, 4
      %v3136 = vor.u32 %v3135, %v3131
      %v3137 = vrot.slane %v3136, 4
      %v3139 = vshll.u32 %v3052, 16
      %v3141 = vrot.slane %v3139, 5
      %v3142 = vsel %vm727, %v3137, %v3141
      %v3144 = vshrl.u32 %v3053, 16
      %v3146 = vrot.slane %v3144, 4
      %v3147 = vshll.u32 %v3053, 16
      %v3149 = vrot.slane %v3147, 5
      %v3150 = vor.u32 %v3146, %v3149
      %v3151 = vrot.slane %v3150, 4
      %v3153 = vshll.u32 %v3054, 16
      %v3155 = vrot.slane %v3153, 5
      %v3156 = vsel %vm727, %v3151, %v3155
      %v3157 = vshrl.u32 %v3054, 16
      %v3159 = vrot.slane %v3157, 4
      %v3160 = vor.u32 %v3159, %v3155
      %v3161 = vrot.slane %v3160, 4
      %v3163 = vshll.u32 %v3055, 16
      %v3165 = vrot.slane %v3163, 5
      %v3166 = vsel %vm727, %v3161, %v3165
      %v3168 = vshrl.u32 %v3056, 16
      %v3170 = vrot.slane %v3168, 4
      %v3171 = vshll.u32 %v3056, 16
      %v3173 = vrot.slane %v3171, 5
      %v3174 = vor.u32 %v3170, %v3173
      %v3175 = vrot.slane %v3174, 4
      %v3177 = vshll.u32 %v3057, 16
      %v3179 = vrot.slane %v3177, 5
      %v3180 = vsel %vm727, %v3175, %v3179
      %v3181 = vshrl.u32 %v3057, 16
      %v3183 = vrot.slane %v3181, 4
      %v3184 = vor.u32 %v3183, %v3179
      %v3185 = vrot.slane %v3184, 4
      %v3187 = vshll.u32 %v3058, 16
      %v3189 = vrot.slane %v3187, 5
      %v3190 = vsel %vm727, %v3185, %v3189
      %v3192 = vshrl.u32 %v3059, 16
      %v3194 = vrot.slane %v3192, 4
      %v3195 = vshll.u32 %v3059, 16
      %v3197 = vrot.slane %v3195, 5
      %v3198 = vor.u32 %v3194, %v3197
      %v3199 = vrot.slane %v3198, 4
      %v3201 = vshll.u32 %v3060, 16
      %v3203 = vrot.slane %v3201, 5
      %v3204 = vsel %vm727, %v3199, %v3203
      %v3205 = vshrl.u32 %v3060, 16
      %v3207 = vrot.slane %v3205, 4
      %v3208 = vor.u32 %v3207, %v3203
      %v3209 = vrot.slane %v3208, 4
      %v3211 = vshll.u32 %v3061, 16
      %v3213 = vrot.slane %v3211, 5
      %v3214 = vsel %vm727, %v3209, %v3213
      %v3216 = vshrl.u32 %v3062, 16
      %v3218 = vrot.slane %v3216, 4
      %v3219 = vshll.u32 %v3062, 16
      %v3221 = vrot.slane %v3219, 5
      %v3222 = vor.u32 %v3218, %v3221
      %v3223 = vrot.slane %v3222, 4
      %v3225 = vshll.u32 %v3063, 16
      %v3227 = vrot.slane %v3225, 5
      %v3228 = vsel %vm727, %v3223, %v3227
      %v3229 = vshrl.u32 %v3063, 16
      %v3231 = vrot.slane %v3229, 4
      %v3232 = vor.u32 %v3231, %v3227
      %v3233 = vrot.slane %v3232, 4
      %v3235 = vshll.u32 %v3064, 16
      %v3237 = vrot.slane %v3235, 5
      %v3238 = vsel %vm727, %v3233, %v3237
      %v3240 = vshrl.u32 %v3065, 16
      %v3242 = vrot.slane %v3240, 4
      %v3243 = vshll.u32 %v3065, 16
      %v3245 = vrot.slane %v3243, 5
      %v3246 = vor.u32 %v3242, %v3245
      %v3247 = vrot.slane %v3246, 4
      %v3249 = vshll.u32 %v3066, 16
      %v3251 = vrot.slane %v3249, 5
      %v3252 = vsel %vm727, %v3247, %v3251
      %v3253 = vshrl.u32 %v3066, 16
      %v3255 = vrot.slane %v3253, 4
      %v3256 = vor.u32 %v3255, %v3251
      %v3257 = vrot.slane %v3256, 4
      %v3259 = vshll.u32 %v3067, 16
      %v3261 = vrot.slane %v3259, 5
      %v3262 = vsel %vm727, %v3257, %v3261
      %v3264 = vshrl.u32 %v3068, 16
      %v3266 = vrot.slane %v3264, 4
      %v3267 = vshll.u32 %v3068, 16
      %v3269 = vrot.slane %v3267, 5
      %v3270 = vor.u32 %v3266, %v3269
      %v3271 = vrot.slane %v3270, 4
      %v3273 = vshll.u32 %v3069, 16
      %v3275 = vrot.slane %v3273, 5
      %v3276 = vsel %vm727, %v3271, %v3275
      %v3277 = vshrl.u32 %v3069, 16
      %v3279 = vrot.slane %v3277, 4
      %v3280 = vor.u32 %v3279, %v3275
      %v3281 = vrot.slane %v3280, 4
      %v3283 = vshll.u32 %v3070, 16
      %v3285 = vrot.slane %v3283, 5
      %v3286 = vsel %vm727, %v3281, %v3285
      %v3288 = vshrl.u32 %v3071, 16
      %v3290 = vrot.slane %v3288, 4
      %v3291 = vshll.u32 %v3071, 16
      %v3293 = vrot.slane %v3291, 5
      %v3294 = vor.u32 %v3290, %v3293
      %v3295 = vrot.slane %v3294, 4
      %v3297 = vshll.u32 %v3072, 16
      %v3299 = vrot.slane %v3297, 5
      %v3300 = vsel %vm727, %v3295, %v3299
      %v3301 = vshrl.u32 %v3072, 16
      %v3303 = vrot.slane %v3301, 4
      %v3304 = vor.u32 %v3303, %v3299
      %v3305 = vrot.slane %v3304, 4
      %v3307 = vshll.u32 %v3073, 16
      %v3309 = vrot.slane %v3307, 5
      %v3310 = vsel %vm727, %v3305, %v3309
      %v3312 = vshrl.u32 %v3074, 16
      %v3314 = vrot.slane %v3312, 4
      %v3315 = vshll.u32 %v3074, 16
      %v3317 = vrot.slane %v3315, 5
      %v3318 = vor.u32 %v3314, %v3317
      %v3319 = vrot.slane %v3318, 4
      %v3321 = vshll.u32 %v3075, 16
      %v3323 = vrot.slane %v3321, 5
      %v3324 = vsel %vm727, %v3319, %v3323
      %v3325 = vshrl.u32 %v3075, 16
      %v3327 = vrot.slane %v3325, 4
      %v3328 = vor.u32 %v3327, %v3323
      %v3329 = vrot.slane %v3328, 4
      %v3331 = vshll.u32 %v3076, 16
      %v3333 = vrot.slane %v3331, 5
      %v3334 = vsel %vm727, %v3329, %v3333
      %v3336 = vshrl.u32 %v3077, 16
      %v3338 = vrot.slane %v3336, 4
      %v3339 = vshll.u32 %v3077, 16
      %v3341 = vrot.slane %v3339, 5
      %v3342 = vor.u32 %v3338, %v3341
      %v3343 = vrot.slane %v3342, 4
      %v3345 = vshll.u32 %v3078, 16
      %v3347 = vrot.slane %v3345, 5
      %v3348 = vsel %vm727, %v3343, %v3347
      %v3349 = vshrl.u32 %v3078, 16
      %v3351 = vrot.slane %v3349, 4
      %v3352 = vor.u32 %v3351, %v3347
      %v3353 = vrot.slane %v3352, 4
      %v3355 = vshll.u32 %v3079, 16
      %v3357 = vrot.slane %v3355, 5
      %v3358 = vsel %vm727, %v3353, %v3357
      %v3360 = vshrl.u32 %v3080, 16
      %v3362 = vrot.slane %v3360, 4
      %v3363 = vshll.u32 %v3080, 16
      %v3365 = vrot.slane %v3363, 5
      %v3366 = vor.u32 %v3362, %v3365
      %v3367 = vrot.slane %v3366, 4
      %v3369 = vshll.u32 %v3081, 16
      %v3371 = vrot.slane %v3369, 5
      %v3372 = vsel %vm727, %v3367, %v3371
      %v3373 = vshrl.u32 %v3081, 16
      %v3375 = vrot.slane %v3373, 4
      %v3376 = vor.u32 %v3375, %v3371
      %v3377 = vrot.slane %v3376, 4
      %v3379 = vshll.u32 %v3082, 16
      %v3381 = vrot.slane %v3379, 5
      %v3382 = vsel %vm727, %v3377, %v3381
      %v3384 = vshrl.u32 %v3083, 16
      %v3386 = vrot.slane %v3384, 4
      %v3387 = vshll.u32 %v3083, 16
      %v3389 = vrot.slane %v3387, 5
      %v3390 = vor.u32 %v3386, %v3389
      %v3391 = vrot.slane %v3390, 4
      %v3393 = vshll.u32 %v3084, 16
      %v3395 = vrot.slane %v3393, 5
      %v3396 = vsel %vm727, %v3391, %v3395
      %v3397 = vshrl.u32 %v3084, 16
      %v3399 = vrot.slane %v3397, 4
      %v3400 = vor.u32 %v3399, %v3395
      %v3401 = vrot.slane %v3400, 4
      %v3403 = vshll.u32 %v3085, 16
      %v3405 = vrot.slane %v3403, 5
      %v3406 = vsel %vm727, %v3401, %v3405
      %v3408 = vshrl.u32 %v3086, 16
      %v3410 = vrot.slane %v3408, 4
      %v3411 = vshll.u32 %v3086, 16
      %v3413 = vrot.slane %v3411, 5
      %v3414 = vor.u32 %v3410, %v3413
      %v3415 = vrot.slane %v3414, 4
      %v3417 = vshll.u32 %v3087, 16
      %v3419 = vrot.slane %v3417, 5
      %v3420 = vsel %vm727, %v3415, %v3419
      %v3421 = vshrl.u32 %v3087, 16
      %v3423 = vrot.slane %v3421, 4
      %v3424 = vor.u32 %v3423, %v3419
      %v3425 = vrot.slane %v3424, 4
      %v3427 = vshll.u32 %v3088, 16
      %v3429 = vrot.slane %v3427, 5
      %v3430 = vsel %vm727, %v3425, %v3429
      %v3432 = vshrl.u32 %v3089, 16
      %v3434 = vrot.slane %v3432, 4
      %v3435 = vshll.u32 %v3089, 16
      %v3437 = vrot.slane %v3435, 5
      %v3438 = vor.u32 %v3434, %v3437
      %v3439 = vrot.slane %v3438, 4
      %v3441 = vshll.u32 %v3090, 16
      %v3443 = vrot.slane %v3441, 5
      %v3444 = vsel %vm727, %v3439, %v3443
      %v3445 = vshrl.u32 %v3090, 16
      %v3447 = vrot.slane %v3445, 4
      %v3448 = vor.u32 %v3447, %v3443
      %v3449 = vrot.slane %v3448, 4
      %v3451 = vshll.u32 %v3091, 16
      %v3453 = vrot.slane %v3451, 5
      %v3454 = vsel %vm727, %v3449, %v3453
      %v3456 = vshrl.u32 %v3092, 16
      %v3458 = vrot.slane %v3456, 4
      %v3459 = vshll.u32 %v3092, 16
      %v3461 = vrot.slane %v3459, 5
      %v3462 = vor.u32 %v3458, %v3461
      %v3463 = vrot.slane %v3462, 4
      %v3465 = vshll.u32 %v3093, 16
      %v3467 = vrot.slane %v3465, 5
      %v3468 = vsel %vm727, %v3463, %v3467
      %v3469 = vshrl.u32 %v3093, 16
      %v3471 = vrot.slane %v3469, 4
      %v3472 = vor.u32 %v3471, %v3467
      %v3473 = vrot.slane %v3472, 4
      %v3475 = vshll.u32 %v3094, 16
      %v3477 = vrot.slane %v3475, 5
      %v3478 = vsel %vm727, %v3473, %v3477
      %v3479 = vunpack.c.l.b16 %v3108
      %v3480 = vunpack.c.l.b16 %v3118
      %v3481 = vunpack.c.l.b16 %v3132
      %v3482 = vunpack.c.l.b16 %v3142
      %v3483 = vunpack.c.l.b16 %v3156
      %v3484 = vunpack.c.l.b16 %v3166
      %v3485 = vunpack.c.l.b16 %v3180
      %v3486 = vunpack.c.l.b16 %v3190
      %v3487 = vunpack.c.l.b16 %v3204
      %v3488 = vunpack.c.l.b16 %v3214
      %v3489 = vunpack.c.l.b16 %v3228
      %v3490 = vunpack.c.l.b16 %v3238
      %v3491 = vunpack.c.l.b16 %v3252
      %v3492 = vunpack.c.l.b16 %v3262
      %v3493 = vunpack.c.l.b16 %v3276
      %v3494 = vunpack.c.l.b16 %v3286
      %v3495 = vunpack.c.l.b16 %v3300
      %v3496 = vunpack.c.l.b16 %v3310
      %v3497 = vunpack.c.l.b16 %v3324
      %v3498 = vunpack.c.l.b16 %v3334
      %v3499 = vunpack.c.l.b16 %v3348
      %v3500 = vunpack.c.l.b16 %v3358
      %v3501 = vunpack.c.l.b16 %v3372
      %v3502 = vunpack.c.l.b16 %v3382
      %v3503 = vunpack.c.l.b16 %v3396
      %v3504 = vunpack.c.l.b16 %v3406
      %v3505 = vunpack.c.l.b16 %v3420
      %v3506 = vunpack.c.l.b16 %v3430
      %v3507 = vunpack.c.l.b16 %v3444
      %v3508 = vunpack.c.l.b16 %v3454
      %v3509 = vunpack.c.l.b16 %v3468
      %v3510 = vunpack.c.l.b16 %v3478
      %v3511 = vpack.c.b16 %v3480, %v3479
      %v3512 = vpack.c.b16 %v3482, %v3481
      %v3513 = vpack.c.b16 %v3484, %v3483
      %v3514 = vpack.c.b16 %v3486, %v3485
      %v3515 = vpack.c.b16 %v3488, %v3487
      %v3516 = vpack.c.b16 %v3490, %v3489
      %v3517 = vpack.c.b16 %v3492, %v3491
      %v3518 = vpack.c.b16 %v3494, %v3493
      %v3519 = vpack.c.b16 %v3496, %v3495
      %v3520 = vpack.c.b16 %v3498, %v3497
      %v3521 = vpack.c.b16 %v3500, %v3499
      %v3522 = vpack.c.b16 %v3502, %v3501
      %v3523 = vpack.c.b16 %v3504, %v3503
      %v3524 = vpack.c.b16 %v3506, %v3505
      %v3525 = vpack.c.b16 %v3508, %v3507
      %v3526 = vpack.c.b16 %v3510, %v3509
      %v3528 = vsel %vm1160, %v3046, 0
      %v3531 = vsel %vm1160, %v3511, 0
      %v3534 = vsel %vm1160, %v3512, 0
      %v3537 = vsel %vm1160, %v3513, 0
      %v3540 = vsel %vm1160, %v3514, 0
      %v3543 = vsel %vm1160, %v3515, 0
      %v3546 = vsel %vm1160, %v3516, 0
      %v3549 = vsel %vm1160, %v3517, 0
      %v3552 = vsel %vm1160, %v3518, 0
      %v3555 = vsel %vm1160, %v3519, 0
      %v3558 = vsel %vm1160, %v3520, 0
      %v3561 = vsel %vm1160, %v3521, 0
      %v3564 = vsel %vm1160, %v3522, 0
      %v3567 = vsel %vm1160, %v3523, 0
      %v3570 = vsel %vm1160, %v3524, 0
      %v3573 = vsel %vm1160, %v3525, 0
      %v3576 = vsel %vm1160, %v3526, 0
      %3578 = vmatprep.subr.bf16.mxu0 0
      %3579 = vmatpush1.bf16.xpose.msra.mxu0 %v3531
      %3580 = vmatprep.subr.bf16.mxu0 0
      %3581 = vmatpush1.bf16.xpose.msra.mxu0 %v3534
      %3582 = vmatprep.subr.bf16.mxu0 0
      %3583 = vmatpush1.bf16.xpose.msra.mxu0 %v3537
      %3584 = vmatprep.subr.bf16.mxu0 0
      %3585 = vmatpush1.bf16.xpose.msra.mxu0 %v3540
      %3586 = vmatprep.subr.bf16.mxu0 0
      %3587 = vmatpush1.bf16.xpose.msra.mxu0 %v3543
      %3588 = vmatprep.subr.bf16.mxu0 0
      %3589 = vmatpush1.bf16.xpose.msra.mxu0 %v3546
      %3590 = vmatprep.subr.bf16.mxu0 0
      %3591 = vmatpush1.bf16.xpose.msra.mxu0 %v3549
      %3592 = vmatprep.subr.bf16.mxu0 0
      %3593 = vmatpush1.bf16.xpose.msra.mxu0 %v3552
      %3594 = vmatprep.subr.bf16.mxu0 0
      %3595 = vmatpush1.bf16.xpose.msra.mxu0 %v3555
      %3596 = vmatprep.subr.bf16.mxu0 0
      %3597 = vmatpush1.bf16.xpose.msra.mxu0 %v3558
      %3598 = vmatprep.subr.bf16.mxu0 0
      %3599 = vmatpush1.bf16.xpose.msra.mxu0 %v3561
      %3600 = vmatprep.subr.bf16.mxu0 0
      %3601 = vmatpush1.bf16.xpose.msra.mxu0 %v3564
      %3602 = vmatprep.subr.bf16.mxu0 0
      %3603 = vmatpush1.bf16.xpose.msra.mxu0 %v3567
      %3604 = vmatprep.subr.bf16.mxu0 0
      %3605 = vmatpush1.bf16.xpose.msra.mxu0 %v3570
      %3606 = vmatprep.subr.bf16.mxu0 0
      %3607 = vmatpush1.bf16.xpose.msra.mxu0 %v3573
      %3608 = vmatprep.subr.bf16.mxu0 0
      %3609 = vmatpush1.bf16.xpose.msra.mxu0 %v3576
      %3610 = vmatprep.mubr.bf16.mxu0 0
      %3611 = vmatmul.mubr.bf16.gmra.mrb[0].mxu0 %v3528
      %v3612 = vpop.f32.mrb[0].mxu0
      %v3613 = vadd.f32 0.0, %v3612
      %v3614 = vpop.f32.mrb[0].mxu0
      %v3615 = vadd.f32 0.0, %v3614
      %v3616 = vpop.f32.mrb[0].mxu0
      %v3617 = vpop.f32.mrb[0].mxu0
      %3618 = vdwg.mxu0
      %v3619 = vadd.f32 %v3043, %v3613
      %v3620 = vadd.f32 %v3044, %v3615
      %s3621 = scalar_lea.vmem %s1, 32
      %v3622 = vld [vmem:[%s3621] sm:$0xf]
      %v3623 = vld [vmem:[%s2838] sm:$0xe]
      %v3624 = vld [vmem:[%s2838 + $0xc] sm:$0xe]
      %v3625 = vld [vmem:[%s2838 + $0x18] sm:$0xe]
      %v3626 = vld [vmem:[%s2838 + $0x24] sm:$0xe]
      %v3627 = vld [vmem:[%s2838 + $0x30] sm:$0xe]
      %v3628 = vld [vmem:[%s2838 + $0x3c] sm:$0xe]
      %v3629 = vld [vmem:[%s2838 + $0x48] sm:$0xe]
      %v3630 = vld [vmem:[%s2838 + $0x54] sm:$0xe]
      %v3631 = vld [vmem:[%s2838 + $0x60] sm:$0xe]
      %v3632 = vld [vmem:[%s2838 + $0x6c] sm:$0xe]
      %v3633 = vld [vmem:[%s2838 + $0x78] sm:$0xe]
      %v3634 = vld [vmem:[%s2838 + $0x84] sm:$0xe]
      %v3635 = vld [vmem:[%s2838 + $0x90] sm:$0xe]
      %v3636 = vld [vmem:[%s2838 + $0x9c] sm:$0xe]
      %v3637 = vld [vmem:[%s2838 + $0xa8] sm:$0xe]
      %v3638 = vld [vmem:[%s2838 + $0xb4] sm:$0xe]
      %v3687 = vrot.slane %v3623, 5
      %v3688 = vrot.slane %v3687, 4
      %v3689 = vrot.slane %v3048, 5
      %v3690 = vsel %vm1477, %v3688, %v3689
      %v3691 = vrot.slane %v3689, 4
      %v3692 = vrot.slane %v3049, 5
      %v3693 = vsel %vm1477, %v3691, %v3692
      %v3694 = vrot.slane %v3624, 5
      %v3695 = vrot.slane %v3694, 4
      %v3696 = vrot.slane %v3051, 5
      %v3697 = vsel %vm1477, %v3695, %v3696
      %v3698 = vrot.slane %v3696, 4
      %v3699 = vrot.slane %v3052, 5
      %v3700 = vsel %vm1477, %v3698, %v3699
      %v3701 = vrot.slane %v3625, 5
      %v3702 = vrot.slane %v3701, 4
      %v3703 = vrot.slane %v3054, 5
      %v3704 = vsel %vm1477, %v3702, %v3703
      %v3705 = vrot.slane %v3703, 4
      %v3706 = vrot.slane %v3055, 5
      %v3707 = vsel %vm1477, %v3705, %v3706
      %v3708 = vrot.slane %v3626, 5
      %v3709 = vrot.slane %v3708, 4
      %v3710 = vrot.slane %v3057, 5
      %v3711 = vsel %vm1477, %v3709, %v3710
      %v3712 = vrot.slane %v3710, 4
      %v3713 = vrot.slane %v3058, 5
      %v3714 = vsel %vm1477, %v3712, %v3713
      %v3715 = vrot.slane %v3627, 5
      %v3716 = vrot.slane %v3715, 4
      %v3717 = vrot.slane %v3060, 5
      %v3718 = vsel %vm1477, %v3716, %v3717
      %v3719 = vrot.slane %v3717, 4
      %v3720 = vrot.slane %v3061, 5
      %v3721 = vsel %vm1477, %v3719, %v3720
      %v3722 = vrot.slane %v3628, 5
      %v3723 = vrot.slane %v3722, 4
      %v3724 = vrot.slane %v3063, 5
      %v3725 = vsel %vm1477, %v3723, %v3724
      %v3726 = vrot.slane %v3724, 4
      %v3727 = vrot.slane %v3064, 5
      %v3728 = vsel %vm1477, %v3726, %v3727
      %v3729 = vrot.slane %v3629, 5
      %v3730 = vrot.slane %v3729, 4
      %v3731 = vrot.slane %v3066, 5
      %v3732 = vsel %vm1477, %v3730, %v3731
      %v3733 = vrot.slane %v3731, 4
      %v3734 = vrot.slane %v3067, 5
      %v3735 = vsel %vm1477, %v3733, %v3734
      %v3736 = vrot.slane %v3630, 5
      %v3737 = vrot.slane %v3736, 4
      %v3738 = vrot.slane %v3069, 5
      %v3739 = vsel %vm1477, %v3737, %v3738
      %v3740 = vrot.slane %v3738, 4
      %v3741 = vrot.slane %v3070, 5
      %v3742 = vsel %vm1477, %v3740, %v3741
      %v3743 = vrot.slane %v3631, 5
      %v3744 = vrot.slane %v3743, 4
      %v3745 = vrot.slane %v3072, 5
      %v3746 = vsel %vm1477, %v3744, %v3745
      %v3747 = vrot.slane %v3745, 4
      %v3748 = vrot.slane %v3073, 5
      %v3749 = vsel %vm1477, %v3747, %v3748
      %v3750 = vrot.slane %v3632, 5
      %v3751 = vrot.slane %v3750, 4
      %v3752 = vrot.slane %v3075, 5
      %v3753 = vsel %vm1477, %v3751, %v3752
      %v3754 = vrot.slane %v3752, 4
      %v3755 = vrot.slane %v3076, 5
      %v3756 = vsel %vm1477, %v3754, %v3755
      %v3757 = vrot.slane %v3633, 5
      %v3758 = vrot.slane %v3757, 4
      %v3759 = vrot.slane %v3078, 5
      %v3760 = vsel %vm1477, %v3758, %v3759
      %v3761 = vrot.slane %v3759, 4
      %v3762 = vrot.slane %v3079, 5
      %v3763 = vsel %vm1477, %v3761, %v3762
      %v3764 = vrot.slane %v3634, 5
      %v3765 = vrot.slane %v3764, 4
      %v3766 = vrot.slane %v3081, 5
      %v3767 = vsel %vm1477, %v3765, %v3766
      %v3768 = vrot.slane %v3766, 4
      %v3769 = vrot.slane %v3082, 5
      %v3770 = vsel %vm1477, %v3768, %v3769
      %v3771 = vrot.slane %v3635, 5
      %v3772 = vrot.slane %v3771, 4
      %v3773 = vrot.slane %v3084, 5
      %v3774 = vsel %vm1477, %v3772, %v3773
      %v3775 = vrot.slane %v3773, 4
      %v3776 = vrot.slane %v3085, 5
      %v3777 = vsel %vm1477, %v3775, %v3776
      %v3778 = vrot.slane %v3636, 5
      %v3779 = vrot.slane %v3778, 4
      %v3780 = vrot.slane %v3087, 5
      %v3781 = vsel %vm1477, %v3779, %v3780
      %v3782 = vrot.slane %v3780, 4
      %v3783 = vrot.slane %v3088, 5
      %v3784 = vsel %vm1477, %v3782, %v3783
      %v3785 = vrot.slane %v3637, 5
      %v3786 = vrot.slane %v3785, 4
      %v3787 = vrot.slane %v3090, 5
      %v3788 = vsel %vm1477, %v3786, %v3787
      %v3789 = vrot.slane %v3787, 4
      %v3790 = vrot.slane %v3091, 5
      %v3791 = vsel %vm1477, %v3789, %v3790
      %v3792 = vrot.slane %v3638, 5
      %v3793 = vrot.slane %v3792, 4
      %v3794 = vrot.slane %v3093, 5
      %v3795 = vsel %vm1477, %v3793, %v3794
      %v3796 = vrot.slane %v3794, 4
      %v3797 = vrot.slane %v3094, 5
      %v3798 = vsel %vm1477, %v3796, %v3797
      %v3799 = vunpack.c.l.b16 %v3690
      %v3800 = vunpack.c.l.b16 %v3693
      %v3801 = vunpack.c.l.b16 %v3697
      %v3802 = vunpack.c.l.b16 %v3700
      %v3803 = vunpack.c.l.b16 %v3704
      %v3804 = vunpack.c.l.b16 %v3707
      %v3805 = vunpack.c.l.b16 %v3711
      %v3806 = vunpack.c.l.b16 %v3714
      %v3807 = vunpack.c.l.b16 %v3718
      %v3808 = vunpack.c.l.b16 %v3721
      %v3809 = vunpack.c.l.b16 %v3725
      %v3810 = vunpack.c.l.b16 %v3728
      %v3811 = vunpack.c.l.b16 %v3732
      %v3812 = vunpack.c.l.b16 %v3735
      %v3813 = vunpack.c.l.b16 %v3739
      %v3814 = vunpack.c.l.b16 %v3742
      %v3815 = vunpack.c.l.b16 %v3746
      %v3816 = vunpack.c.l.b16 %v3749
      %v3817 = vunpack.c.l.b16 %v3753
      %v3818 = vunpack.c.l.b16 %v3756
      %v3819 = vunpack.c.l.b16 %v3760
      %v3820 = vunpack.c.l.b16 %v3763
      %v3821 = vunpack.c.l.b16 %v3767
      %v3822 = vunpack.c.l.b16 %v3770
      %v3823 = vunpack.c.l.b16 %v3774
      %v3824 = vunpack.c.l.b16 %v3777
      %v3825 = vunpack.c.l.b16 %v3781
      %v3826 = vunpack.c.l.b16 %v3784
      %v3827 = vunpack.c.l.b16 %v3788
      %v3828 = vunpack.c.l.b16 %v3791
      %v3829 = vunpack.c.l.b16 %v3795
      %v3830 = vunpack.c.l.b16 %v3798
      %v3831 = vpack.c.b16 %v3800, %v3799
      %v3832 = vpack.c.b16 %v3802, %v3801
      %v3833 = vpack.c.b16 %v3804, %v3803
      %v3834 = vpack.c.b16 %v3806, %v3805
      %v3835 = vpack.c.b16 %v3808, %v3807
      %v3836 = vpack.c.b16 %v3810, %v3809
      %v3837 = vpack.c.b16 %v3812, %v3811
      %v3838 = vpack.c.b16 %v3814, %v3813
      %v3839 = vpack.c.b16 %v3816, %v3815
      %v3840 = vpack.c.b16 %v3818, %v3817
      %v3841 = vpack.c.b16 %v3820, %v3819
      %v3842 = vpack.c.b16 %v3822, %v3821
      %v3843 = vpack.c.b16 %v3824, %v3823
      %v3844 = vpack.c.b16 %v3826, %v3825
      %v3845 = vpack.c.b16 %v3828, %v3827
      %v3846 = vpack.c.b16 %v3830, %v3829
      %v3848 = vsel %vm1160, %v3622, 0
      %v3851 = vsel %vm1160, %v3831, 0
      %v3854 = vsel %vm1160, %v3832, 0
      %v3857 = vsel %vm1160, %v3833, 0
      %v3860 = vsel %vm1160, %v3834, 0
      %v3863 = vsel %vm1160, %v3835, 0
      %v3866 = vsel %vm1160, %v3836, 0
      %v3869 = vsel %vm1160, %v3837, 0
      %v3872 = vsel %vm1160, %v3838, 0
      %v3875 = vsel %vm1160, %v3839, 0
      %v3878 = vsel %vm1160, %v3840, 0
      %v3881 = vsel %vm1160, %v3841, 0
      %v3884 = vsel %vm1160, %v3842, 0
      %v3887 = vsel %vm1160, %v3843, 0
      %v3890 = vsel %vm1160, %v3844, 0
      %v3893 = vsel %vm1160, %v3845, 0
      %v3896 = vsel %vm1160, %v3846, 0
      %3898 = vmatprep.subr.bf16.mxu0 0
      %3899 = vmatpush1.bf16.xpose.msra.mxu0 %v3851
      %3900 = vmatprep.subr.bf16.mxu0 0
      %3901 = vmatpush1.bf16.xpose.msra.mxu0 %v3854
      %3902 = vmatprep.subr.bf16.mxu0 0
      %3903 = vmatpush1.bf16.xpose.msra.mxu0 %v3857
      %3904 = vmatprep.subr.bf16.mxu0 0
      %3905 = vmatpush1.bf16.xpose.msra.mxu0 %v3860
      %3906 = vmatprep.subr.bf16.mxu0 0
      %3907 = vmatpush1.bf16.xpose.msra.mxu0 %v3863
      %3908 = vmatprep.subr.bf16.mxu0 0
      %3909 = vmatpush1.bf16.xpose.msra.mxu0 %v3866
      %3910 = vmatprep.subr.bf16.mxu0 0
      %3911 = vmatpush1.bf16.xpose.msra.mxu0 %v3869
      %3912 = vmatprep.subr.bf16.mxu0 0
      %3913 = vmatpush1.bf16.xpose.msra.mxu0 %v3872
      %3914 = vmatprep.subr.bf16.mxu0 0
      %3915 = vmatpush1.bf16.xpose.msra.mxu0 %v3875
      %3916 = vmatprep.subr.bf16.mxu0 0
      %3917 = vmatpush1.bf16.xpose.msra.mxu0 %v3878
      %3918 = vmatprep.subr.bf16.mxu0 0
      %3919 = vmatpush1.bf16.xpose.msra.mxu0 %v3881
      %3920 = vmatprep.subr.bf16.mxu0 0
      %3921 = vmatpush1.bf16.xpose.msra.mxu0 %v3884
      %3922 = vmatprep.subr.bf16.mxu0 0
      %3923 = vmatpush1.bf16.xpose.msra.mxu0 %v3887
      %3924 = vmatprep.subr.bf16.mxu0 0
      %3925 = vmatpush1.bf16.xpose.msra.mxu0 %v3890
      %3926 = vmatprep.subr.bf16.mxu0 0
      %3927 = vmatpush1.bf16.xpose.msra.mxu0 %v3893
      %3928 = vmatprep.subr.bf16.mxu0 0
      %3929 = vmatpush1.bf16.xpose.msra.mxu0 %v3896
      %3930 = vmatprep.mubr.bf16.mxu0 0
      %3931 = vmatmul.mubr.bf16.gmra.mrb[0].mxu0 %v3848
      %v3932 = vpop.f32.mrb[0].mxu0
      %v3933 = vadd.f32 0.0, %v3932
      %v3934 = vpop.f32.mrb[0].mxu0
      %v3935 = vadd.f32 0.0, %v3934
      %v3936 = vpop.f32.mrb[0].mxu0
      %v3937 = vpop.f32.mrb[0].mxu0
      %3938 = vdwg.mxu0
      %v3939 = vadd.f32 %v3619, %v3933
      %v3940 = vadd.f32 %v3620, %v3935
      %3941 = vst [vmem:[%s143] sm:$0xff] %v3939
      %3942 = vst [vmem:[%s143 + $0x8] sm:$0xff] %v3940
      %p3943 = scmp.lt.s32.totalorder %s13, 1
      %s3944 = scalar_select %p3943, %s13, 1
      %s3945 = smul.addr %s3944, 2
      %s3946 = smul.addr %s3945, 8
      %s3947 = scalar_lea.vmem %s2, %s3946
      // Predicated region
      $region29: #{_lambda_.3} parent=27 // pred_check
        %p3948 = pneg %p78
      $region30: #{_lambda_.3} parent=27 // pred_check_branch
        %3950 = sbr.rel (%p3948) target = $region32
      $region31: #{_lambda_.3} parent=27 // pred_region
        _
      $region32: #{_lambda_.3} parent=27 // pred_fallthru
        _
    $region28: #{_lambda_.3} parent=5 // pred_fallthru
      _
    %p3951 = scmp.le.s32.totalorder 2, %s8
    // Predicated region
    $region33: #{_lambda_.3} parent=5 // pred_check
      %p3952 = pneg %p3951
    $region34: #{_lambda_.3} parent=5 // pred_check_branch
      %3954 = sbr.rel (%p3952) target = $region36
    $region35: #{_lambda_.3} parent=5 // pred_region
      %s3955 = ssub.s32 %s8, 2
      // Predicated region
      $region37: #{_lambda_.3} parent=35 // pred_check
        %p3956 = pneg %p84
      $region38: #{_lambda_.3} parent=35 // pred_check_branch
        %3958 = sbr.rel (%p3956) target = $region40
      $region39: #{_lambda_.3} parent=35 // pred_region
        %p3959 = scmp.lt.s32.totalorder %s14, 1
        %s3960 = scalar_select %p3959, %s14, 1
        %s3961 = smul.addr %s3960, 2
        %s3962 = smul.addr %s3961, 8
        %s3963 = scalar_lea.vmem %s2, %s3962
      $region40: #{_lambda_.3} parent=35 // pred_fallthru
        _
    $region36: #{_lambda_.3} parent=5 // pred_fallthru
      _
  $region6: #{_lambda_.3} parent=0 // loop_footer
    %s12 = sadd.s32 1, %s8
  $region7: #{_lambda_.3} parent=0 // loop_footer_branch
    %7 = sbr.rel target = $region3
  $region8: #{_lambda_.3} parent=0 // loop_exit
    _

</llo_original>
